<compile_context>
chip_gen: v5e
topology: v5e:2x2
jax: 0.10.0
libtpu: 0.0.40
codegen_flags: <defaults>
</compile_context>

<pallas_src>
import functools

import jax
import jax.numpy as jnp
from jax import lax
from jax.experimental import pallas as pl
from jax.experimental.pallas import tpu as pltpu

LN_EPS = 1e-5      # layer_norm_eps of the module
RMS_EPS = 1e-5     # subln RMSNorm eps
LAMBDA_INIT = 0.8


def _softmax_rows(s):
    """Row softmax in f32; normalization via EUP approximate reciprocal."""
    m = jnp.max(s, axis=-1, keepdims=True)
    e = jnp.exp(s - m)
    return e * pl.reciprocal(jnp.sum(e, axis=-1, keepdims=True), approx=True)


def _encoder_layer_kernel(
    # inputs (refs)
    lam_ref,                                      # SMEM (1, 1) f32: lambda_full
    xq_ref,                                       # (1, TQ, D) f32: query / residual rows
    xkv_ref,                                      # (1, S, D)  bf16: full sequence for K/V
    wq_t_ref, wk_t_ref, wv_t_ref, wo_t_ref,       # (D, D) cdt (wq pre-scaled, wo subg-folded)
    w1_t_ref, b1_ref,                             # (D, DFF) cdt, (1, DFF) f32
    w2_t_ref, b2_ref,                             # (DFF, D) cdt, (1, D) f32
    g1_ref, beta1_ref, g2_ref, beta2_ref,         # (1, D) f32 LayerNorm params
    # output
    out_ref,                                      # (1, TQ, D) f32
    # scratch: k_sc (S,D) cdt, v_sc (S,D) cdt, [o_sc (TQ,D) cdt if use_concat_wo]
    *scratch,
    num_heads, head_dim, use_concat_wo):
    f32 = jnp.float32
    cdt = wq_t_ref.dtype                          # bf16 compute dtype for MXU operands
    k_sc, v_sc = scratch[0], scratch[1]
    o_sc = scratch[2] if use_concat_wo else None

    # ---- K / V projection: ONCE per batch element (query-tile index == 0).  The bf16
    # scratch persists across the sequential ("arbitrary") query-tile grid axis. --------
    @pl.when(pl.program_id(1) == 0)
    def _():
        xkv = xkv_ref[0]                          # (S, D) bf16
        k_sc[...] = jnp.dot(xkv, wk_t_ref[...], preferred_element_type=f32).astype(cdt)
        v_sc[...] = jnp.dot(xkv, wv_t_ref[...], preferred_element_type=f32).astype(cdt)

    xq = xq_ref[0]                                # (TQ, D) f32 (residual kept in f32)
    q = jnp.dot(xq.astype(cdt), wq_t_ref[...], preferred_element_type=f32).astype(cdt)
    k = k_sc[...]                                 # (S, D) bf16
    v = v_sc[...]                                 # (S, D) bf16

    lam = lam_ref[0, 0]                           # scalar f32 (precomputed on host)
    dn_qk = (((1,), (1,)), ((), ()))              # contract head_dim axis

    attn = None
    for h in range(num_heads):                    # static unroll (small H)
        c0 = 2 * h * head_dim
        q1 = q[:, c0:c0 + head_dim]
        q2 = q[:, c0 + head_dim:c0 + 2 * head_dim]
        k1 = k[:, c0:c0 + head_dim]
        k2 = k[:, c0 + head_dim:c0 + 2 * head_dim]
        vh = v[:, c0:c0 + 2 * head_dim]           # (S, 2*hd)

        # scores (1/sqrt(hd) already folded into Wq on the host)
        s1 = lax.dot_general(q1, k1, dn_qk, preferred_element_type=f32)   # (TQ, S)
        s2 = lax.dot_general(q2, k2, dn_qk, preferred_element_type=f32)

        # fused differential softmax: subtract in f32, cast once, single P·V matmul
        a = (_softmax_rows(s1) - lam * _softmax_rows(s2)).astype(cdt)     # (TQ, S) bf16
        o = jnp.dot(a, vh, preferred_element_type=f32)                    # (TQ, 2*hd) f32

        # per-head RMSNorm over 2*hd (f32 stats); subg*(1-lambda_init) folded into Wo
        o = o * lax.rsqrt(jnp.mean(o * o, axis=-1, keepdims=True) + RMS_EPS)

        if use_concat_wo:
            # lane-aligned write into the (TQ, D) scratch; one big Wo matmul afterwards
            o_sc[:, c0:c0 + 2 * head_dim] = o.astype(cdt)
        else:
            # per-head accumulation of the output projection (no lane-axis relayout)
            part = jnp.dot(o.astype(cdt), wo_t_ref[c0:c0 + 2 * head_dim, :],
                           preferred_element_type=f32)                    # (TQ, D)
            attn = part if attn is None else attn + part

    if use_concat_wo:
        attn = jnp.dot(o_sc[...], wo_t_ref[...], preferred_element_type=f32)  # (TQ, D)

    # ---- residual + LayerNorm1 (post-norm scheme) ------------------------------------
    h1 = xq + attn
    mu = jnp.mean(h1, axis=-1, keepdims=True)
    var = jnp.mean((h1 - mu) * (h1 - mu), axis=-1, keepdims=True)
    h1 = (h1 - mu) * lax.rsqrt(var + LN_EPS) * g1_ref[...] + beta1_ref[...]

    # ---- feed-forward: linear2(relu(linear1(h1))) ------------------------------------
    ff = jnp.dot(h1.astype(cdt), w1_t_ref[...], preferred_element_type=f32) + b1_ref[...]
    ff = jnp.maximum(ff, 0.0)                     # relu activation
    ff = jnp.dot(ff.astype(cdt), w2_t_ref[...], preferred_element_type=f32) + b2_ref[...]

    # ---- residual + LayerNorm2 --------------------------------------------------------
    h2 = h1 + ff
    mu2 = jnp.mean(h2, axis=-1, keepdims=True)
    var2 = jnp.mean((h2 - mu2) * (h2 - mu2), axis=-1, keepdims=True)
    h2 = (h2 - mu2) * lax.rsqrt(var2 + LN_EPS) * g2_ref[...] + beta2_ref[...]

    out_ref[0] = h2.astype(out_ref.dtype)


def prepare_params(p, *, num_heads, compute_dtype=jnp.bfloat16):
    """One-time host-side weight prep: transpose, cast, fold scales, compute lambda.

    Call once and cache the result; per-call wrapper does no weight math.
    """
    f32 = jnp.float32
    cdt = compute_dtype
    D = p["wq"].shape[0]
    head_dim = D // num_heads // 2
    scale = head_dim ** -0.5

    # fold subg * (1 - lambda_init) into the rows (input features) of Wo^T
    subg_full = jnp.tile(p["subg"].astype(f32), num_heads)                 # (D,)
    wo_t = (p["wo"].astype(f32).T * (subg_full * (1.0 - LAMBDA_INIT))[:, None])

    lam_full = (jnp.exp(jnp.sum(p["lq1"] * p["lk1"]))
                - jnp.exp(jnp.sum(p["lq2"] * p["lk2"])) + LAMBDA_INIT)

    return {
        "wq_t": (p["wq"].astype(f32) * scale).T.astype(cdt),   # 1/sqrt(hd) folded in
        "wk_t": p["wk"].T.astype(cdt),
        "wv_t": p["wv"].T.astype(cdt),
        "wo_t": wo_t.astype(cdt),
        "w1_t": p["w1"].T.astype(cdt),
        "b1": p["b1"].reshape(1, -1).astype(f32),
        "w2_t": p["w2"].T.astype(cdt),
        "b2": p["b2"].reshape(1, -1).astype(f32),
        "g1": p["g1"].reshape(1, -1).astype(f32),
        "beta1": p["beta1"].reshape(1, -1).astype(f32),
        "g2": p["g2"].reshape(1, -1).astype(f32),
        "beta2": p["beta2"].reshape(1, -1).astype(f32),
        "lam": jnp.reshape(lam_full, (1, 1)).astype(f32),
        "num_heads": num_heads,
        "head_dim": head_dim,
        "compute_dtype": cdt,
    }


def _pick_tq(S, block_q):
    """Largest divisor of S that is <= block_q and a multiple of 8 (else full S)."""
    if block_q is None or S <= block_q:
        return S
    for cand in range(block_q, 7, -1):
        if S % cand == 0 and cand % 8 == 0:
            return cand
    return S


def _make_call(B, S, D, DFF, tq, nq, cdt, num_heads, head_dim,
               use_concat_wo, single_buffer_const, const_shapes, vmem_limit):
    def const_spec(shape):
        n = len(shape)
        idx = lambda b, qi, _n=n: (0,) * _n
        if single_buffer_const:
            # constant-index blocks are DMA'd once; the second buffer is pure VMEM waste
            return pl.BlockSpec(shape, idx, pipeline_mode=pl.Buffered(1))
        return pl.BlockSpec(shape, idx)

    if single_buffer_const:
        xkv_spec = pl.BlockSpec((1, S, D), lambda b, qi: (b, 0, 0),
                                pipeline_mode=pl.Buffered(1))
    else:
        xkv_spec = pl.BlockSpec((1, S, D), lambda b, qi: (b, 0, 0))

    in_specs = [
        pl.BlockSpec(memory_space=pltpu.MemorySpace.SMEM),        # lambda_full scalar
        pl.BlockSpec((1, tq, D), lambda b, qi: (b, qi, 0)),       # query / residual tile
        xkv_spec,                                                 # bf16 sequence for K/V
    ] + [const_spec(s) for s in const_shapes]

    out_specs = pl.BlockSpec((1, tq, D), lambda b, qi: (b, qi, 0))

    scratch_shapes = [pltpu.VMEM((S, D), cdt),                    # K (per-batch, persistent)
                      pltpu.VMEM((S, D), cdt)]                    # V
    if use_concat_wo:
        scratch_shapes.append(pltpu.VMEM((tq, D), cdt))           # concatenated heads

    kernel = functools.partial(_encoder_layer_kernel,
                               num_heads=num_heads, head_dim=head_dim,
                               use_concat_wo=use_concat_wo)

    return pl.pallas_call(
        kernel,
        out_shape=jax.ShapeDtypeStruct((B, S, D), jnp.float32),
        grid_spec=pltpu.PrefetchScalarGridSpec(
            num_scalar_prefetch=0,
            grid=(B, nq),
            in_specs=in_specs,
            out_specs=out_specs,
            scratch_shapes=scratch_shapes,
        ),
        compiler_params=pltpu.CompilerParams(
            # query-tile axis must be sequential so the per-batch K/V scratch is valid
            dimension_semantics=("parallel", "arbitrary"),
            vmem_limit_bytes=vmem_limit),
    )


def diff_transformer_encoder_layer(x, prep, *, block_q=256):
    B, S, D = x.shape
    num_heads = prep["num_heads"]
    head_dim = prep["head_dim"]
    cdt = prep["compute_dtype"]
    DFF = prep["w1_t"].shape[1]

    tq = _pick_tq(S, block_q)
    nq = S // tq
    # concatenated single-matmul Wo projection only when the per-head width is lane-aligned
    use_concat_wo = (2 * head_dim) % 128 == 0

    x_kv = x.astype(cdt)                          # K/V copy shipped as bf16 (half HBM traffic)
    inputs = (
        prep["lam"], x, x_kv,
        prep["wq_t"], prep["wk_t"], prep["wv_t"], prep["wo_t"],
        prep["w1_t"], prep["b1"], prep["w2_t"], prep["b2"],
        prep["g1"], prep["beta1"], prep["g2"], prep["beta2"],
    )
    const_shapes = [a.shape for a in inputs[3:]]

    itemsize_c = jnp.dtype(cdt).itemsize
    weight_bytes = (4 * D * D + 2 * D * DFF) * itemsize_c

    def vmem_estimate(single_buffer):
        wb = weight_bytes * (1 if single_buffer else 2)
        kvb = 2 * S * D * itemsize_c                              # persistent K/V scratch
        xkvb = (1 if single_buffer else 2) * S * D * itemsize_c   # bf16 xkv block
        iob = 2 * 2 * tq * D * 4                                  # xq + out, double-buffered f32
        liveb = 4 * (3 * tq * S + tq * DFF + 6 * tq * D)          # scores / probs / FFN / misc
        ob = tq * D * itemsize_c if use_concat_wo else 0
        return wb + kvb + xkvb + iob + liveb + ob

    def run(single_buffer):
        est = vmem_estimate(single_buffer)
        # floor for small shapes, cap below v7x's 64 MiB to leave compiler headroom
        vmem_limit = int(min(max(int(1.4 * est), 32 << 20), 56 << 20))
        call = _make_call(B, S, D, DFF, tq, nq, cdt, num_heads, head_dim,
                          use_concat_wo, single_buffer, const_shapes, vmem_limit)
        return call(*inputs)

    try:
        return run(True)
    except Exception:
        # fallback if pipeline_mode=pl.Buffered(1) is unsupported by this JAX build;
        # identical kernel, default double-buffering.
        return run(False)


# ---------------- pure-JAX reference (for correctness check) -----------------------
def ref_forward(x, p, *, num_heads):
    B, S, D = x.shape
    hd = D // num_heads // 2
    q = x @ p["wq"].T
    k = x @ p["wk"].T
    v = x @ p["wv"].T
    q = q.reshape(B, S, num_heads, 2, hd)
    k = k.reshape(B, S, num_heads, 2, hd)
    v = v.reshape(B, S, num_heads, 2 * hd)
    lam = (jnp.exp(jnp.sum(p["lq1"] * p["lk1"]))
           - jnp.exp(jnp.sum(p["lq2"] * p["lk2"])) + LAMBDA_INIT)
    scale = hd ** -0.5
    s1 = jnp.einsum("bshd,bthd->bhst", q[..., 0, :], k[..., 0, :]) * scale
    s2 = jnp.einsum("bshd,bthd->bhst", q[..., 1, :], k[..., 1, :]) * scale
    a1 = jax.nn.softmax(s1, -1)
    a2 = jax.nn.softmax(s2, -1)
    o = (jnp.einsum("bhst,bthd->bshd", a1, v)
         - lam * jnp.einsum("bhst,bthd->bshd", a2, v))       # (B,S,H,2hd)
    o = o * lax.rsqrt(jnp.mean(o * o, -1, keepdims=True) + RMS_EPS) * p["subg"]
    o = o * (1.0 - LAMBDA_INIT)
    attn = o.reshape(B, S, D) @ p["wo"].T

    def ln(z, g, b):
        mu = jnp.mean(z, -1, keepdims=True)
        var = jnp.mean((z - mu) ** 2, -1, keepdims=True)
        return (z - mu) * lax.rsqrt(var + LN_EPS) * g + b

    h1 = ln(x + attn, p["g1"], p["beta1"])
    ff = jnp.maximum(h1 @ p["w1"].T + p["b1"], 0.0) @ p["w2"].T + p["b2"]
    return ln(h1 + ff, p["g2"], p["beta2"])


if __name__ == "__main__":
    def make_params(key, D, NHEAD, DFF):
        HD = D // NHEAD // 2
        ks = jax.random.split(key, 12)

        def w(k, shape, s=0.05):
            return jax.random.normal(k, shape, jnp.float32) * s

        return {
            "wq": w(ks[0], (D, D)), "wk": w(ks[1], (D, D)),
            "wv": w(ks[2], (D, D)), "wo": w(ks[3], (D, D)),
            "lq1": w(ks[4], (HD,), 0.1), "lk1": w(ks[5], (HD,), 0.1),
            "lq2": w(ks[6], (HD,), 0.1), "lk2": w(ks[7], (HD,), 0.1),
            "subg": jnp.ones((2 * HD,), jnp.float32),
            "w1": w(ks[8], (DFF, D)), "b1": w(ks[9], (DFF,), 0.02),
            "w2": w(ks[10], (D, DFF)), "b2": w(ks[11], (D,), 0.02),
            "g1": jnp.ones((D,), jnp.float32), "beta1": jnp.zeros((D,), jnp.float32),
            "g2": jnp.ones((D,), jnp.float32), "beta2": jnp.zeros((D,), jnp.float32),
        }

    root = jax.random.PRNGKey(0)
    k_p1, k_p2, k_x1, k_x2 = jax.random.split(root, 4)

    # --- test 1: tiny shapes (single query tile; per-head Wo accumulation path) -------
    B, S, D, NHEAD, DFF = 2, 8, 64, 4, 128
    params = make_params(k_p1, D, NHEAD, DFF)
    x = jax.random.normal(k_x1, (B, S, D), jnp.float32)

    prep = prepare_params(params, num_heads=NHEAD)     # host-side weight prep, done once
    out = diff_transformer_encoder_layer(x, prep)
    jax.block_until_ready(out)

    ref = ref_forward(x, params, num_heads=NHEAD)
    assert out.shape == (B, S, D)
    # bf16 matmul operands with f32 accumulation -> relaxed tolerance vs f32 reference
    err = float(jnp.max(jnp.abs(out - ref)))
    assert err < 3e-2, err

    # --- test 2: moderate shapes (multiple query tiles -> per-batch K/V scratch reuse;
    #     lane-aligned concatenated Wo projection path) ---------------------------------
    B2, S2, D2, NHEAD2, DFF2 = 2, 256, 256, 2, 512     # head_dim=64 -> 2*hd=128 (aligned)
    params2 = make_params(k_p2, D2, NHEAD2, DFF2)
    x2 = jax.random.normal(k_x2, (B2, S2, D2), jnp.float32)

    prep2 = prepare_params(params2, num_heads=NHEAD2)
    out2 = diff_transformer_encoder_layer(x2, prep2, block_q=128)
    jax.block_until_ready(out2)

    ref2 = ref_forward(x2, params2, num_heads=NHEAD2)
    assert out2.shape == (B2, S2, D2)
    err2 = float(jnp.max(jnp.abs(out2 - ref2)))
    assert err2 < 5e-2, err2

    print("KERNEL_OK")
</pallas_src>

<mosaic_0001>
module attributes {stable_mosaic.version = 11 : i64} {
  func.func @_encoder_layer_kernel(%arg0: i32, %arg1: i32, %arg2: memref<1x1xf32, #tpu.memory_space<smem>>, %arg3: memref<1x8x64xf32, #tpu.memory_space<vmem>>, %arg4: memref<1x8x64xbf16, #tpu.memory_space<vmem>>, %arg5: memref<64x64xbf16, #tpu.memory_space<vmem>>, %arg6: memref<64x64xbf16, #tpu.memory_space<vmem>>, %arg7: memref<64x64xbf16, #tpu.memory_space<vmem>>, %arg8: memref<64x64xbf16, #tpu.memory_space<vmem>>, %arg9: memref<64x128xbf16, #tpu.memory_space<vmem>>, %arg10: memref<1x128xf32, #tpu.memory_space<vmem>>, %arg11: memref<128x64xbf16, #tpu.memory_space<vmem>>, %arg12: memref<1x64xf32, #tpu.memory_space<vmem>>, %arg13: memref<1x64xf32, #tpu.memory_space<vmem>>, %arg14: memref<1x64xf32, #tpu.memory_space<vmem>>, %arg15: memref<1x64xf32, #tpu.memory_space<vmem>>, %arg16: memref<1x64xf32, #tpu.memory_space<vmem>>, %arg17: memref<1x8x64xf32, #tpu.memory_space<vmem>>, %arg18: memref<8x64xbf16, #tpu.memory_space<vmem>>, %arg19: memref<8x64xbf16, #tpu.memory_space<vmem>>) attributes {dimension_semantics = [#tpu.dimension_semantics<parallel>, #tpu.dimension_semantics<arbitrary>], iteration_bounds = array<i64: 2, 1>, scalar_prefetch = 0 : i64, scratch_operands = 2 : i64, tpu.core_type = #tpu.core_type<tc>, window_params = [{transform_indices = @transform_0, window_bounds = array<i64: 1, 1>}, {transform_indices = @transform_1, window_bounds = array<i64: 1, 8, 64>}, {pipeline_mode = #tpu.pipeline_mode<synchronous>, transform_indices = @transform_2, window_bounds = array<i64: 1, 8, 64>}, {pipeline_mode = #tpu.pipeline_mode<synchronous>, transform_indices = @transform_3, window_bounds = array<i64: 64, 64>}, {pipeline_mode = #tpu.pipeline_mode<synchronous>, transform_indices = @transform_4, window_bounds = array<i64: 64, 64>}, {pipeline_mode = #tpu.pipeline_mode<synchronous>, transform_indices = @transform_5, window_bounds = array<i64: 64, 64>}, {pipeline_mode = #tpu.pipeline_mode<synchronous>, transform_indices = @transform_6, window_bounds = array<i64: 64, 64>}, {pipeline_mode = #tpu.pipeline_mode<synchronous>, transform_indices = @transform_7, window_bounds = array<i64: 64, 128>}, {pipeline_mode = #tpu.pipeline_mode<synchronous>, transform_indices = @transform_8, window_bounds = array<i64: 1, 128>}, {pipeline_mode = #tpu.pipeline_mode<synchronous>, transform_indices = @transform_9, window_bounds = array<i64: 128, 64>}, {pipeline_mode = #tpu.pipeline_mode<synchronous>, transform_indices = @transform_10, window_bounds = array<i64: 1, 64>}, {pipeline_mode = #tpu.pipeline_mode<synchronous>, transform_indices = @transform_11, window_bounds = array<i64: 1, 64>}, {pipeline_mode = #tpu.pipeline_mode<synchronous>, transform_indices = @transform_12, window_bounds = array<i64: 1, 64>}, {pipeline_mode = #tpu.pipeline_mode<synchronous>, transform_indices = @transform_13, window_bounds = array<i64: 1, 64>}, {pipeline_mode = #tpu.pipeline_mode<synchronous>, transform_indices = @transform_14, window_bounds = array<i64: 1, 64>}, {transform_indices = @transform_15, window_bounds = array<i64: 1, 8, 64>}]} {
    %c0_i32 = arith.constant 0 : i32
    %0 = arith.cmpi eq, %arg1, %c0_i32 : i32
    %1 = arith.extui %0 : i1 to i32
    %c0_i32_0 = arith.constant 0 : i32
    %2 = arith.cmpi ne, %1, %c0_i32_0 : i32
    scf.if %2 {
      %c0_92 = arith.constant 0 : index
      %c0_93 = arith.constant 0 : index
      %c0_94 = arith.constant 0 : index
      %266 = vector.load %arg4[%c0_92, %c0_93, %c0_94] : memref<1x8x64xbf16, #tpu.memory_space<vmem>>, vector<1x8x64xbf16>
      %267 = vector.shape_cast %266 : vector<1x8x64xbf16> to vector<8x64xbf16>
      %c0_95 = arith.constant 0 : index
      %c0_96 = arith.constant 0 : index
      %268 = vector.load %arg6[%c0_95, %c0_96] : memref<64x64xbf16, #tpu.memory_space<vmem>>, vector<64x64xbf16>
      %cst_97 = arith.constant dense<0.000000e+00> : vector<8x64xf32>
      %269 = tpu.matmul %267, %268, %cst_97 {dimension_numbers = #tpu.dot_dimension_numbers<[1], [0], [0], [1], [0, 0, 1, 1], [], []>} : vector<8x64xbf16>, vector<64x64xbf16>, vector<8x64xf32> -> vector<8x64xf32>
      %270 = arith.truncf %269 : vector<8x64xf32> to vector<8x64xbf16>
      %c0_98 = arith.constant 0 : index
      %c0_99 = arith.constant 0 : index
      %271 = vector.load %arg18[%c0_98, %c0_99] : memref<8x64xbf16, #tpu.memory_space<vmem>>, vector<8x64xbf16>
      tpu.vector_store %arg18[%c0_98, %c0_99], %270 {strides = array<i32>} : memref<8x64xbf16, #tpu.memory_space<vmem>>, vector<8x64xbf16>,
      %c0_100 = arith.constant 0 : index
      %c0_101 = arith.constant 0 : index
      %272 = vector.load %arg7[%c0_100, %c0_101] : memref<64x64xbf16, #tpu.memory_space<vmem>>, vector<64x64xbf16>
      %cst_102 = arith.constant dense<0.000000e+00> : vector<8x64xf32>
      %273 = tpu.matmul %267, %272, %cst_102 {dimension_numbers = #tpu.dot_dimension_numbers<[1], [0], [0], [1], [0, 0, 1, 1], [], []>} : vector<8x64xbf16>, vector<64x64xbf16>, vector<8x64xf32> -> vector<8x64xf32>
      %274 = arith.truncf %273 : vector<8x64xf32> to vector<8x64xbf16>
      %c0_103 = arith.constant 0 : index
      %c0_104 = arith.constant 0 : index
      %275 = vector.load %arg19[%c0_103, %c0_104] : memref<8x64xbf16, #tpu.memory_space<vmem>>, vector<8x64xbf16>
      tpu.vector_store %arg19[%c0_103, %c0_104], %274 {strides = array<i32>} : memref<8x64xbf16, #tpu.memory_space<vmem>>, vector<8x64xbf16>,
    } else {
    }
    %c0 = arith.constant 0 : index
    %c0_1 = arith.constant 0 : index
    %c0_2 = arith.constant 0 : index
    %3 = vector.load %arg3[%c0, %c0_1, %c0_2] : memref<1x8x64xf32, #tpu.memory_space<vmem>>, vector<1x8x64xf32>
    %4 = vector.shape_cast %3 : vector<1x8x64xf32> to vector<8x64xf32>
    %5 = arith.truncf %4 : vector<8x64xf32> to vector<8x64xbf16>
    %c0_3 = arith.constant 0 : index
    %c0_4 = arith.constant 0 : index
    %6 = vector.load %arg5[%c0_3, %c0_4] : memref<64x64xbf16, #tpu.memory_space<vmem>>, vector<64x64xbf16>
    %cst = arith.constant dense<0.000000e+00> : vector<8x64xf32>
    %7 = tpu.matmul %5, %6, %cst {dimension_numbers = #tpu.dot_dimension_numbers<[1], [0], [0], [1], [0, 0, 1, 1], [], []>} : vector<8x64xbf16>, vector<64x64xbf16>, vector<8x64xf32> -> vector<8x64xf32>
    %8 = arith.truncf %7 : vector<8x64xf32> to vector<8x64xbf16>
    %c0_5 = arith.constant 0 : index
    %c0_6 = arith.constant 0 : index
    %9 = vector.load %arg18[%c0_5, %c0_6] : memref<8x64xbf16, #tpu.memory_space<vmem>>, vector<8x64xbf16>
    %c0_7 = arith.constant 0 : index
    %c0_8 = arith.constant 0 : index
    %10 = vector.load %arg19[%c0_7, %c0_8] : memref<8x64xbf16, #tpu.memory_space<vmem>>, vector<8x64xbf16>
    %c0_9 = arith.constant 0 : index
    %c0_10 = arith.constant 0 : index
    %11 = memref.load %arg2[%c0_9, %c0_10] : memref<1x1xf32, #tpu.memory_space<smem>>
    %12 = vector.extract_strided_slice %8 {offsets = [0, 0], sizes = [8, 8], strides = [1, 1]} : vector<8x64xbf16> to vector<8x8xbf16>
    %13 = vector.extract_strided_slice %8 {offsets = [0, 8], sizes = [8, 8], strides = [1, 1]} : vector<8x64xbf16> to vector<8x8xbf16>
    %14 = vector.extract_strided_slice %9 {offsets = [0, 0], sizes = [8, 8], strides = [1, 1]} : vector<8x64xbf16> to vector<8x8xbf16>
    %15 = vector.extract_strided_slice %9 {offsets = [0, 8], sizes = [8, 8], strides = [1, 1]} : vector<8x64xbf16> to vector<8x8xbf16>
    %16 = vector.extract_strided_slice %10 {offsets = [0, 0], sizes = [8, 16], strides = [1, 1]} : vector<8x64xbf16> to vector<8x16xbf16>
    %cst_11 = arith.constant dense<0.000000e+00> : vector<8x8xf32>
    %17 = tpu.matmul %12, %14, %cst_11 {dimension_numbers = #tpu.dot_dimension_numbers<[1], [1], [0], [0], [0, 0, 1, 0], [], []>} : vector<8x8xbf16>, vector<8x8xbf16>, vector<8x8xf32> -> vector<8x8xf32>
    %cst_12 = arith.constant dense<0.000000e+00> : vector<8x8xf32>
    %18 = tpu.matmul %13, %15, %cst_12 {dimension_numbers = #tpu.dot_dimension_numbers<[1], [1], [0], [0], [0, 0, 1, 0], [], []>} : vector<8x8xbf16>, vector<8x8xbf16>, vector<8x8xf32> -> vector<8x8xf32>
    %cst_13 = arith.constant dense<0xFF800000> : vector<8xf32>
    %19 = vector.multi_reduction <maximumf>, %17, %cst_13 [1] : vector<8x8xf32> to vector<8xf32>
    %20 = vector.shape_cast %19 : vector<8xf32> to vector<8x1xf32>
    %21 = vector.broadcast %20 : vector<8x1xf32> to vector<8x8xf32>
    %22 = arith.subf %17, %21 : vector<8x8xf32>
    %23 = math.exp %22 : vector<8x8xf32>
    %cst_14 = arith.constant dense<0.000000e+00> : vector<8xf32>
    %24 = vector.multi_reduction <add>, %23, %cst_14 [1] : vector<8x8xf32> to vector<8xf32>
    %25 = vector.shape_cast %24 : vector<8xf32> to vector<8x1xf32>
    %26 = tpu.reciprocal %25 {approx = true} : vector<8x1xf32> -> vector<8x1xf32>
    %27 = vector.broadcast %26 : vector<8x1xf32> to vector<8x8xf32>
    %28 = arith.mulf %23, %27 : vector<8x8xf32>
    %cst_15 = arith.constant dense<0xFF800000> : vector<8xf32>
    %29 = vector.multi_reduction <maximumf>, %18, %cst_15 [1] : vector<8x8xf32> to vector<8xf32>
    %30 = vector.shape_cast %29 : vector<8xf32> to vector<8x1xf32>
    %31 = vector.broadcast %30 : vector<8x1xf32> to vector<8x8xf32>
    %32 = arith.subf %18, %31 : vector<8x8xf32>
    %33 = math.exp %32 : vector<8x8xf32>
    %cst_16 = arith.constant dense<0.000000e+00> : vector<8xf32>
    %34 = vector.multi_reduction <add>, %33, %cst_16 [1] : vector<8x8xf32> to vector<8xf32>
    %35 = vector.shape_cast %34 : vector<8xf32> to vector<8x1xf32>
    %36 = tpu.reciprocal %35 {approx = true} : vector<8x1xf32> -> vector<8x1xf32>
    %37 = vector.broadcast %36 : vector<8x1xf32> to vector<8x8xf32>
    %38 = arith.mulf %33, %37 : vector<8x8xf32>
    %39 = vector.broadcast %11 : f32 to vector<8x8xf32>
    %40 = arith.mulf %39, %38 : vector<8x8xf32>
    %41 = arith.subf %28, %40 : vector<8x8xf32>
    %42 = arith.truncf %41 : vector<8x8xf32> to vector<8x8xbf16>
    %cst_17 = arith.constant dense<0.000000e+00> : vector<8x16xf32>
    %43 = tpu.matmul %42, %16, %cst_17 {dimension_numbers = #tpu.dot_dimension_numbers<[1], [0], [0], [1], [0, 0, 1, 1], [], []>} : vector<8x8xbf16>, vector<8x16xbf16>, vector<8x16xf32> -> vector<8x16xf32>
    %44 = arith.mulf %43, %43 : vector<8x16xf32>
    %cst_18 = arith.constant dense<0.000000e+00> : vector<8xf32>
    %45 = vector.multi_reduction <add>, %44, %cst_18 [1] : vector<8x16xf32> to vector<8xf32>
    %46 = vector.shape_cast %45 : vector<8xf32> to vector<8x1xf32>
    %cst_19 = arith.constant 1.600000e+01 : f32
    %47 = vector.broadcast %cst_19 : f32 to vector<8x1xf32>
    %48 = arith.divf %46, %47 : vector<8x1xf32>
    %cst_20 = arith.constant 9.99999974E-6 : f32
    %49 = vector.broadcast %cst_20 : f32 to vector<8x1xf32>
    %50 = arith.addf %48, %49 : vector<8x1xf32>
    %51 = math.rsqrt %50 : vector<8x1xf32>
    %52 = vector.broadcast %51 : vector<8x1xf32> to vector<8x16xf32>
    %53 = arith.mulf %43, %52 : vector<8x16xf32>
    %54 = arith.truncf %53 : vector<8x16xf32> to vector<8x16xbf16>
    %c0_21 = arith.constant 0 : index
    %c0_22 = arith.constant 0 : index
    %55 = vector.load %arg8[%c0_21, %c0_22] : memref<64x64xbf16, #tpu.memory_space<vmem>>, vector<16x64xbf16>
    %cst_23 = arith.constant dense<0.000000e+00> : vector<8x64xf32>
    %56 = tpu.matmul %54, %55, %cst_23 {dimension_numbers = #tpu.dot_dimension_numbers<[1], [0], [0], [1], [0, 0, 1, 1], [], []>} : vector<8x16xbf16>, vector<16x64xbf16>, vector<8x64xf32> -> vector<8x64xf32>
    %57 = vector.extract_strided_slice %8 {offsets = [0, 16], sizes = [8, 8], strides = [1, 1]} : vector<8x64xbf16> to vector<8x8xbf16>
    %58 = vector.extract_strided_slice %8 {offsets = [0, 24], sizes = [8, 8], strides = [1, 1]} : vector<8x64xbf16> to vector<8x8xbf16>
    %59 = vector.extract_strided_slice %9 {offsets = [0, 16], sizes = [8, 8], strides = [1, 1]} : vector<8x64xbf16> to vector<8x8xbf16>
    %60 = vector.extract_strided_slice %9 {offsets = [0, 24], sizes = [8, 8], strides = [1, 1]} : vector<8x64xbf16> to vector<8x8xbf16>
    %61 = vector.extract_strided_slice %10 {offsets = [0, 16], sizes = [8, 16], strides = [1, 1]} : vector<8x64xbf16> to vector<8x16xbf16>
    %cst_24 = arith.constant dense<0.000000e+00> : vector<8x8xf32>
    %62 = tpu.matmul %57, %59, %cst_24 {dimension_numbers = #tpu.dot_dimension_numbers<[1], [1], [0], [0], [0, 0, 1, 0], [], []>} : vector<8x8xbf16>, vector<8x8xbf16>, vector<8x8xf32> -> vector<8x8xf32>
    %cst_25 = arith.constant dense<0.000000e+00> : vector<8x8xf32>
    %63 = tpu.matmul %58, %60, %cst_25 {dimension_numbers = #tpu.dot_dimension_numbers<[1], [1], [0], [0], [0, 0, 1, 0], [], []>} : vector<8x8xbf16>, vector<8x8xbf16>, vector<8x8xf32> -> vector<8x8xf32>
    %cst_26 = arith.constant dense<0xFF800000> : vector<8xf32>
    %64 = vector.multi_reduction <maximumf>, %62, %cst_26 [1] : vector<8x8xf32> to vector<8xf32>
    %65 = vector.shape_cast %64 : vector<8xf32> to vector<8x1xf32>
    %66 = vector.broadcast %65 : vector<8x1xf32> to vector<8x8xf32>
    %67 = arith.subf %62, %66 : vector<8x8xf32>
    %68 = math.exp %67 : vector<8x8xf32>
    %cst_27 = arith.constant dense<0.000000e+00> : vector<8xf32>
    %69 = vector.multi_reduction <add>, %68, %cst_27 [1] : vector<8x8xf32> to vector<8xf32>
    %70 = vector.shape_cast %69 : vector<8xf32> to vector<8x1xf32>
    %71 = tpu.reciprocal %70 {approx = true} : vector<8x1xf32> -> vector<8x1xf32>
    %72 = vector.broadcast %71 : vector<8x1xf32> to vector<8x8xf32>
    %73 = arith.mulf %68, %72 : vector<8x8xf32>
    %cst_28 = arith.constant dense<0xFF800000> : vector<8xf32>
    %74 = vector.multi_reduction <maximumf>, %63, %cst_28 [1] : vector<8x8xf32> to vector<8xf32>
    %75 = vector.shape_cast %74 : vector<8xf32> to vector<8x1xf32>
    %76 = vector.broadcast %75 : vector<8x1xf32> to vector<8x8xf32>
    %77 = arith.subf %63, %76 : vector<8x8xf32>
    %78 = math.exp %77 : vector<8x8xf32>
    %cst_29 = arith.constant dense<0.000000e+00> : vector<8xf32>
    %79 = vector.multi_reduction <add>, %78, %cst_29 [1] : vector<8x8xf32> to vector<8xf32>
    %80 = vector.shape_cast %79 : vector<8xf32> to vector<8x1xf32>
    %81 = tpu.reciprocal %80 {approx = true} : vector<8x1xf32> -> vector<8x1xf32>
    %82 = vector.broadcast %81 : vector<8x1xf32> to vector<8x8xf32>
    %83 = arith.mulf %78, %82 : vector<8x8xf32>
    %84 = vector.broadcast %11 : f32 to vector<8x8xf32>
    %85 = arith.mulf %84, %83 : vector<8x8xf32>
    %86 = arith.subf %73, %85 : vector<8x8xf32>
    %87 = arith.truncf %86 : vector<8x8xf32> to vector<8x8xbf16>
    %cst_30 = arith.constant dense<0.000000e+00> : vector<8x16xf32>
    %88 = tpu.matmul %87, %61, %cst_30 {dimension_numbers = #tpu.dot_dimension_numbers<[1], [0], [0], [1], [0, 0, 1, 1], [], []>} : vector<8x8xbf16>, vector<8x16xbf16>, vector<8x16xf32> -> vector<8x16xf32>
    %89 = arith.mulf %88, %88 : vector<8x16xf32>
    %cst_31 = arith.constant dense<0.000000e+00> : vector<8xf32>
    %90 = vector.multi_reduction <add>, %89, %cst_31 [1] : vector<8x16xf32> to vector<8xf32>
    %91 = vector.shape_cast %90 : vector<8xf32> to vector<8x1xf32>
    %cst_32 = arith.constant 1.600000e+01 : f32
    %92 = vector.broadcast %cst_32 : f32 to vector<8x1xf32>
    %93 = arith.divf %91, %92 : vector<8x1xf32>
    %cst_33 = arith.constant 9.99999974E-6 : f32
    %94 = vector.broadcast %cst_33 : f32 to vector<8x1xf32>
    %95 = arith.addf %93, %94 : vector<8x1xf32>
    %96 = math.rsqrt %95 : vector<8x1xf32>
    %97 = vector.broadcast %96 : vector<8x1xf32> to vector<8x16xf32>
    %98 = arith.mulf %88, %97 : vector<8x16xf32>
    %99 = arith.truncf %98 : vector<8x16xf32> to vector<8x16xbf16>
    %c16 = arith.constant 16 : index
    %c0_34 = arith.constant 0 : index
    %100 = vector.load %arg8[%c16, %c0_34] : memref<64x64xbf16, #tpu.memory_space<vmem>>, vector<16x64xbf16>
    %cst_35 = arith.constant dense<0.000000e+00> : vector<8x64xf32>
    %101 = tpu.matmul %99, %100, %cst_35 {dimension_numbers = #tpu.dot_dimension_numbers<[1], [0], [0], [1], [0, 0, 1, 1], [], []>} : vector<8x16xbf16>, vector<16x64xbf16>, vector<8x64xf32> -> vector<8x64xf32>
    %102 = arith.addf %56, %101 : vector<8x64xf32>
    %103 = vector.extract_strided_slice %8 {offsets = [0, 32], sizes = [8, 8], strides = [1, 1]} : vector<8x64xbf16> to vector<8x8xbf16>
    %104 = vector.extract_strided_slice %8 {offsets = [0, 40], sizes = [8, 8], strides = [1, 1]} : vector<8x64xbf16> to vector<8x8xbf16>
    %105 = vector.extract_strided_slice %9 {offsets = [0, 32], sizes = [8, 8], strides = [1, 1]} : vector<8x64xbf16> to vector<8x8xbf16>
    %106 = vector.extract_strided_slice %9 {offsets = [0, 40], sizes = [8, 8], strides = [1, 1]} : vector<8x64xbf16> to vector<8x8xbf16>
    %107 = vector.extract_strided_slice %10 {offsets = [0, 32], sizes = [8, 16], strides = [1, 1]} : vector<8x64xbf16> to vector<8x16xbf16>
    %cst_36 = arith.constant dense<0.000000e+00> : vector<8x8xf32>
    %108 = tpu.matmul %103, %105, %cst_36 {dimension_numbers = #tpu.dot_dimension_numbers<[1], [1], [0], [0], [0, 0, 1, 0], [], []>} : vector<8x8xbf16>, vector<8x8xbf16>, vector<8x8xf32> -> vector<8x8xf32>
    %cst_37 = arith.constant dense<0.000000e+00> : vector<8x8xf32>
    %109 = tpu.matmul %104, %106, %cst_37 {dimension_numbers = #tpu.dot_dimension_numbers<[1], [1], [0], [0], [0, 0, 1, 0], [], []>} : vector<8x8xbf16>, vector<8x8xbf16>, vector<8x8xf32> -> vector<8x8xf32>
    %cst_38 = arith.constant dense<0xFF800000> : vector<8xf32>
    %110 = vector.multi_reduction <maximumf>, %108, %cst_38 [1] : vector<8x8xf32> to vector<8xf32>
    %111 = vector.shape_cast %110 : vector<8xf32> to vector<8x1xf32>
    %112 = vector.broadcast %111 : vector<8x1xf32> to vector<8x8xf32>
    %113 = arith.subf %108, %112 : vector<8x8xf32>
    %114 = math.exp %113 : vector<8x8xf32>
    %cst_39 = arith.constant dense<0.000000e+00> : vector<8xf32>
    %115 = vector.multi_reduction <add>, %114, %cst_39 [1] : vector<8x8xf32> to vector<8xf32>
    %116 = vector.shape_cast %115 : vector<8xf32> to vector<8x1xf32>
    %117 = tpu.reciprocal %116 {approx = true} : vector<8x1xf32> -> vector<8x1xf32>
    %118 = vector.broadcast %117 : vector<8x1xf32> to vector<8x8xf32>
    %119 = arith.mulf %114, %118 : vector<8x8xf32>
    %cst_40 = arith.constant dense<0xFF800000> : vector<8xf32>
    %120 = vector.multi_reduction <maximumf>, %109, %cst_40 [1] : vector<8x8xf32> to vector<8xf32>
    %121 = vector.shape_cast %120 : vector<8xf32> to vector<8x1xf32>
    %122 = vector.broadcast %121 : vector<8x1xf32> to vector<8x8xf32>
    %123 = arith.subf %109, %122 : vector<8x8xf32>
    %124 = math.exp %123 : vector<8x8xf32>
    %cst_41 = arith.constant dense<0.000000e+00> : vector<8xf32>
    %125 = vector.multi_reduction <add>, %124, %cst_41 [1] : vector<8x8xf32> to vector<8xf32>
    %126 = vector.shape_cast %125 : vector<8xf32> to vector<8x1xf32>
    %127 = tpu.reciprocal %126 {approx = true} : vector<8x1xf32> -> vector<8x1xf32>
    %128 = vector.broadcast %127 : vector<8x1xf32> to vector<8x8xf32>
    %129 = arith.mulf %124, %128 : vector<8x8xf32>
    %130 = vector.broadcast %11 : f32 to vector<8x8xf32>
    %131 = arith.mulf %130, %129 : vector<8x8xf32>
    %132 = arith.subf %119, %131 : vector<8x8xf32>
    %133 = arith.truncf %132 : vector<8x8xf32> to vector<8x8xbf16>
    %cst_42 = arith.constant dense<0.000000e+00> : vector<8x16xf32>
    %134 = tpu.matmul %133, %107, %cst_42 {dimension_numbers = #tpu.dot_dimension_numbers<[1], [0], [0], [1], [0, 0, 1, 1], [], []>} : vector<8x8xbf16>, vector<8x16xbf16>, vector<8x16xf32> -> vector<8x16xf32>
    %135 = arith.mulf %134, %134 : vector<8x16xf32>
    %cst_43 = arith.constant dense<0.000000e+00> : vector<8xf32>
    %136 = vector.multi_reduction <add>, %135, %cst_43 [1] : vector<8x16xf32> to vector<8xf32>
    %137 = vector.shape_cast %136 : vector<8xf32> to vector<8x1xf32>
    %cst_44 = arith.constant 1.600000e+01 : f32
    %138 = vector.broadcast %cst_44 : f32 to vector<8x1xf32>
    %139 = arith.divf %137, %138 : vector<8x1xf32>
    %cst_45 = arith.constant 9.99999974E-6 : f32
    %140 = vector.broadcast %cst_45 : f32 to vector<8x1xf32>
    %141 = arith.addf %139, %140 : vector<8x1xf32>
    %142 = math.rsqrt %141 : vector<8x1xf32>
    %143 = vector.broadcast %142 : vector<8x1xf32> to vector<8x16xf32>
    %144 = arith.mulf %134, %143 : vector<8x16xf32>
    %145 = arith.truncf %144 : vector<8x16xf32> to vector<8x16xbf16>
    %c32 = arith.constant 32 : index
    %c0_46 = arith.constant 0 : index
    %146 = vector.load %arg8[%c32, %c0_46] : memref<64x64xbf16, #tpu.memory_space<vmem>>, vector<16x64xbf16>
    %cst_47 = arith.constant dense<0.000000e+00> : vector<8x64xf32>
    %147 = tpu.matmul %145, %146, %cst_47 {dimension_numbers = #tpu.dot_dimension_numbers<[1], [0], [0], [1], [0, 0, 1, 1], [], []>} : vector<8x16xbf16>, vector<16x64xbf16>, vector<8x64xf32> -> vector<8x64xf32>
    %148 = arith.addf %102, %147 : vector<8x64xf32>
    %149 = vector.extract_strided_slice %8 {offsets = [0, 48], sizes = [8, 8], strides = [1, 1]} : vector<8x64xbf16> to vector<8x8xbf16>
    %150 = vector.extract_strided_slice %8 {offsets = [0, 56], sizes = [8, 8], strides = [1, 1]} : vector<8x64xbf16> to vector<8x8xbf16>
    %151 = vector.extract_strided_slice %9 {offsets = [0, 48], sizes = [8, 8], strides = [1, 1]} : vector<8x64xbf16> to vector<8x8xbf16>
    %152 = vector.extract_strided_slice %9 {offsets = [0, 56], sizes = [8, 8], strides = [1, 1]} : vector<8x64xbf16> to vector<8x8xbf16>
    %153 = vector.extract_strided_slice %10 {offsets = [0, 48], sizes = [8, 16], strides = [1, 1]} : vector<8x64xbf16> to vector<8x16xbf16>
    %cst_48 = arith.constant dense<0.000000e+00> : vector<8x8xf32>
    %154 = tpu.matmul %149, %151, %cst_48 {dimension_numbers = #tpu.dot_dimension_numbers<[1], [1], [0], [0], [0, 0, 1, 0], [], []>} : vector<8x8xbf16>, vector<8x8xbf16>, vector<8x8xf32> -> vector<8x8xf32>
    %cst_49 = arith.constant dense<0.000000e+00> : vector<8x8xf32>
    %155 = tpu.matmul %150, %152, %cst_49 {dimension_numbers = #tpu.dot_dimension_numbers<[1], [1], [0], [0], [0, 0, 1, 0], [], []>} : vector<8x8xbf16>, vector<8x8xbf16>, vector<8x8xf32> -> vector<8x8xf32>
    %cst_50 = arith.constant dense<0xFF800000> : vector<8xf32>
    %156 = vector.multi_reduction <maximumf>, %154, %cst_50 [1] : vector<8x8xf32> to vector<8xf32>
    %157 = vector.shape_cast %156 : vector<8xf32> to vector<8x1xf32>
    %158 = vector.broadcast %157 : vector<8x1xf32> to vector<8x8xf32>
    %159 = arith.subf %154, %158 : vector<8x8xf32>
    %160 = math.exp %159 : vector<8x8xf32>
    %cst_51 = arith.constant dense<0.000000e+00> : vector<8xf32>
    %161 = vector.multi_reduction <add>, %160, %cst_51 [1] : vector<8x8xf32> to vector<8xf32>
    %162 = vector.shape_cast %161 : vector<8xf32> to vector<8x1xf32>
    %163 = tpu.reciprocal %162 {approx = true} : vector<8x1xf32> -> vector<8x1xf32>
    %164 = vector.broadcast %163 : vector<8x1xf32> to vector<8x8xf32>
    %165 = arith.mulf %160, %164 : vector<8x8xf32>
    %cst_52 = arith.constant dense<0xFF800000> : vector<8xf32>
    %166 = vector.multi_reduction <maximumf>, %155, %cst_52 [1] : vector<8x8xf32> to vector<8xf32>
    %167 = vector.shape_cast %166 : vector<8xf32> to vector<8x1xf32>
    %168 = vector.broadcast %167 : vector<8x1xf32> to vector<8x8xf32>
    %169 = arith.subf %155, %168 : vector<8x8xf32>
    %170 = math.exp %169 : vector<8x8xf32>
    %cst_53 = arith.constant dense<0.000000e+00> : vector<8xf32>
    %171 = vector.multi_reduction <add>, %170, %cst_53 [1] : vector<8x8xf32> to vector<8xf32>
    %172 = vector.shape_cast %171 : vector<8xf32> to vector<8x1xf32>
    %173 = tpu.reciprocal %172 {approx = true} : vector<8x1xf32> -> vector<8x1xf32>
    %174 = vector.broadcast %173 : vector<8x1xf32> to vector<8x8xf32>
    %175 = arith.mulf %170, %174 : vector<8x8xf32>
    %176 = vector.broadcast %11 : f32 to vector<8x8xf32>
    %177 = arith.mulf %176, %175 : vector<8x8xf32>
    %178 = arith.subf %165, %177 : vector<8x8xf32>
    %179 = arith.truncf %178 : vector<8x8xf32> to vector<8x8xbf16>
    %cst_54 = arith.constant dense<0.000000e+00> : vector<8x16xf32>
    %180 = tpu.matmul %179, %153, %cst_54 {dimension_numbers = #tpu.dot_dimension_numbers<[1], [0], [0], [1], [0, 0, 1, 1], [], []>} : vector<8x8xbf16>, vector<8x16xbf16>, vector<8x16xf32> -> vector<8x16xf32>
    %181 = arith.mulf %180, %180 : vector<8x16xf32>
    %cst_55 = arith.constant dense<0.000000e+00> : vector<8xf32>
    %182 = vector.multi_reduction <add>, %181, %cst_55 [1] : vector<8x16xf32> to vector<8xf32>
    %183 = vector.shape_cast %182 : vector<8xf32> to vector<8x1xf32>
    %cst_56 = arith.constant 1.600000e+01 : f32
    %184 = vector.broadcast %cst_56 : f32 to vector<8x1xf32>
    %185 = arith.divf %183, %184 : vector<8x1xf32>
    %cst_57 = arith.constant 9.99999974E-6 : f32
    %186 = vector.broadcast %cst_57 : f32 to vector<8x1xf32>
    %187 = arith.addf %185, %186 : vector<8x1xf32>
    %188 = math.rsqrt %187 : vector<8x1xf32>
    %189 = vector.broadcast %188 : vector<8x1xf32> to vector<8x16xf32>
    %190 = arith.mulf %180, %189 : vector<8x16xf32>
    %191 = arith.truncf %190 : vector<8x16xf32> to vector<8x16xbf16>
    %c48 = arith.constant 48 : index
    %c0_58 = arith.constant 0 : index
    %192 = vector.load %arg8[%c48, %c0_58] : memref<64x64xbf16, #tpu.memory_space<vmem>>, vector<16x64xbf16>
    %cst_59 = arith.constant dense<0.000000e+00> : vector<8x64xf32>
    %193 = tpu.matmul %191, %192, %cst_59 {dimension_numbers = #tpu.dot_dimension_numbers<[1], [0], [0], [1], [0, 0, 1, 1], [], []>} : vector<8x16xbf16>, vector<16x64xbf16>, vector<8x64xf32> -> vector<8x64xf32>
    %194 = arith.addf %148, %193 : vector<8x64xf32>
    %195 = arith.addf %4, %194 : vector<8x64xf32>
    %cst_60 = arith.constant dense<0.000000e+00> : vector<8xf32>
    %196 = vector.multi_reduction <add>, %195, %cst_60 [1] : vector<8x64xf32> to vector<8xf32>
    %197 = vector.shape_cast %196 : vector<8xf32> to vector<8x1xf32>
    %cst_61 = arith.constant 6.400000e+01 : f32
    %198 = vector.broadcast %cst_61 : f32 to vector<8x1xf32>
    %199 = arith.divf %197, %198 : vector<8x1xf32>
    %200 = vector.broadcast %199 : vector<8x1xf32> to vector<8x64xf32>
    %201 = arith.subf %195, %200 : vector<8x64xf32>
    %202 = vector.broadcast %199 : vector<8x1xf32> to vector<8x64xf32>
    %203 = arith.subf %195, %202 : vector<8x64xf32>
    %204 = arith.mulf %201, %203 : vector<8x64xf32>
    %cst_62 = arith.constant dense<0.000000e+00> : vector<8xf32>
    %205 = vector.multi_reduction <add>, %204, %cst_62 [1] : vector<8x64xf32> to vector<8xf32>
    %206 = vector.shape_cast %205 : vector<8xf32> to vector<8x1xf32>
    %cst_63 = arith.constant 6.400000e+01 : f32
    %207 = vector.broadcast %cst_63 : f32 to vector<8x1xf32>
    %208 = arith.divf %206, %207 : vector<8x1xf32>
    %209 = vector.broadcast %199 : vector<8x1xf32> to vector<8x64xf32>
    %210 = arith.subf %195, %209 : vector<8x64xf32>
    %cst_64 = arith.constant 9.99999974E-6 : f32
    %211 = vector.broadcast %cst_64 : f32 to vector<8x1xf32>
    %212 = arith.addf %208, %211 : vector<8x1xf32>
    %213 = math.rsqrt %212 : vector<8x1xf32>
    %214 = vector.broadcast %213 : vector<8x1xf32> to vector<8x64xf32>
    %215 = arith.mulf %210, %214 : vector<8x64xf32>
    %c0_65 = arith.constant 0 : index
    %c0_66 = arith.constant 0 : index
    %216 = vector.load %arg13[%c0_65, %c0_66] : memref<1x64xf32, #tpu.memory_space<vmem>>, vector<1x64xf32>
    %217 = vector.broadcast %216 : vector<1x64xf32> to vector<8x64xf32>
    %218 = arith.mulf %215, %217 : vector<8x64xf32>
    %c0_67 = arith.constant 0 : index
    %c0_68 = arith.constant 0 : index
    %219 = vector.load %arg14[%c0_67, %c0_68] : memref<1x64xf32, #tpu.memory_space<vmem>>, vector<1x64xf32>
    %220 = vector.broadcast %219 : vector<1x64xf32> to vector<8x64xf32>
    %221 = arith.addf %218, %220 : vector<8x64xf32>
    %222 = arith.truncf %221 : vector<8x64xf32> to vector<8x64xbf16>
    %c0_69 = arith.constant 0 : index
    %c0_70 = arith.constant 0 : index
    %223 = vector.load %arg9[%c0_69, %c0_70] : memref<64x128xbf16, #tpu.memory_space<vmem>>, vector<64x128xbf16>
    %cst_71 = arith.constant dense<0.000000e+00> : vector<8x128xf32>
    %224 = tpu.matmul %222, %223, %cst_71 {dimension_numbers = #tpu.dot_dimension_numbers<[1], [0], [0], [1], [0, 0, 1, 1], [], []>} : vector<8x64xbf16>, vector<64x128xbf16>, vector<8x128xf32> -> vector<8x128xf32>
    %c0_72 = arith.constant 0 : index
    %c0_73 = arith.constant 0 : index
    %225 = vector.load %arg10[%c0_72, %c0_73] : memref<1x128xf32, #tpu.memory_space<vmem>>, vector<1x128xf32>
    %226 = vector.broadcast %225 : vector<1x128xf32> to vector<8x128xf32>
    %227 = arith.addf %224, %226 : vector<8x128xf32>
    %cst_74 = arith.constant 0.000000e+00 : f32
    %228 = vector.broadcast %cst_74 : f32 to vector<8x128xf32>
    %229 = arith.maximumf %227, %228 : vector<8x128xf32>
    %230 = arith.truncf %229 : vector<8x128xf32> to vector<8x128xbf16>
    %c0_75 = arith.constant 0 : index
    %c0_76 = arith.constant 0 : index
    %231 = vector.load %arg11[%c0_75, %c0_76] : memref<128x64xbf16, #tpu.memory_space<vmem>>, vector<128x64xbf16>
    %cst_77 = arith.constant dense<0.000000e+00> : vector<8x64xf32>
    %232 = tpu.matmul %230, %231, %cst_77 {dimension_numbers = #tpu.dot_dimension_numbers<[1], [0], [0], [1], [0, 0, 1, 1], [], []>} : vector<8x128xbf16>, vector<128x64xbf16>, vector<8x64xf32> -> vector<8x64xf32>
    %c0_78 = arith.constant 0 : index
    %c0_79 = arith.constant 0 : index
    %233 = vector.load %arg12[%c0_78, %c0_79] : memref<1x64xf32, #tpu.memory_space<vmem>>, vector<1x64xf32>
    %234 = vector.broadcast %233 : vector<1x64xf32> to vector<8x64xf32>
    %235 = arith.addf %232, %234 : vector<8x64xf32>
    %236 = arith.addf %221, %235 : vector<8x64xf32>
    %cst_80 = arith.constant dense<0.000000e+00> : vector<8xf32>
    %237 = vector.multi_reduction <add>, %236, %cst_80 [1] : vector<8x64xf32> to vector<8xf32>
    %238 = vector.shape_cast %237 : vector<8xf32> to vector<8x1xf32>
    %cst_81 = arith.constant 6.400000e+01 : f32
    %239 = vector.broadcast %cst_81 : f32 to vector<8x1xf32>
    %240 = arith.divf %238, %239 : vector<8x1xf32>
    %241 = vector.broadcast %240 : vector<8x1xf32> to vector<8x64xf32>
    %242 = arith.subf %236, %241 : vector<8x64xf32>
    %243 = vector.broadcast %240 : vector<8x1xf32> to vector<8x64xf32>
    %244 = arith.subf %236, %243 : vector<8x64xf32>
    %245 = arith.mulf %242, %244 : vector<8x64xf32>
    %cst_82 = arith.constant dense<0.000000e+00> : vector<8xf32>
    %246 = vector.multi_reduction <add>, %245, %cst_82 [1] : vector<8x64xf32> to vector<8xf32>
    %247 = vector.shape_cast %246 : vector<8xf32> to vector<8x1xf32>
    %cst_83 = arith.constant 6.400000e+01 : f32
    %248 = vector.broadcast %cst_83 : f32 to vector<8x1xf32>
    %249 = arith.divf %247, %248 : vector<8x1xf32>
    %250 = vector.broadcast %240 : vector<8x1xf32> to vector<8x64xf32>
    %251 = arith.subf %236, %250 : vector<8x64xf32>
    %cst_84 = arith.constant 9.99999974E-6 : f32
    %252 = vector.broadcast %cst_84 : f32 to vector<8x1xf32>
    %253 = arith.addf %249, %252 : vector<8x1xf32>
    %254 = math.rsqrt %253 : vector<8x1xf32>
    %255 = vector.broadcast %254 : vector<8x1xf32> to vector<8x64xf32>
    %256 = arith.mulf %251, %255 : vector<8x64xf32>
    %c0_85 = arith.constant 0 : index
    %c0_86 = arith.constant 0 : index
    %257 = vector.load %arg15[%c0_85, %c0_86] : memref<1x64xf32, #tpu.memory_space<vmem>>, vector<1x64xf32>
    %258 = vector.broadcast %257 : vector<1x64xf32> to vector<8x64xf32>
    %259 = arith.mulf %256, %258 : vector<8x64xf32>
    %c0_87 = arith.constant 0 : index
    %c0_88 = arith.constant 0 : index
    %260 = vector.load %arg16[%c0_87, %c0_88] : memref<1x64xf32, #tpu.memory_space<vmem>>, vector<1x64xf32>
    %261 = vector.broadcast %260 : vector<1x64xf32> to vector<8x64xf32>
    %262 = arith.addf %259, %261 : vector<8x64xf32>
    %c0_89 = arith.constant 0 : index
    %c0_90 = arith.constant 0 : index
    %c0_91 = arith.constant 0 : index
    %263 = vector.load %arg17[%c0_89, %c0_90, %c0_91] : memref<1x8x64xf32, #tpu.memory_space<vmem>>, vector<1x8x64xf32>
    %264 = vector.shape_cast %263 : vector<1x8x64xf32> to vector<8x64xf32>
    %265 = vector.shape_cast %262 : vector<8x64xf32> to vector<1x8x64xf32>
    tpu.vector_store %arg17[%c0_89, %c0_90, %c0_91], %265 {strides = array<i32>} : memref<1x8x64xf32, #tpu.memory_space<vmem>>, vector<1x8x64xf32>,
    return
  }
  func.func @transform_0(%arg0: i32, %arg1: i32) -> (i32, i32) {
    %c0_i32 = arith.constant 0 : i32
    %c0_i32_0 = arith.constant 0 : i32
    %c0_i32_1 = arith.constant 0 : i32
    return %c0_i32, %c0_i32_0 : i32, i32
  }
  func.func @transform_1(%arg0: i32, %arg1: i32) -> (i32, i32, i32) {
    %c0_i32 = arith.constant 0 : i32
    %c0_i32_0 = arith.constant 0 : i32
    return %arg0, %arg1, %c0_i32 : i32, i32, i32
  }
  func.func @transform_2(%arg0: i32, %arg1: i32) -> (i32, i32, i32) {
    %c0_i32 = arith.constant 0 : i32
    %c0_i32_0 = arith.constant 0 : i32
    %c0_i32_1 = arith.constant 0 : i32
    return %arg0, %c0_i32, %c0_i32_0 : i32, i32, i32
  }
  func.func @transform_3(%arg0: i32, %arg1: i32) -> (i32, i32) {
    %c0_i32 = arith.constant 0 : i32
    %c0_i32_0 = arith.constant 0 : i32
    %c0_i32_1 = arith.constant 0 : i32
    return %c0_i32, %c0_i32_0 : i32, i32
  }
  func.func @transform_4(%arg0: i32, %arg1: i32) -> (i32, i32) {
    %c0_i32 = arith.constant 0 : i32
    %c0_i32_0 = arith.constant 0 : i32
    %c0_i32_1 = arith.constant 0 : i32
    return %c0_i32, %c0_i32_0 : i32, i32
  }
  func.func @transform_5(%arg0: i32, %arg1: i32) -> (i32, i32) {
    %c0_i32 = arith.constant 0 : i32
    %c0_i32_0 = arith.constant 0 : i32
    %c0_i32_1 = arith.constant 0 : i32
    return %c0_i32, %c0_i32_0 : i32, i32
  }
  func.func @transform_6(%arg0: i32, %arg1: i32) -> (i32, i32) {
    %c0_i32 = arith.constant 0 : i32
    %c0_i32_0 = arith.constant 0 : i32
    %c0_i32_1 = arith.constant 0 : i32
    return %c0_i32, %c0_i32_0 : i32, i32
  }
  func.func @transform_7(%arg0: i32, %arg1: i32) -> (i32, i32) {
    %c0_i32 = arith.constant 0 : i32
    %c0_i32_0 = arith.constant 0 : i32
    %c0_i32_1 = arith.constant 0 : i32
    return %c0_i32, %c0_i32_0 : i32, i32
  }
  func.func @transform_8(%arg0: i32, %arg1: i32) -> (i32, i32) {
    %c0_i32 = arith.constant 0 : i32
    %c0_i32_0 = arith.constant 0 : i32
    %c0_i32_1 = arith.constant 0 : i32
    return %c0_i32, %c0_i32_0 : i32, i32
  }
  func.func @transform_9(%arg0: i32, %arg1: i32) -> (i32, i32) {
    %c0_i32 = arith.constant 0 : i32
    %c0_i32_0 = arith.constant 0 : i32
    %c0_i32_1 = arith.constant 0 : i32
    return %c0_i32, %c0_i32_0 : i32, i32
  }
  func.func @transform_10(%arg0: i32, %arg1: i32) -> (i32, i32) {
    %c0_i32 = arith.constant 0 : i32
    %c0_i32_0 = arith.constant 0 : i32
    %c0_i32_1 = arith.constant 0 : i32
    return %c0_i32, %c0_i32_0 : i32, i32
  }
  func.func @transform_11(%arg0: i32, %arg1: i32) -> (i32, i32) {
    %c0_i32 = arith.constant 0 : i32
    %c0_i32_0 = arith.constant 0 : i32
    %c0_i32_1 = arith.constant 0 : i32
    return %c0_i32, %c0_i32_0 : i32, i32
  }
  func.func @transform_12(%arg0: i32, %arg1: i32) -> (i32, i32) {
    %c0_i32 = arith.constant 0 : i32
    %c0_i32_0 = arith.constant 0 : i32
    %c0_i32_1 = arith.constant 0 : i32
    return %c0_i32, %c0_i32_0 : i32, i32
  }
  func.func @transform_13(%arg0: i32, %arg1: i32) -> (i32, i32) {
    %c0_i32 = arith.constant 0 : i32
    %c0_i32_0 = arith.constant 0 : i32
    %c0_i32_1 = arith.constant 0 : i32
    return %c0_i32, %c0_i32_0 : i32, i32
  }
  func.func @transform_14(%arg0: i32, %arg1: i32) -> (i32, i32) {
    %c0_i32 = arith.constant 0 : i32
    %c0_i32_0 = arith.constant 0 : i32
    %c0_i32_1 = arith.constant 0 : i32
    return %c0_i32, %c0_i32_0 : i32, i32
  }
  func.func @transform_15(%arg0: i32, %arg1: i32) -> (i32, i32, i32) {
    %c0_i32 = arith.constant 0 : i32
    %c0_i32_0 = arith.constant 0 : i32
    return %arg0, %arg1, %c0_i32 : i32, i32, i32
  }
}

module attributes {stable_mosaic.version = 11 : i64} {
  func.func @_encoder_layer_kernel(%arg0: i32, %arg1: i32, %arg2: memref<1x1xf32, #tpu.memory_space<smem>>, %arg3: memref<1x8x64xf32, #tpu.memory_space<vmem>>, %arg4: memref<1x8x64xbf16, #tpu.memory_space<vmem>>, %arg5: memref<64x64xbf16, #tpu.memory_space<vmem>>, %arg6: memref<64x64xbf16, #tpu.memory_space<vmem>>, %arg7: memref<64x64xbf16, #tpu.memory_space<vmem>>, %arg8: memref<64x64xbf16, #tpu.memory_space<vmem>>, %arg9: memref<64x128xbf16, #tpu.memory_space<vmem>>, %arg10: memref<1x128xf32, #tpu.memory_space<vmem>>, %arg11: memref<128x64xbf16, #tpu.memory_space<vmem>>, %arg12: memref<1x64xf32, #tpu.memory_space<vmem>>, %arg13: memref<1x64xf32, #tpu.memory_space<vmem>>, %arg14: memref<1x64xf32, #tpu.memory_space<vmem>>, %arg15: memref<1x64xf32, #tpu.memory_space<vmem>>, %arg16: memref<1x64xf32, #tpu.memory_space<vmem>>, %arg17: memref<1x8x64xf32, #tpu.memory_space<vmem>>, %arg18: memref<8x64xbf16, #tpu.memory_space<vmem>>, %arg19: memref<8x64xbf16, #tpu.memory_space<vmem>>) attributes {dimension_semantics = [#tpu.dimension_semantics<parallel>, #tpu.dimension_semantics<arbitrary>], iteration_bounds = array<i64: 2, 1>, scalar_prefetch = 0 : i64, scratch_operands = 2 : i64, tpu.core_type = #tpu.core_type<tc>, window_params = [{transform_indices = @transform_0, window_bounds = array<i64: 1, 1>}, {transform_indices = @transform_1, window_bounds = array<i64: 1, 8, 64>}, {transform_indices = @transform_2, window_bounds = array<i64: 1, 8, 64>}, {pipeline_mode = #tpu.pipeline_mode<synchronous>, transform_indices = @transform_3, window_bounds = array<i64: 64, 64>}, {pipeline_mode = #tpu.pipeline_mode<synchronous>, transform_indices = @transform_4, window_bounds = array<i64: 64, 64>}, {pipeline_mode = #tpu.pipeline_mode<synchronous>, transform_indices = @transform_5, window_bounds = array<i64: 64, 64>}, {pipeline_mode = #tpu.pipeline_mode<synchronous>, transform_indices = @transform_6, window_bounds = array<i64: 64, 64>}, {pipeline_mode = #tpu.pipeline_mode<synchronous>, transform_indices = @transform_7, window_bounds = array<i64: 64, 128>}, {pipeline_mode = #tpu.pipeline_mode<synchronous>, transform_indices = @transform_8, window_bounds = array<i64: 1, 128>}, {pipeline_mode = #tpu.pipeline_mode<synchronous>, transform_indices = @transform_9, window_bounds = array<i64: 128, 64>}, {pipeline_mode = #tpu.pipeline_mode<synchronous>, transform_indices = @transform_10, window_bounds = array<i64: 1, 64>}, {pipeline_mode = #tpu.pipeline_mode<synchronous>, transform_indices = @transform_11, window_bounds = array<i64: 1, 64>}, {pipeline_mode = #tpu.pipeline_mode<synchronous>, transform_indices = @transform_12, window_bounds = array<i64: 1, 64>}, {pipeline_mode = #tpu.pipeline_mode<synchronous>, transform_indices = @transform_13, window_bounds = array<i64: 1, 64>}, {pipeline_mode = #tpu.pipeline_mode<synchronous>, transform_indices = @transform_14, window_bounds = array<i64: 1, 64>}, {transform_indices = @transform_15, window_bounds = array<i64: 1, 8, 64>}]} {
    %c0_i32 = arith.constant 0 : i32
    %0 = arith.cmpi eq, %arg1, %c0_i32 : i32
    %1 = arith.extui %0 : i1 to i32
    %c0_i32_0 = arith.constant 0 : i32
    %2 = arith.cmpi ne, %1, %c0_i32_0 : i32
    scf.if %2 {
      %c0_92 = arith.constant 0 : index
      %c0_93 = arith.constant 0 : index
      %c0_94 = arith.constant 0 : index
      %266 = vector.load %arg4[%c0_92, %c0_93, %c0_94] : memref<1x8x64xbf16, #tpu.memory_space<vmem>>, vector<1x8x64xbf16>
      %267 = vector.shape_cast %266 : vector<1x8x64xbf16> to vector<8x64xbf16>
      %c0_95 = arith.constant 0 : index
      %c0_96 = arith.constant 0 : index
      %268 = vector.load %arg6[%c0_95, %c0_96] : memref<64x64xbf16, #tpu.memory_space<vmem>>, vector<64x64xbf16>
      %cst_97 = arith.constant dense<0.000000e+00> : vector<8x64xf32>
      %269 = tpu.matmul %267, %268, %cst_97 {dimension_numbers = #tpu.dot_dimension_numbers<[1], [0], [0], [1], [0, 0, 1, 1], [], []>} : vector<8x64xbf16>, vector<64x64xbf16>, vector<8x64xf32> -> vector<8x64xf32>
      %270 = arith.truncf %269 : vector<8x64xf32> to vector<8x64xbf16>
      %c0_98 = arith.constant 0 : index
      %c0_99 = arith.constant 0 : index
      %271 = vector.load %arg18[%c0_98, %c0_99] : memref<8x64xbf16, #tpu.memory_space<vmem>>, vector<8x64xbf16>
      tpu.vector_store %arg18[%c0_98, %c0_99], %270 {strides = array<i32>} : memref<8x64xbf16, #tpu.memory_space<vmem>>, vector<8x64xbf16>,
      %c0_100 = arith.constant 0 : index
      %c0_101 = arith.constant 0 : index
      %272 = vector.load %arg7[%c0_100, %c0_101] : memref<64x64xbf16, #tpu.memory_space<vmem>>, vector<64x64xbf16>
      %cst_102 = arith.constant dense<0.000000e+00> : vector<8x64xf32>
      %273 = tpu.matmul %267, %272, %cst_102 {dimension_numbers = #tpu.dot_dimension_numbers<[1], [0], [0], [1], [0, 0, 1, 1], [], []>} : vector<8x64xbf16>, vector<64x64xbf16>, vector<8x64xf32> -> vector<8x64xf32>
      %274 = arith.truncf %273 : vector<8x64xf32> to vector<8x64xbf16>
      %c0_103 = arith.constant 0 : index
      %c0_104 = arith.constant 0 : index
      %275 = vector.load %arg19[%c0_103, %c0_104] : memref<8x64xbf16, #tpu.memory_space<vmem>>, vector<8x64xbf16>
      tpu.vector_store %arg19[%c0_103, %c0_104], %274 {strides = array<i32>} : memref<8x64xbf16, #tpu.memory_space<vmem>>, vector<8x64xbf16>,
    } else {
    }
    %c0 = arith.constant 0 : index
    %c0_1 = arith.constant 0 : index
    %c0_2 = arith.constant 0 : index
    %3 = vector.load %arg3[%c0, %c0_1, %c0_2] : memref<1x8x64xf32, #tpu.memory_space<vmem>>, vector<1x8x64xf32>
    %4 = vector.shape_cast %3 : vector<1x8x64xf32> to vector<8x64xf32>
    %5 = arith.truncf %4 : vector<8x64xf32> to vector<8x64xbf16>
    %c0_3 = arith.constant 0 : index
    %c0_4 = arith.constant 0 : index
    %6 = vector.load %arg5[%c0_3, %c0_4] : memref<64x64xbf16, #tpu.memory_space<vmem>>, vector<64x64xbf16>
    %cst = arith.constant dense<0.000000e+00> : vector<8x64xf32>
    %7 = tpu.matmul %5, %6, %cst {dimension_numbers = #tpu.dot_dimension_numbers<[1], [0], [0], [1], [0, 0, 1, 1], [], []>} : vector<8x64xbf16>, vector<64x64xbf16>, vector<8x64xf32> -> vector<8x64xf32>
    %8 = arith.truncf %7 : vector<8x64xf32> to vector<8x64xbf16>
    %c0_5 = arith.constant 0 : index
    %c0_6 = arith.constant 0 : index
    %9 = vector.load %arg18[%c0_5, %c0_6] : memref<8x64xbf16, #tpu.memory_space<vmem>>, vector<8x64xbf16>
    %c0_7 = arith.constant 0 : index
    %c0_8 = arith.constant 0 : index
    %10 = vector.load %arg19[%c0_7, %c0_8] : memref<8x64xbf16, #tpu.memory_space<vmem>>, vector<8x64xbf16>
    %c0_9 = arith.constant 0 : index
    %c0_10 = arith.constant 0 : index
    %11 = memref.load %arg2[%c0_9, %c0_10] : memref<1x1xf32, #tpu.memory_space<smem>>
    %12 = vector.extract_strided_slice %8 {offsets = [0, 0], sizes = [8, 8], strides = [1, 1]} : vector<8x64xbf16> to vector<8x8xbf16>
    %13 = vector.extract_strided_slice %8 {offsets = [0, 8], sizes = [8, 8], strides = [1, 1]} : vector<8x64xbf16> to vector<8x8xbf16>
    %14 = vector.extract_strided_slice %9 {offsets = [0, 0], sizes = [8, 8], strides = [1, 1]} : vector<8x64xbf16> to vector<8x8xbf16>
    %15 = vector.extract_strided_slice %9 {offsets = [0, 8], sizes = [8, 8], strides = [1, 1]} : vector<8x64xbf16> to vector<8x8xbf16>
    %16 = vector.extract_strided_slice %10 {offsets = [0, 0], sizes = [8, 16], strides = [1, 1]} : vector<8x64xbf16> to vector<8x16xbf16>
    %cst_11 = arith.constant dense<0.000000e+00> : vector<8x8xf32>
    %17 = tpu.matmul %12, %14, %cst_11 {dimension_numbers = #tpu.dot_dimension_numbers<[1], [1], [0], [0], [0, 0, 1, 0], [], []>} : vector<8x8xbf16>, vector<8x8xbf16>, vector<8x8xf32> -> vector<8x8xf32>
    %cst_12 = arith.constant dense<0.000000e+00> : vector<8x8xf32>
    %18 = tpu.matmul %13, %15, %cst_12 {dimension_numbers = #tpu.dot_dimension_numbers<[1], [1], [0], [0], [0, 0, 1, 0], [], []>} : vector<8x8xbf16>, vector<8x8xbf16>, vector<8x8xf32> -> vector<8x8xf32>
    %cst_13 = arith.constant dense<0xFF800000> : vector<8xf32>
    %19 = vector.multi_reduction <maximumf>, %17, %cst_13 [1] : vector<8x8xf32> to vector<8xf32>
    %20 = vector.shape_cast %19 : vector<8xf32> to vector<8x1xf32>
    %21 = vector.broadcast %20 : vector<8x1xf32> to vector<8x8xf32>
    %22 = arith.subf %17, %21 : vector<8x8xf32>
    %23 = math.exp %22 : vector<8x8xf32>
    %cst_14 = arith.constant dense<0.000000e+00> : vector<8xf32>
    %24 = vector.multi_reduction <add>, %23, %cst_14 [1] : vector<8x8xf32> to vector<8xf32>
    %25 = vector.shape_cast %24 : vector<8xf32> to vector<8x1xf32>
    %26 = tpu.reciprocal %25 {approx = true} : vector<8x1xf32> -> vector<8x1xf32>
    %27 = vector.broadcast %26 : vector<8x1xf32> to vector<8x8xf32>
    %28 = arith.mulf %23, %27 : vector<8x8xf32>
    %cst_15 = arith.constant dense<0xFF800000> : vector<8xf32>
    %29 = vector.multi_reduction <maximumf>, %18, %cst_15 [1] : vector<8x8xf32> to vector<8xf32>
    %30 = vector.shape_cast %29 : vector<8xf32> to vector<8x1xf32>
    %31 = vector.broadcast %30 : vector<8x1xf32> to vector<8x8xf32>
    %32 = arith.subf %18, %31 : vector<8x8xf32>
    %33 = math.exp %32 : vector<8x8xf32>
    %cst_16 = arith.constant dense<0.000000e+00> : vector<8xf32>
    %34 = vector.multi_reduction <add>, %33, %cst_16 [1] : vector<8x8xf32> to vector<8xf32>
    %35 = vector.shape_cast %34 : vector<8xf32> to vector<8x1xf32>
    %36 = tpu.reciprocal %35 {approx = true} : vector<8x1xf32> -> vector<8x1xf32>
    %37 = vector.broadcast %36 : vector<8x1xf32> to vector<8x8xf32>
    %38 = arith.mulf %33, %37 : vector<8x8xf32>
    %39 = vector.broadcast %11 : f32 to vector<8x8xf32>
    %40 = arith.mulf %39, %38 : vector<8x8xf32>
    %41 = arith.subf %28, %40 : vector<8x8xf32>
    %42 = arith.truncf %41 : vector<8x8xf32> to vector<8x8xbf16>
    %cst_17 = arith.constant dense<0.000000e+00> : vector<8x16xf32>
    %43 = tpu.matmul %42, %16, %cst_17 {dimension_numbers = #tpu.dot_dimension_numbers<[1], [0], [0], [1], [0, 0, 1, 1], [], []>} : vector<8x8xbf16>, vector<8x16xbf16>, vector<8x16xf32> -> vector<8x16xf32>
    %44 = arith.mulf %43, %43 : vector<8x16xf32>
    %cst_18 = arith.constant dense<0.000000e+00> : vector<8xf32>
    %45 = vector.multi_reduction <add>, %44, %cst_18 [1] : vector<8x16xf32> to vector<8xf32>
    %46 = vector.shape_cast %45 : vector<8xf32> to vector<8x1xf32>
    %cst_19 = arith.constant 1.600000e+01 : f32
    %47 = vector.broadcast %cst_19 : f32 to vector<8x1xf32>
    %48 = arith.divf %46, %47 : vector<8x1xf32>
    %cst_20 = arith.constant 9.99999974E-6 : f32
    %49 = vector.broadcast %cst_20 : f32 to vector<8x1xf32>
    %50 = arith.addf %48, %49 : vector<8x1xf32>
    %51 = math.rsqrt %50 : vector<8x1xf32>
    %52 = vector.broadcast %51 : vector<8x1xf32> to vector<8x16xf32>
    %53 = arith.mulf %43, %52 : vector<8x16xf32>
    %54 = arith.truncf %53 : vector<8x16xf32> to vector<8x16xbf16>
    %c0_21 = arith.constant 0 : index
    %c0_22 = arith.constant 0 : index
    %55 = vector.load %arg8[%c0_21, %c0_22] : memref<64x64xbf16, #tpu.memory_space<vmem>>, vector<16x64xbf16>
    %cst_23 = arith.constant dense<0.000000e+00> : vector<8x64xf32>
    %56 = tpu.matmul %54, %55, %cst_23 {dimension_numbers = #tpu.dot_dimension_numbers<[1], [0], [0], [1], [0, 0, 1, 1], [], []>} : vector<8x16xbf16>, vector<16x64xbf16>, vector<8x64xf32> -> vector<8x64xf32>
    %57 = vector.extract_strided_slice %8 {offsets = [0, 16], sizes = [8, 8], strides = [1, 1]} : vector<8x64xbf16> to vector<8x8xbf16>
    %58 = vector.extract_strided_slice %8 {offsets = [0, 24], sizes = [8, 8], strides = [1, 1]} : vector<8x64xbf16> to vector<8x8xbf16>
    %59 = vector.extract_strided_slice %9 {offsets = [0, 16], sizes = [8, 8], strides = [1, 1]} : vector<8x64xbf16> to vector<8x8xbf16>
    %60 = vector.extract_strided_slice %9 {offsets = [0, 24], sizes = [8, 8], strides = [1, 1]} : vector<8x64xbf16> to vector<8x8xbf16>
    %61 = vector.extract_strided_slice %10 {offsets = [0, 16], sizes = [8, 16], strides = [1, 1]} : vector<8x64xbf16> to vector<8x16xbf16>
    %cst_24 = arith.constant dense<0.000000e+00> : vector<8x8xf32>
    %62 = tpu.matmul %57, %59, %cst_24 {dimension_numbers = #tpu.dot_dimension_numbers<[1], [1], [0], [0], [0, 0, 1, 0], [], []>} : vector<8x8xbf16>, vector<8x8xbf16>, vector<8x8xf32> -> vector<8x8xf32>
    %cst_25 = arith.constant dense<0.000000e+00> : vector<8x8xf32>
    %63 = tpu.matmul %58, %60, %cst_25 {dimension_numbers = #tpu.dot_dimension_numbers<[1], [1], [0], [0], [0, 0, 1, 0], [], []>} : vector<8x8xbf16>, vector<8x8xbf16>, vector<8x8xf32> -> vector<8x8xf32>
    %cst_26 = arith.constant dense<0xFF800000> : vector<8xf32>
    %64 = vector.multi_reduction <maximumf>, %62, %cst_26 [1] : vector<8x8xf32> to vector<8xf32>
    %65 = vector.shape_cast %64 : vector<8xf32> to vector<8x1xf32>
    %66 = vector.broadcast %65 : vector<8x1xf32> to vector<8x8xf32>
    %67 = arith.subf %62, %66 : vector<8x8xf32>
    %68 = math.exp %67 : vector<8x8xf32>
    %cst_27 = arith.constant dense<0.000000e+00> : vector<8xf32>
    %69 = vector.multi_reduction <add>, %68, %cst_27 [1] : vector<8x8xf32> to vector<8xf32>
    %70 = vector.shape_cast %69 : vector<8xf32> to vector<8x1xf32>
    %71 = tpu.reciprocal %70 {approx = true} : vector<8x1xf32> -> vector<8x1xf32>
    %72 = vector.broadcast %71 : vector<8x1xf32> to vector<8x8xf32>
    %73 = arith.mulf %68, %72 : vector<8x8xf32>
    %cst_28 = arith.constant dense<0xFF800000> : vector<8xf32>
    %74 = vector.multi_reduction <maximumf>, %63, %cst_28 [1] : vector<8x8xf32> to vector<8xf32>
    %75 = vector.shape_cast %74 : vector<8xf32> to vector<8x1xf32>
    %76 = vector.broadcast %75 : vector<8x1xf32> to vector<8x8xf32>
    %77 = arith.subf %63, %76 : vector<8x8xf32>
    %78 = math.exp %77 : vector<8x8xf32>
    %cst_29 = arith.constant dense<0.000000e+00> : vector<8xf32>
    %79 = vector.multi_reduction <add>, %78, %cst_29 [1] : vector<8x8xf32> to vector<8xf32>
    %80 = vector.shape_cast %79 : vector<8xf32> to vector<8x1xf32>
    %81 = tpu.reciprocal %80 {approx = true} : vector<8x1xf32> -> vector<8x1xf32>
    %82 = vector.broadcast %81 : vector<8x1xf32> to vector<8x8xf32>
    %83 = arith.mulf %78, %82 : vector<8x8xf32>
    %84 = vector.broadcast %11 : f32 to vector<8x8xf32>
    %85 = arith.mulf %84, %83 : vector<8x8xf32>
    %86 = arith.subf %73, %85 : vector<8x8xf32>
    %87 = arith.truncf %86 : vector<8x8xf32> to vector<8x8xbf16>
    %cst_30 = arith.constant dense<0.000000e+00> : vector<8x16xf32>
    %88 = tpu.matmul %87, %61, %cst_30 {dimension_numbers = #tpu.dot_dimension_numbers<[1], [0], [0], [1], [0, 0, 1, 1], [], []>} : vector<8x8xbf16>, vector<8x16xbf16>, vector<8x16xf32> -> vector<8x16xf32>
    %89 = arith.mulf %88, %88 : vector<8x16xf32>
    %cst_31 = arith.constant dense<0.000000e+00> : vector<8xf32>
    %90 = vector.multi_reduction <add>, %89, %cst_31 [1] : vector<8x16xf32> to vector<8xf32>
    %91 = vector.shape_cast %90 : vector<8xf32> to vector<8x1xf32>
    %cst_32 = arith.constant 1.600000e+01 : f32
    %92 = vector.broadcast %cst_32 : f32 to vector<8x1xf32>
    %93 = arith.divf %91, %92 : vector<8x1xf32>
    %cst_33 = arith.constant 9.99999974E-6 : f32
    %94 = vector.broadcast %cst_33 : f32 to vector<8x1xf32>
    %95 = arith.addf %93, %94 : vector<8x1xf32>
    %96 = math.rsqrt %95 : vector<8x1xf32>
    %97 = vector.broadcast %96 : vector<8x1xf32> to vector<8x16xf32>
    %98 = arith.mulf %88, %97 : vector<8x16xf32>
    %99 = arith.truncf %98 : vector<8x16xf32> to vector<8x16xbf16>
    %c16 = arith.constant 16 : index
    %c0_34 = arith.constant 0 : index
    %100 = vector.load %arg8[%c16, %c0_34] : memref<64x64xbf16, #tpu.memory_space<vmem>>, vector<16x64xbf16>
    %cst_35 = arith.constant dense<0.000000e+00> : vector<8x64xf32>
    %101 = tpu.matmul %99, %100, %cst_35 {dimension_numbers = #tpu.dot_dimension_numbers<[1], [0], [0], [1], [0, 0, 1, 1], [], []>} : vector<8x16xbf16>, vector<16x64xbf16>, vector<8x64xf32> -> vector<8x64xf32>
    %102 = arith.addf %56, %101 : vector<8x64xf32>
    %103 = vector.extract_strided_slice %8 {offsets = [0, 32], sizes = [8, 8], strides = [1, 1]} : vector<8x64xbf16> to vector<8x8xbf16>
    %104 = vector.extract_strided_slice %8 {offsets = [0, 40], sizes = [8, 8], strides = [1, 1]} : vector<8x64xbf16> to vector<8x8xbf16>
    %105 = vector.extract_strided_slice %9 {offsets = [0, 32], sizes = [8, 8], strides = [1, 1]} : vector<8x64xbf16> to vector<8x8xbf16>
    %106 = vector.extract_strided_slice %9 {offsets = [0, 40], sizes = [8, 8], strides = [1, 1]} : vector<8x64xbf16> to vector<8x8xbf16>
    %107 = vector.extract_strided_slice %10 {offsets = [0, 32], sizes = [8, 16], strides = [1, 1]} : vector<8x64xbf16> to vector<8x16xbf16>
    %cst_36 = arith.constant dense<0.000000e+00> : vector<8x8xf32>
    %108 = tpu.matmul %103, %105, %cst_36 {dimension_numbers = #tpu.dot_dimension_numbers<[1], [1], [0], [0], [0, 0, 1, 0], [], []>} : vector<8x8xbf16>, vector<8x8xbf16>, vector<8x8xf32> -> vector<8x8xf32>
    %cst_37 = arith.constant dense<0.000000e+00> : vector<8x8xf32>
    %109 = tpu.matmul %104, %106, %cst_37 {dimension_numbers = #tpu.dot_dimension_numbers<[1], [1], [0], [0], [0, 0, 1, 0], [], []>} : vector<8x8xbf16>, vector<8x8xbf16>, vector<8x8xf32> -> vector<8x8xf32>
    %cst_38 = arith.constant dense<0xFF800000> : vector<8xf32>
    %110 = vector.multi_reduction <maximumf>, %108, %cst_38 [1] : vector<8x8xf32> to vector<8xf32>
    %111 = vector.shape_cast %110 : vector<8xf32> to vector<8x1xf32>
    %112 = vector.broadcast %111 : vector<8x1xf32> to vector<8x8xf32>
    %113 = arith.subf %108, %112 : vector<8x8xf32>
    %114 = math.exp %113 : vector<8x8xf32>
    %cst_39 = arith.constant dense<0.000000e+00> : vector<8xf32>
    %115 = vector.multi_reduction <add>, %114, %cst_39 [1] : vector<8x8xf32> to vector<8xf32>
    %116 = vector.shape_cast %115 : vector<8xf32> to vector<8x1xf32>
    %117 = tpu.reciprocal %116 {approx = true} : vector<8x1xf32> -> vector<8x1xf32>
    %118 = vector.broadcast %117 : vector<8x1xf32> to vector<8x8xf32>
    %119 = arith.mulf %114, %118 : vector<8x8xf32>
    %cst_40 = arith.constant dense<0xFF800000> : vector<8xf32>
    %120 = vector.multi_reduction <maximumf>, %109, %cst_40 [1] : vector<8x8xf32> to vector<8xf32>
    %121 = vector.shape_cast %120 : vector<8xf32> to vector<8x1xf32>
    %122 = vector.broadcast %121 : vector<8x1xf32> to vector<8x8xf32>
    %123 = arith.subf %109, %122 : vector<8x8xf32>
    %124 = math.exp %123 : vector<8x8xf32>
    %cst_41 = arith.constant dense<0.000000e+00> : vector<8xf32>
    %125 = vector.multi_reduction <add>, %124, %cst_41 [1] : vector<8x8xf32> to vector<8xf32>
    %126 = vector.shape_cast %125 : vector<8xf32> to vector<8x1xf32>
    %127 = tpu.reciprocal %126 {approx = true} : vector<8x1xf32> -> vector<8x1xf32>
    %128 = vector.broadcast %127 : vector<8x1xf32> to vector<8x8xf32>
    %129 = arith.mulf %124, %128 : vector<8x8xf32>
    %130 = vector.broadcast %11 : f32 to vector<8x8xf32>
    %131 = arith.mulf %130, %129 : vector<8x8xf32>
    %132 = arith.subf %119, %131 : vector<8x8xf32>
    %133 = arith.truncf %132 : vector<8x8xf32> to vector<8x8xbf16>
    %cst_42 = arith.constant dense<0.000000e+00> : vector<8x16xf32>
    %134 = tpu.matmul %133, %107, %cst_42 {dimension_numbers = #tpu.dot_dimension_numbers<[1], [0], [0], [1], [0, 0, 1, 1], [], []>} : vector<8x8xbf16>, vector<8x16xbf16>, vector<8x16xf32> -> vector<8x16xf32>
    %135 = arith.mulf %134, %134 : vector<8x16xf32>
    %cst_43 = arith.constant dense<0.000000e+00> : vector<8xf32>
    %136 = vector.multi_reduction <add>, %135, %cst_43 [1] : vector<8x16xf32> to vector<8xf32>
    %137 = vector.shape_cast %136 : vector<8xf32> to vector<8x1xf32>
    %cst_44 = arith.constant 1.600000e+01 : f32
    %138 = vector.broadcast %cst_44 : f32 to vector<8x1xf32>
    %139 = arith.divf %137, %138 : vector<8x1xf32>
    %cst_45 = arith.constant 9.99999974E-6 : f32
    %140 = vector.broadcast %cst_45 : f32 to vector<8x1xf32>
    %141 = arith.addf %139, %140 : vector<8x1xf32>
    %142 = math.rsqrt %141 : vector<8x1xf32>
    %143 = vector.broadcast %142 : vector<8x1xf32> to vector<8x16xf32>
    %144 = arith.mulf %134, %143 : vector<8x16xf32>
    %145 = arith.truncf %144 : vector<8x16xf32> to vector<8x16xbf16>
    %c32 = arith.constant 32 : index
    %c0_46 = arith.constant 0 : index
    %146 = vector.load %arg8[%c32, %c0_46] : memref<64x64xbf16, #tpu.memory_space<vmem>>, vector<16x64xbf16>
    %cst_47 = arith.constant dense<0.000000e+00> : vector<8x64xf32>
    %147 = tpu.matmul %145, %146, %cst_47 {dimension_numbers = #tpu.dot_dimension_numbers<[1], [0], [0], [1], [0, 0, 1, 1], [], []>} : vector<8x16xbf16>, vector<16x64xbf16>, vector<8x64xf32> -> vector<8x64xf32>
    %148 = arith.addf %102, %147 : vector<8x64xf32>
    %149 = vector.extract_strided_slice %8 {offsets = [0, 48], sizes = [8, 8], strides = [1, 1]} : vector<8x64xbf16> to vector<8x8xbf16>
    %150 = vector.extract_strided_slice %8 {offsets = [0, 56], sizes = [8, 8], strides = [1, 1]} : vector<8x64xbf16> to vector<8x8xbf16>
    %151 = vector.extract_strided_slice %9 {offsets = [0, 48], sizes = [8, 8], strides = [1, 1]} : vector<8x64xbf16> to vector<8x8xbf16>
    %152 = vector.extract_strided_slice %9 {offsets = [0, 56], sizes = [8, 8], strides = [1, 1]} : vector<8x64xbf16> to vector<8x8xbf16>
    %153 = vector.extract_strided_slice %10 {offsets = [0, 48], sizes = [8, 16], strides = [1, 1]} : vector<8x64xbf16> to vector<8x16xbf16>
    %cst_48 = arith.constant dense<0.000000e+00> : vector<8x8xf32>
    %154 = tpu.matmul %149, %151, %cst_48 {dimension_numbers = #tpu.dot_dimension_numbers<[1], [1], [0], [0], [0, 0, 1, 0], [], []>} : vector<8x8xbf16>, vector<8x8xbf16>, vector<8x8xf32> -> vector<8x8xf32>
    %cst_49 = arith.constant dense<0.000000e+00> : vector<8x8xf32>
    %155 = tpu.matmul %150, %152, %cst_49 {dimension_numbers = #tpu.dot_dimension_numbers<[1], [1], [0], [0], [0, 0, 1, 0], [], []>} : vector<8x8xbf16>, vector<8x8xbf16>, vector<8x8xf32> -> vector<8x8xf32>
    %cst_50 = arith.constant dense<0xFF800000> : vector<8xf32>
    %156 = vector.multi_reduction <maximumf>, %154, %cst_50 [1] : vector<8x8xf32> to vector<8xf32>
    %157 = vector.shape_cast %156 : vector<8xf32> to vector<8x1xf32>
    %158 = vector.broadcast %157 : vector<8x1xf32> to vector<8x8xf32>
    %159 = arith.subf %154, %158 : vector<8x8xf32>
    %160 = math.exp %159 : vector<8x8xf32>
    %cst_51 = arith.constant dense<0.000000e+00> : vector<8xf32>
    %161 = vector.multi_reduction <add>, %160, %cst_51 [1] : vector<8x8xf32> to vector<8xf32>
    %162 = vector.shape_cast %161 : vector<8xf32> to vector<8x1xf32>
    %163 = tpu.reciprocal %162 {approx = true} : vector<8x1xf32> -> vector<8x1xf32>
    %164 = vector.broadcast %163 : vector<8x1xf32> to vector<8x8xf32>
    %165 = arith.mulf %160, %164 : vector<8x8xf32>
    %cst_52 = arith.constant dense<0xFF800000> : vector<8xf32>
    %166 = vector.multi_reduction <maximumf>, %155, %cst_52 [1] : vector<8x8xf32> to vector<8xf32>
    %167 = vector.shape_cast %166 : vector<8xf32> to vector<8x1xf32>
    %168 = vector.broadcast %167 : vector<8x1xf32> to vector<8x8xf32>
    %169 = arith.subf %155, %168 : vector<8x8xf32>
    %170 = math.exp %169 : vector<8x8xf32>
    %cst_53 = arith.constant dense<0.000000e+00> : vector<8xf32>
    %171 = vector.multi_reduction <add>, %170, %cst_53 [1] : vector<8x8xf32> to vector<8xf32>
    %172 = vector.shape_cast %171 : vector<8xf32> to vector<8x1xf32>
    %173 = tpu.reciprocal %172 {approx = true} : vector<8x1xf32> -> vector<8x1xf32>
    %174 = vector.broadcast %173 : vector<8x1xf32> to vector<8x8xf32>
    %175 = arith.mulf %170, %174 : vector<8x8xf32>
    %176 = vector.broadcast %11 : f32 to vector<8x8xf32>
    %177 = arith.mulf %176, %175 : vector<8x8xf32>
    %178 = arith.subf %165, %177 : vector<8x8xf32>
    %179 = arith.truncf %178 : vector<8x8xf32> to vector<8x8xbf16>
    %cst_54 = arith.constant dense<0.000000e+00> : vector<8x16xf32>
    %180 = tpu.matmul %179, %153, %cst_54 {dimension_numbers = #tpu.dot_dimension_numbers<[1], [0], [0], [1], [0, 0, 1, 1], [], []>} : vector<8x8xbf16>, vector<8x16xbf16>, vector<8x16xf32> -> vector<8x16xf32>
    %181 = arith.mulf %180, %180 : vector<8x16xf32>
    %cst_55 = arith.constant dense<0.000000e+00> : vector<8xf32>
    %182 = vector.multi_reduction <add>, %181, %cst_55 [1] : vector<8x16xf32> to vector<8xf32>
    %183 = vector.shape_cast %182 : vector<8xf32> to vector<8x1xf32>
    %cst_56 = arith.constant 1.600000e+01 : f32
    %184 = vector.broadcast %cst_56 : f32 to vector<8x1xf32>
    %185 = arith.divf %183, %184 : vector<8x1xf32>
    %cst_57 = arith.constant 9.99999974E-6 : f32
    %186 = vector.broadcast %cst_57 : f32 to vector<8x1xf32>
    %187 = arith.addf %185, %186 : vector<8x1xf32>
    %188 = math.rsqrt %187 : vector<8x1xf32>
    %189 = vector.broadcast %188 : vector<8x1xf32> to vector<8x16xf32>
    %190 = arith.mulf %180, %189 : vector<8x16xf32>
    %191 = arith.truncf %190 : vector<8x16xf32> to vector<8x16xbf16>
    %c48 = arith.constant 48 : index
    %c0_58 = arith.constant 0 : index
    %192 = vector.load %arg8[%c48, %c0_58] : memref<64x64xbf16, #tpu.memory_space<vmem>>, vector<16x64xbf16>
    %cst_59 = arith.constant dense<0.000000e+00> : vector<8x64xf32>
    %193 = tpu.matmul %191, %192, %cst_59 {dimension_numbers = #tpu.dot_dimension_numbers<[1], [0], [0], [1], [0, 0, 1, 1], [], []>} : vector<8x16xbf16>, vector<16x64xbf16>, vector<8x64xf32> -> vector<8x64xf32>
    %194 = arith.addf %148, %193 : vector<8x64xf32>
    %195 = arith.addf %4, %194 : vector<8x64xf32>
    %cst_60 = arith.constant dense<0.000000e+00> : vector<8xf32>
    %196 = vector.multi_reduction <add>, %195, %cst_60 [1] : vector<8x64xf32> to vector<8xf32>
    %197 = vector.shape_cast %196 : vector<8xf32> to vector<8x1xf32>
    %cst_61 = arith.constant 6.400000e+01 : f32
    %198 = vector.broadcast %cst_61 : f32 to vector<8x1xf32>
    %199 = arith.divf %197, %198 : vector<8x1xf32>
    %200 = vector.broadcast %199 : vector<8x1xf32> to vector<8x64xf32>
    %201 = arith.subf %195, %200 : vector<8x64xf32>
    %202 = vector.broadcast %199 : vector<8x1xf32> to vector<8x64xf32>
    %203 = arith.subf %195, %202 : vector<8x64xf32>
    %204 = arith.mulf %201, %203 : vector<8x64xf32>
    %cst_62 = arith.constant dense<0.000000e+00> : vector<8xf32>
    %205 = vector.multi_reduction <add>, %204, %cst_62 [1] : vector<8x64xf32> to vector<8xf32>
    %206 = vector.shape_cast %205 : vector<8xf32> to vector<8x1xf32>
    %cst_63 = arith.constant 6.400000e+01 : f32
    %207 = vector.broadcast %cst_63 : f32 to vector<8x1xf32>
    %208 = arith.divf %206, %207 : vector<8x1xf32>
    %209 = vector.broadcast %199 : vector<8x1xf32> to vector<8x64xf32>
    %210 = arith.subf %195, %209 : vector<8x64xf32>
    %cst_64 = arith.constant 9.99999974E-6 : f32
    %211 = vector.broadcast %cst_64 : f32 to vector<8x1xf32>
    %212 = arith.addf %208, %211 : vector<8x1xf32>
    %213 = math.rsqrt %212 : vector<8x1xf32>
    %214 = vector.broadcast %213 : vector<8x1xf32> to vector<8x64xf32>
    %215 = arith.mulf %210, %214 : vector<8x64xf32>
    %c0_65 = arith.constant 0 : index
    %c0_66 = arith.constant 0 : index
    %216 = vector.load %arg13[%c0_65, %c0_66] : memref<1x64xf32, #tpu.memory_space<vmem>>, vector<1x64xf32>
    %217 = vector.broadcast %216 : vector<1x64xf32> to vector<8x64xf32>
    %218 = arith.mulf %215, %217 : vector<8x64xf32>
    %c0_67 = arith.constant 0 : index
    %c0_68 = arith.constant 0 : index
    %219 = vector.load %arg14[%c0_67, %c0_68] : memref<1x64xf32, #tpu.memory_space<vmem>>, vector<1x64xf32>
    %220 = vector.broadcast %219 : vector<1x64xf32> to vector<8x64xf32>
    %221 = arith.addf %218, %220 : vector<8x64xf32>
    %222 = arith.truncf %221 : vector<8x64xf32> to vector<8x64xbf16>
    %c0_69 = arith.constant 0 : index
    %c0_70 = arith.constant 0 : index
    %223 = vector.load %arg9[%c0_69, %c0_70] : memref<64x128xbf16, #tpu.memory_space<vmem>>, vector<64x128xbf16>
    %cst_71 = arith.constant dense<0.000000e+00> : vector<8x128xf32>
    %224 = tpu.matmul %222, %223, %cst_71 {dimension_numbers = #tpu.dot_dimension_numbers<[1], [0], [0], [1], [0, 0, 1, 1], [], []>} : vector<8x64xbf16>, vector<64x128xbf16>, vector<8x128xf32> -> vector<8x128xf32>
    %c0_72 = arith.constant 0 : index
    %c0_73 = arith.constant 0 : index
    %225 = vector.load %arg10[%c0_72, %c0_73] : memref<1x128xf32, #tpu.memory_space<vmem>>, vector<1x128xf32>
    %226 = vector.broadcast %225 : vector<1x128xf32> to vector<8x128xf32>
    %227 = arith.addf %224, %226 : vector<8x128xf32>
    %cst_74 = arith.constant 0.000000e+00 : f32
    %228 = vector.broadcast %cst_74 : f32 to vector<8x128xf32>
    %229 = arith.maximumf %227, %228 : vector<8x128xf32>
    %230 = arith.truncf %229 : vector<8x128xf32> to vector<8x128xbf16>
    %c0_75 = arith.constant 0 : index
    %c0_76 = arith.constant 0 : index
    %231 = vector.load %arg11[%c0_75, %c0_76] : memref<128x64xbf16, #tpu.memory_space<vmem>>, vector<128x64xbf16>
    %cst_77 = arith.constant dense<0.000000e+00> : vector<8x64xf32>
    %232 = tpu.matmul %230, %231, %cst_77 {dimension_numbers = #tpu.dot_dimension_numbers<[1], [0], [0], [1], [0, 0, 1, 1], [], []>} : vector<8x128xbf16>, vector<128x64xbf16>, vector<8x64xf32> -> vector<8x64xf32>
    %c0_78 = arith.constant 0 : index
    %c0_79 = arith.constant 0 : index
    %233 = vector.load %arg12[%c0_78, %c0_79] : memref<1x64xf32, #tpu.memory_space<vmem>>, vector<1x64xf32>
    %234 = vector.broadcast %233 : vector<1x64xf32> to vector<8x64xf32>
    %235 = arith.addf %232, %234 : vector<8x64xf32>
    %236 = arith.addf %221, %235 : vector<8x64xf32>
    %cst_80 = arith.constant dense<0.000000e+00> : vector<8xf32>
    %237 = vector.multi_reduction <add>, %236, %cst_80 [1] : vector<8x64xf32> to vector<8xf32>
    %238 = vector.shape_cast %237 : vector<8xf32> to vector<8x1xf32>
    %cst_81 = arith.constant 6.400000e+01 : f32
    %239 = vector.broadcast %cst_81 : f32 to vector<8x1xf32>
    %240 = arith.divf %238, %239 : vector<8x1xf32>
    %241 = vector.broadcast %240 : vector<8x1xf32> to vector<8x64xf32>
    %242 = arith.subf %236, %241 : vector<8x64xf32>
    %243 = vector.broadcast %240 : vector<8x1xf32> to vector<8x64xf32>
    %244 = arith.subf %236, %243 : vector<8x64xf32>
    %245 = arith.mulf %242, %244 : vector<8x64xf32>
    %cst_82 = arith.constant dense<0.000000e+00> : vector<8xf32>
    %246 = vector.multi_reduction <add>, %245, %cst_82 [1] : vector<8x64xf32> to vector<8xf32>
    %247 = vector.shape_cast %246 : vector<8xf32> to vector<8x1xf32>
    %cst_83 = arith.constant 6.400000e+01 : f32
    %248 = vector.broadcast %cst_83 : f32 to vector<8x1xf32>
    %249 = arith.divf %247, %248 : vector<8x1xf32>
    %250 = vector.broadcast %240 : vector<8x1xf32> to vector<8x64xf32>
    %251 = arith.subf %236, %250 : vector<8x64xf32>
    %cst_84 = arith.constant 9.99999974E-6 : f32
    %252 = vector.broadcast %cst_84 : f32 to vector<8x1xf32>
    %253 = arith.addf %249, %252 : vector<8x1xf32>
    %254 = math.rsqrt %253 : vector<8x1xf32>
    %255 = vector.broadcast %254 : vector<8x1xf32> to vector<8x64xf32>
    %256 = arith.mulf %251, %255 : vector<8x64xf32>
    %c0_85 = arith.constant 0 : index
    %c0_86 = arith.constant 0 : index
    %257 = vector.load %arg15[%c0_85, %c0_86] : memref<1x64xf32, #tpu.memory_space<vmem>>, vector<1x64xf32>
    %258 = vector.broadcast %257 : vector<1x64xf32> to vector<8x64xf32>
    %259 = arith.mulf %256, %258 : vector<8x64xf32>
    %c0_87 = arith.constant 0 : index
    %c0_88 = arith.constant 0 : index
    %260 = vector.load %arg16[%c0_87, %c0_88] : memref<1x64xf32, #tpu.memory_space<vmem>>, vector<1x64xf32>
    %261 = vector.broadcast %260 : vector<1x64xf32> to vector<8x64xf32>
    %262 = arith.addf %259, %261 : vector<8x64xf32>
    %c0_89 = arith.constant 0 : index
    %c0_90 = arith.constant 0 : index
    %c0_91 = arith.constant 0 : index
    %263 = vector.load %arg17[%c0_89, %c0_90, %c0_91] : memref<1x8x64xf32, #tpu.memory_space<vmem>>, vector<1x8x64xf32>
    %264 = vector.shape_cast %263 : vector<1x8x64xf32> to vector<8x64xf32>
    %265 = vector.shape_cast %262 : vector<8x64xf32> to vector<1x8x64xf32>
    tpu.vector_store %arg17[%c0_89, %c0_90, %c0_91], %265 {strides = array<i32>} : memref<1x8x64xf32, #tpu.memory_space<vmem>>, vector<1x8x64xf32>,
    return
  }
  func.func @transform_0(%arg0: i32, %arg1: i32) -> (i32, i32) {
    %c0_i32 = arith.constant 0 : i32
    %c0_i32_0 = arith.constant 0 : i32
    %c0_i32_1 = arith.constant 0 : i32
    return %c0_i32, %c0_i32_0 : i32, i32
  }
  func.func @transform_1(%arg0: i32, %arg1: i32) -> (i32, i32, i32) {
    %c0_i32 = arith.constant 0 : i32
    %c0_i32_0 = arith.constant 0 : i32
    return %arg0, %arg1, %c0_i32 : i32, i32, i32
  }
  func.func @transform_2(%arg0: i32, %arg1: i32) -> (i32, i32, i32) {
    %c0_i32 = arith.constant 0 : i32
    %c0_i32_0 = arith.constant 0 : i32
    %c0_i32_1 = arith.constant 0 : i32
    return %arg0, %c0_i32, %c0_i32_0 : i32, i32, i32
  }
  func.func @transform_3(%arg0: i32, %arg1: i32) -> (i32, i32) {
    %c0_i32 = arith.constant 0 : i32
    %c0_i32_0 = arith.constant 0 : i32
    %c0_i32_1 = arith.constant 0 : i32
    return %c0_i32, %c0_i32_0 : i32, i32
  }
  func.func @transform_4(%arg0: i32, %arg1: i32) -> (i32, i32) {
    %c0_i32 = arith.constant 0 : i32
    %c0_i32_0 = arith.constant 0 : i32
    %c0_i32_1 = arith.constant 0 : i32
    return %c0_i32, %c0_i32_0 : i32, i32
  }
  func.func @transform_5(%arg0: i32, %arg1: i32) -> (i32, i32) {
    %c0_i32 = arith.constant 0 : i32
    %c0_i32_0 = arith.constant 0 : i32
    %c0_i32_1 = arith.constant 0 : i32
    return %c0_i32, %c0_i32_0 : i32, i32
  }
  func.func @transform_6(%arg0: i32, %arg1: i32) -> (i32, i32) {
    %c0_i32 = arith.constant 0 : i32
    %c0_i32_0 = arith.constant 0 : i32
    %c0_i32_1 = arith.constant 0 : i32
    return %c0_i32, %c0_i32_0 : i32, i32
  }
  func.func @transform_7(%arg0: i32, %arg1: i32) -> (i32, i32) {
    %c0_i32 = arith.constant 0 : i32
    %c0_i32_0 = arith.constant 0 : i32
    %c0_i32_1 = arith.constant 0 : i32
    return %c0_i32, %c0_i32_0 : i32, i32
  }
  func.func @transform_8(%arg0: i32, %arg1: i32) -> (i32, i32) {
    %c0_i32 = arith.constant 0 : i32
    %c0_i32_0 = arith.constant 0 : i32
    %c0_i32_1 = arith.constant 0 : i32
    return %c0_i32, %c0_i32_0 : i32, i32
  }
  func.func @transform_9(%arg0: i32, %arg1: i32) -> (i32, i32) {
    %c0_i32 = arith.constant 0 : i32
    %c0_i32_0 = arith.constant 0 : i32
    %c0_i32_1 = arith.constant 0 : i32
    return %c0_i32, %c0_i32_0 : i32, i32
  }
  func.func @transform_10(%arg0: i32, %arg1: i32) -> (i32, i32) {
    %c0_i32 = arith.constant 0 : i32
    %c0_i32_0 = arith.constant 0 : i32
    %c0_i32_1 = arith.constant 0 : i32
    return %c0_i32, %c0_i32_0 : i32, i32
  }
  func.func @transform_11(%arg0: i32, %arg1: i32) -> (i32, i32) {
    %c0_i32 = arith.constant 0 : i32
    %c0_i32_0 = arith.constant 0 : i32
    %c0_i32_1 = arith.constant 0 : i32
    return %c0_i32, %c0_i32_0 : i32, i32
  }
  func.func @transform_12(%arg0: i32, %arg1: i32) -> (i32, i32) {
    %c0_i32 = arith.constant 0 : i32
    %c0_i32_0 = arith.constant 0 : i32
    %c0_i32_1 = arith.constant 0 : i32
    return %c0_i32, %c0_i32_0 : i32, i32
  }
  func.func @transform_13(%arg0: i32, %arg1: i32) -> (i32, i32) {
    %c0_i32 = arith.constant 0 : i32
    %c0_i32_0 = arith.constant 0 : i32
    %c0_i32_1 = arith.constant 0 : i32
    return %c0_i32, %c0_i32_0 : i32, i32
  }
  func.func @transform_14(%arg0: i32, %arg1: i32) -> (i32, i32) {
    %c0_i32 = arith.constant 0 : i32
    %c0_i32_0 = arith.constant 0 : i32
    %c0_i32_1 = arith.constant 0 : i32
    return %c0_i32, %c0_i32_0 : i32, i32
  }
  func.func @transform_15(%arg0: i32, %arg1: i32) -> (i32, i32, i32) {
    %c0_i32 = arith.constant 0 : i32
    %c0_i32_0 = arith.constant 0 : i32
    return %arg0, %arg1, %c0_i32 : i32, i32, i32
  }
}

</mosaic_0001>

<llo_original>
// kernel: tpu_custom_call.1
$region0: #{tpu_custom_call.1}
  #allocation0 [shape = 'u32[]', space=smem, size = 0x4, offset = 0x4, fixed_abs, tag = 'smem constant byte address 0x4 - core index']
  #allocation1 [shape = 'u32[72,128]{1,0:T(1,128)}', space=vmem, size = 0x9000, scoped, tag = 'internal scratch']
  #allocation2 [shape = 'bf16[8,64]{1,0:T(8,128)(2,1)}', space=vmem, size = 0x800, scoped, tag = 'scratch operand']
  #allocation3 [shape = 'bf16[8,64]{1,0:T(8,128)(2,1)}', space=vmem, size = 0x800, scoped, tag = 'scratch operand']
  #allocation4 [shape = 'f32[1,1]{1,0:T(1,128)S(6)}', space=smem, size = 0x200, scoped, tag = 'scoped memory for tpu_custom_call.1']
  %s0 = inlined_call_operand.<no memory space> [shape: f32[1,1], index: 0, kind: input, shape index: {}]
  %s1 = inlined_call_operand.hbm [shape: f32[2,8,64], index: 1, kind: input, shape index: {}]
  %s2 = inlined_call_operand.hbm [shape: bf16[2,8,64], index: 2, kind: input, shape index: {}]
  %s3 = inlined_call_operand.vmem [shape: bf16[64,64], index: 3, kind: input, shape index: {}]
  %s4 = inlined_call_operand.vmem [shape: bf16[64,64], index: 4, kind: input, shape index: {}]
  %s5 = inlined_call_operand.vmem [shape: bf16[64,64], index: 5, kind: input, shape index: {}]
  %s6 = inlined_call_operand.hbm [shape: bf16[64,64], index: 6, kind: input, shape index: {}]
  %s7 = inlined_call_operand.hbm [shape: bf16[64,128], index: 7, kind: input, shape index: {}]
  %s8 = inlined_call_operand.vmem [shape: f32[1,128], index: 8, kind: input, shape index: {}]
  %s9 = inlined_call_operand.vmem [shape: bf16[128,64], index: 9, kind: input, shape index: {}]
  %s10 = inlined_call_operand.vmem [shape: f32[1,64], index: 10, kind: input, shape index: {}]
  %s11 = inlined_call_operand.vmem [shape: f32[1,64], index: 11, kind: input, shape index: {}]
  %s12 = inlined_call_operand.vmem [shape: f32[1,64], index: 12, kind: input, shape index: {}]
  %s13 = inlined_call_operand.vmem [shape: f32[1,64], index: 13, kind: input, shape index: {}]
  %s14 = inlined_call_operand.vmem [shape: f32[1,64], index: 14, kind: input, shape index: {}]
  %s15 = inlined_call_operand.hbm [shape: f32[2,8,64], index: 15, kind: output, shape index: {}]
  %s16 = sld [smem:[#allocation0]]
  $region113: #{tpu_custom_call.1} parent=0
    _
  %s18 = ssub.s32 1, %s16
  %s19 = scalar_select 0, %s18, %s16
  %20 = sst [smem:[#allocation4]] %s0
  $region1: #{tpu_custom_call.1} parent=0
    #allocation5 [shape = 'u8[8192]{0}', space=vmem, size = 0x2000, scoped, tag = 'input window, operand 1']
    #allocation6 [shape = 's32[2]{0}', space=sflag, size = 0x8, scoped, tag = 'scoped memory for tpu_custom_call.1']
    #allocation7 [shape = 's32[2]{0}', space=sflag, size = 0x8, scoped, tag = 'scoped memory for tpu_custom_call.1']
    #allocation8 [shape = 'u8[2048]{0}', space=vmem, size = 0x800, scoped, tag = 'input window, operand 2, single buffered']
    #allocation9 [shape = 's32[1]{0}', space=sflag, size = 0x4, scoped, tag = 'scoped memory for tpu_custom_call.1']
    #allocation10 [shape = 'u8[16384]{0}', space=vmem, size = 0x4000, scoped, tag = 'input window, operand 6, single buffered']
    #allocation11 [shape = 'u8[16384]{0}', space=vmem, size = 0x4000, scoped, tag = 'input window, operand 7, single buffered']
    #allocation12 [shape = 's32[1]{0}', space=sflag, size = 0x4, scoped, tag = 'scoped memory for tpu_custom_call.1']
    #allocation13 [shape = 'u8[8192]{0}', space=vmem, size = 0x2000, scoped, tag = 'output window, operand 0']
    %21 = vsyncpa [#allocation6], 0
    %s22 = scalar_lea.sflag [#allocation6], 1
    %23 = vsyncpa %s22, 0
    %24 = vsyncpa [#allocation9], 0
    %25 = vsyncpa [#allocation12], 0
    %26 = vsyncpa [#allocation7], 0
    %s27 = scalar_lea.sflag [#allocation7], 1
    %28 = vsyncpa %s27, 0
    loop: start=0, step=1, limit=4
    $region2: #{tpu_custom_call.1} parent=1 // loop_pre_header
      _
    $region3: #{tpu_custom_call.1} parent=1 // loop_header
      %s30 = sphi 0, %s34
      %p31 = scmp.ge.s32.totalorder %s30, 4
      %s37 = sphi 0, %s49
      %s38 = sphi 0, %s45
      %s39 = sphi 0, %s37
      %s40 = sphi 0, %s38
      %s41 = sphi 0, %s39
      %s42 = sphi 0, %s40
      %s50 = sphi 0, %s50
      %s52 = sphi 0, %s50
      %s53 = sphi 0, %s52
      %s67 = sphi 0, %s53
      %s75 = sphi 0, %s77
      %s78 = sphi 0, %s75
      %s79 = sphi 0, %s78
      %s95 = sphi 0, %s79
      %s101 = sphi 0, %s103
      %s104 = sphi 0, %s101
      %s105 = sphi 0, %s104
      %s121 = sphi 0, %s105
      %s125 = sphi 0, %s125
      %s127 = sphi 0, %s125
      %s128 = sphi 0, %s127
      %s142 = sphi 0, %s128
      %s146 = sphi 0, %s146
      %s148 = sphi 0, %s146
      %s149 = sphi 0, %s148
      %s163 = sphi 0, %s149
      %s167 = sphi 0, %s167
      %s169 = sphi 0, %s167
      %s170 = sphi 0, %s169
      %s184 = sphi 0, %s170
      %s188 = sphi 0, %s188
      %s190 = sphi 0, %s188
      %s191 = sphi 0, %s190
      %s205 = sphi 0, %s191
      %s209 = sphi 0, %s209
      %s211 = sphi 0, %s209
      %s212 = sphi 0, %s211
      %s226 = sphi 0, %s212
      %s230 = sphi 0, %s230
      %s232 = sphi 0, %s230
      %s233 = sphi 0, %s232
      %s247 = sphi 0, %s233
      %s251 = sphi 0, %s251
      %s253 = sphi 0, %s251
      %s254 = sphi 0, %s253
      %s268 = sphi 0, %s254
      %s272 = sphi 0, %s272
      %s274 = sphi 0, %s272
      %s275 = sphi 0, %s274
      %s289 = sphi 0, %s275
      %s293 = sphi 0, %s293
      %s295 = sphi 0, %s293
      %s296 = sphi 0, %s295
      %s310 = sphi 0, %s296
      %s314 = sphi 0, %s314
      %s316 = sphi 0, %s314
      %s317 = sphi 0, %s316
      %s331 = sphi 0, %s317
      %s335 = sphi 0, %s335
      %s337 = sphi 0, %s335
      %s338 = sphi 0, %s337
      %s352 = sphi 0, %s338
      %s356 = sphi 0, %s356
      %s358 = sphi 0, %s356
      %s359 = sphi 0, %s358
      %s373 = sphi 0, %s359
      %s381 = sphi 0, %s383
      %s384 = sphi 0, %s381
      %s385 = sphi 0, %s384
      %s401 = sphi 0, %s385
    $region4: #{tpu_custom_call.1} parent=1 // loop_header_branch
      %33 = sbr.rel (%p31) target = $region8
    $region5: #{tpu_custom_call.1} parent=1 // loop_body
      %s35 = ssub.s32 %s30, 1
      %s36 = ssub.s32 %s30, 2
      %s43 = sadd.s32 1, %s38
      %p44 = scmp.ge.s32.totalorder %s43, 1
      %s45 = scalar_select %p44, 0, %s43
      %s46 = sadd.s32 1, %s37
      %s47 = scalar_select %p44, %s46, %s37
      %p48 = scmp.ge.s32.totalorder %s47, 2
      %s49 = scalar_select %p48, 0, %s47
      %s51 = sadd.s32 %s50, 1
      %p54 = scmp.eq.s32.totalorder %s30, 1
      %p55 = scmp.ne.s32.totalorder %s50, %s52
      %p56 = scmp.eq.s32.totalorder %s30, 0
      %p57 = por %p55, %p56
      %p58 = scmp.ne.s32.totalorder %s50, %s52
      %p59 = scmp.eq.s32.totalorder %s35, 1
      %p60 = por %p58, %p59
      %p61 = scmp.ne.s32.totalorder %s52, %s53
      %p62 = scmp.eq.s32.totalorder %s35, 0
      %p63 = por %p61, %p62
      %p64 = scmp.ne.s32.totalorder %s52, %s53
      %p65 = scmp.eq.s32.totalorder %s36, 1
      %p66 = por %p64, %p65
      %p68 = scmp.ne.s32.totalorder %s53, %s67
      %p69 = scmp.eq.s32.totalorder %s36, 0
      %p70 = por %p68, %p69
      %s71 = ssub.s32 %s37, %s49
      %s72 = ssub.s32 %s38, %s45
      %s73 = sor.u32 %s71, %s72
      %p74 = scmp.eq.s32.totalorder %s73, 0
      %s76 = sadd.s32 %s75, 1
      %s77 = scalar_select %p74, %s75, %s76
      %p80 = pneg %p74
      %p81 = scmp.eq.s32.totalorder %s30, 1
      %p82 = por %p80, %p81
      %p83 = scmp.ne.s32.totalorder %s75, %s78
      %p84 = scmp.eq.s32.totalorder %s30, 0
      %p85 = por %p83, %p84
      %p86 = scmp.ne.s32.totalorder %s75, %s78
      %p87 = scmp.eq.s32.totalorder %s35, 1
      %p88 = por %p86, %p87
      %p89 = scmp.ne.s32.totalorder %s78, %s79
      %p90 = scmp.eq.s32.totalorder %s35, 0
      %p91 = por %p89, %p90
      %p92 = scmp.ne.s32.totalorder %s78, %s79
      %p93 = scmp.eq.s32.totalorder %s36, 1
      %p94 = por %p92, %p93
      %p96 = scmp.ne.s32.totalorder %s79, %s95
      %p97 = scmp.eq.s32.totalorder %s36, 0
      %p98 = por %p96, %p97
      %s99 = ssub.s32 %s37, %s49
      %p100 = scmp.eq.s32.totalorder %s99, 0
      %s102 = sadd.s32 %s101, 1
      %s103 = scalar_select %p100, %s101, %s102
      %p106 = pneg %p100
      %p107 = scmp.eq.s32.totalorder %s30, 1
      %p108 = por %p106, %p107
      %p109 = scmp.ne.s32.totalorder %s101, %s104
      %p110 = scmp.eq.s32.totalorder %s30, 0
      %p111 = por %p109, %p110
      %p112 = scmp.ne.s32.totalorder %s101, %s104
      %p113 = scmp.eq.s32.totalorder %s35, 1
      %p114 = por %p112, %p113
      %p115 = scmp.ne.s32.totalorder %s104, %s105
      %p116 = scmp.eq.s32.totalorder %s35, 0
      %p117 = por %p115, %p116
      %p118 = scmp.ne.s32.totalorder %s104, %s105
      %p119 = scmp.eq.s32.totalorder %s36, 1
      %p120 = por %p118, %p119
      %p122 = scmp.ne.s32.totalorder %s105, %s121
      %p123 = scmp.eq.s32.totalorder %s36, 0
      %p124 = por %p122, %p123
      %s126 = sadd.s32 %s125, 1
      %p129 = scmp.eq.s32.totalorder %s30, 1
      %p130 = scmp.ne.s32.totalorder %s125, %s127
      %p131 = scmp.eq.s32.totalorder %s30, 0
      %p132 = por %p130, %p131
      %p133 = scmp.ne.s32.totalorder %s125, %s127
      %p134 = scmp.eq.s32.totalorder %s35, 1
      %p135 = por %p133, %p134
      %p136 = scmp.ne.s32.totalorder %s127, %s128
      %p137 = scmp.eq.s32.totalorder %s35, 0
      %p138 = por %p136, %p137
      %p139 = scmp.ne.s32.totalorder %s127, %s128
      %p140 = scmp.eq.s32.totalorder %s36, 1
      %p141 = por %p139, %p140
      %p143 = scmp.ne.s32.totalorder %s128, %s142
      %p144 = scmp.eq.s32.totalorder %s36, 0
      %p145 = por %p143, %p144
      %s147 = sadd.s32 %s146, 1
      %p150 = scmp.eq.s32.totalorder %s30, 1
      %p151 = scmp.ne.s32.totalorder %s146, %s148
      %p152 = scmp.eq.s32.totalorder %s30, 0
      %p153 = por %p151, %p152
      %p154 = scmp.ne.s32.totalorder %s146, %s148
      %p155 = scmp.eq.s32.totalorder %s35, 1
      %p156 = por %p154, %p155
      %p157 = scmp.ne.s32.totalorder %s148, %s149
      %p158 = scmp.eq.s32.totalorder %s35, 0
      %p159 = por %p157, %p158
      %p160 = scmp.ne.s32.totalorder %s148, %s149
      %p161 = scmp.eq.s32.totalorder %s36, 1
      %p162 = por %p160, %p161
      %p164 = scmp.ne.s32.totalorder %s149, %s163
      %p165 = scmp.eq.s32.totalorder %s36, 0
      %p166 = por %p164, %p165
      %s168 = sadd.s32 %s167, 1
      %p171 = scmp.eq.s32.totalorder %s30, 1
      %p172 = scmp.ne.s32.totalorder %s167, %s169
      %p173 = scmp.eq.s32.totalorder %s30, 0
      %p174 = por %p172, %p173
      %p175 = scmp.ne.s32.totalorder %s167, %s169
      %p176 = scmp.eq.s32.totalorder %s35, 1
      %p177 = por %p175, %p176
      %p178 = scmp.ne.s32.totalorder %s169, %s170
      %p179 = scmp.eq.s32.totalorder %s35, 0
      %p180 = por %p178, %p179
      %p181 = scmp.ne.s32.totalorder %s169, %s170
      %p182 = scmp.eq.s32.totalorder %s36, 1
      %p183 = por %p181, %p182
      %p185 = scmp.ne.s32.totalorder %s170, %s184
      %p186 = scmp.eq.s32.totalorder %s36, 0
      %p187 = por %p185, %p186
      %s189 = sadd.s32 %s188, 1
      %p192 = scmp.eq.s32.totalorder %s30, 1
      %p193 = scmp.ne.s32.totalorder %s188, %s190
      %p194 = scmp.eq.s32.totalorder %s30, 0
      %p195 = por %p193, %p194
      %p196 = scmp.ne.s32.totalorder %s188, %s190
      %p197 = scmp.eq.s32.totalorder %s35, 1
      %p198 = por %p196, %p197
      %p199 = scmp.ne.s32.totalorder %s190, %s191
      %p200 = scmp.eq.s32.totalorder %s35, 0
      %p201 = por %p199, %p200
      %p202 = scmp.ne.s32.totalorder %s190, %s191
      %p203 = scmp.eq.s32.totalorder %s36, 1
      %p204 = por %p202, %p203
      %p206 = scmp.ne.s32.totalorder %s191, %s205
      %p207 = scmp.eq.s32.totalorder %s36, 0
      %p208 = por %p206, %p207
      %s210 = sadd.s32 %s209, 1
      %p213 = scmp.eq.s32.totalorder %s30, 1
      %p214 = scmp.ne.s32.totalorder %s209, %s211
      %p215 = scmp.eq.s32.totalorder %s30, 0
      %p216 = por %p214, %p215
      %p217 = scmp.ne.s32.totalorder %s209, %s211
      %p218 = scmp.eq.s32.totalorder %s35, 1
      %p219 = por %p217, %p218
      %p220 = scmp.ne.s32.totalorder %s211, %s212
      %p221 = scmp.eq.s32.totalorder %s35, 0
      %p222 = por %p220, %p221
      %p223 = scmp.ne.s32.totalorder %s211, %s212
      %p224 = scmp.eq.s32.totalorder %s36, 1
      %p225 = por %p223, %p224
      %p227 = scmp.ne.s32.totalorder %s212, %s226
      %p228 = scmp.eq.s32.totalorder %s36, 0
      %p229 = por %p227, %p228
      %s231 = sadd.s32 %s230, 1
      %p234 = scmp.eq.s32.totalorder %s30, 1
      %p235 = scmp.ne.s32.totalorder %s230, %s232
      %p236 = scmp.eq.s32.totalorder %s30, 0
      %p237 = por %p235, %p236
      %p238 = scmp.ne.s32.totalorder %s230, %s232
      %p239 = scmp.eq.s32.totalorder %s35, 1
      %p240 = por %p238, %p239
      %p241 = scmp.ne.s32.totalorder %s232, %s233
      %p242 = scmp.eq.s32.totalorder %s35, 0
      %p243 = por %p241, %p242
      %p244 = scmp.ne.s32.totalorder %s232, %s233
      %p245 = scmp.eq.s32.totalorder %s36, 1
      %p246 = por %p244, %p245
      %p248 = scmp.ne.s32.totalorder %s233, %s247
      %p249 = scmp.eq.s32.totalorder %s36, 0
      %p250 = por %p248, %p249
      %s252 = sadd.s32 %s251, 1
      %p255 = scmp.eq.s32.totalorder %s30, 1
      %p256 = scmp.ne.s32.totalorder %s251, %s253
      %p257 = scmp.eq.s32.totalorder %s30, 0
      %p258 = por %p256, %p257
      %p259 = scmp.ne.s32.totalorder %s251, %s253
      %p260 = scmp.eq.s32.totalorder %s35, 1
      %p261 = por %p259, %p260
      %p262 = scmp.ne.s32.totalorder %s253, %s254
      %p263 = scmp.eq.s32.totalorder %s35, 0
      %p264 = por %p262, %p263
      %p265 = scmp.ne.s32.totalorder %s253, %s254
      %p266 = scmp.eq.s32.totalorder %s36, 1
      %p267 = por %p265, %p266
      %p269 = scmp.ne.s32.totalorder %s254, %s268
      %p270 = scmp.eq.s32.totalorder %s36, 0
      %p271 = por %p269, %p270
      %s273 = sadd.s32 %s272, 1
      %p276 = scmp.eq.s32.totalorder %s30, 1
      %p277 = scmp.ne.s32.totalorder %s272, %s274
      %p278 = scmp.eq.s32.totalorder %s30, 0
      %p279 = por %p277, %p278
      %p280 = scmp.ne.s32.totalorder %s272, %s274
      %p281 = scmp.eq.s32.totalorder %s35, 1
      %p282 = por %p280, %p281
      %p283 = scmp.ne.s32.totalorder %s274, %s275
      %p284 = scmp.eq.s32.totalorder %s35, 0
      %p285 = por %p283, %p284
      %p286 = scmp.ne.s32.totalorder %s274, %s275
      %p287 = scmp.eq.s32.totalorder %s36, 1
      %p288 = por %p286, %p287
      %p290 = scmp.ne.s32.totalorder %s275, %s289
      %p291 = scmp.eq.s32.totalorder %s36, 0
      %p292 = por %p290, %p291
      %s294 = sadd.s32 %s293, 1
      %p297 = scmp.eq.s32.totalorder %s30, 1
      %p298 = scmp.ne.s32.totalorder %s293, %s295
      %p299 = scmp.eq.s32.totalorder %s30, 0
      %p300 = por %p298, %p299
      %p301 = scmp.ne.s32.totalorder %s293, %s295
      %p302 = scmp.eq.s32.totalorder %s35, 1
      %p303 = por %p301, %p302
      %p304 = scmp.ne.s32.totalorder %s295, %s296
      %p305 = scmp.eq.s32.totalorder %s35, 0
      %p306 = por %p304, %p305
      %p307 = scmp.ne.s32.totalorder %s295, %s296
      %p308 = scmp.eq.s32.totalorder %s36, 1
      %p309 = por %p307, %p308
      %p311 = scmp.ne.s32.totalorder %s296, %s310
      %p312 = scmp.eq.s32.totalorder %s36, 0
      %p313 = por %p311, %p312
      %s315 = sadd.s32 %s314, 1
      %p318 = scmp.eq.s32.totalorder %s30, 1
      %p319 = scmp.ne.s32.totalorder %s314, %s316
      %p320 = scmp.eq.s32.totalorder %s30, 0
      %p321 = por %p319, %p320
      %p322 = scmp.ne.s32.totalorder %s314, %s316
      %p323 = scmp.eq.s32.totalorder %s35, 1
      %p324 = por %p322, %p323
      %p325 = scmp.ne.s32.totalorder %s316, %s317
      %p326 = scmp.eq.s32.totalorder %s35, 0
      %p327 = por %p325, %p326
      %p328 = scmp.ne.s32.totalorder %s316, %s317
      %p329 = scmp.eq.s32.totalorder %s36, 1
      %p330 = por %p328, %p329
      %p332 = scmp.ne.s32.totalorder %s317, %s331
      %p333 = scmp.eq.s32.totalorder %s36, 0
      %p334 = por %p332, %p333
      %s336 = sadd.s32 %s335, 1
      %p339 = scmp.eq.s32.totalorder %s30, 1
      %p340 = scmp.ne.s32.totalorder %s335, %s337
      %p341 = scmp.eq.s32.totalorder %s30, 0
      %p342 = por %p340, %p341
      %p343 = scmp.ne.s32.totalorder %s335, %s337
      %p344 = scmp.eq.s32.totalorder %s35, 1
      %p345 = por %p343, %p344
      %p346 = scmp.ne.s32.totalorder %s337, %s338
      %p347 = scmp.eq.s32.totalorder %s35, 0
      %p348 = por %p346, %p347
      %p349 = scmp.ne.s32.totalorder %s337, %s338
      %p350 = scmp.eq.s32.totalorder %s36, 1
      %p351 = por %p349, %p350
      %p353 = scmp.ne.s32.totalorder %s338, %s352
      %p354 = scmp.eq.s32.totalorder %s36, 0
      %p355 = por %p353, %p354
      %s357 = sadd.s32 %s356, 1
      %p360 = scmp.eq.s32.totalorder %s30, 1
      %p361 = scmp.ne.s32.totalorder %s356, %s358
      %p362 = scmp.eq.s32.totalorder %s30, 0
      %p363 = por %p361, %p362
      %p364 = scmp.ne.s32.totalorder %s356, %s358
      %p365 = scmp.eq.s32.totalorder %s35, 1
      %p366 = por %p364, %p365
      %p367 = scmp.ne.s32.totalorder %s358, %s359
      %p368 = scmp.eq.s32.totalorder %s35, 0
      %p369 = por %p367, %p368
      %p370 = scmp.ne.s32.totalorder %s358, %s359
      %p371 = scmp.eq.s32.totalorder %s36, 1
      %p372 = por %p370, %p371
      %p374 = scmp.ne.s32.totalorder %s359, %s373
      %p375 = scmp.eq.s32.totalorder %s36, 0
      %p376 = por %p374, %p375
      %s377 = ssub.s32 %s37, %s49
      %s378 = ssub.s32 %s38, %s45
      %s379 = sor.u32 %s377, %s378
      %p380 = scmp.eq.s32.totalorder %s379, 0
      %s382 = sadd.s32 %s381, 1
      %s383 = scalar_select %p380, %s381, %s382
      %p386 = pneg %p380
      %p387 = scmp.eq.s32.totalorder %s30, 1
      %p388 = por %p386, %p387
      %p389 = scmp.ne.s32.totalorder %s381, %s384
      %p390 = scmp.eq.s32.totalorder %s30, 0
      %p391 = por %p389, %p390
      %p392 = scmp.ne.s32.totalorder %s381, %s384
      %p393 = scmp.eq.s32.totalorder %s35, 1
      %p394 = por %p392, %p393
      %p395 = scmp.ne.s32.totalorder %s384, %s385
      %p396 = scmp.eq.s32.totalorder %s35, 0
      %p397 = por %p395, %p396
      %p398 = scmp.ne.s32.totalorder %s384, %s385
      %p399 = scmp.eq.s32.totalorder %s36, 1
      %p400 = por %p398, %p399
      %p402 = scmp.ne.s32.totalorder %s385, %s401
      %p403 = scmp.eq.s32.totalorder %s36, 0
      %p404 = por %p402, %p403
      %p405 = scmp.le.s32.totalorder 1, %s30
      %p406 = scmp.lt.s32.totalorder %s30, 3
      %p407 = pnand %p405, %p406
      %p408 = pneg %p407
      // Predicated region
      $region9: #{tpu_custom_call.1} parent=5 // pred_check
        _
      $region10: #{tpu_custom_call.1} parent=5 // pred_check_branch
        %410 = sbr.rel (%p407) target = $region12
      $region11: #{tpu_custom_call.1} parent=5 // pred_region
        %s411 = ssub.s32 %s30, 1
        // Predicated region
        $region13: #{tpu_custom_call.1} parent=11 // pred_check
          %p412 = pneg %p63
        $region14: #{tpu_custom_call.1} parent=11 // pred_check_branch
          %414 = sbr.rel (%p412) target = $region16
        $region15: #{tpu_custom_call.1} parent=11 // pred_region
          _
        $region16: #{tpu_custom_call.1} parent=11 // pred_fallthru
          _
        // Predicated region
        $region17: #{tpu_custom_call.1} parent=11 // pred_check
          %p415 = pneg %p117
        $region18: #{tpu_custom_call.1} parent=11 // pred_check_branch
          %417 = sbr.rel (%p415) target = $region20
        $region19: #{tpu_custom_call.1} parent=11 // pred_region
          %419 = vsyncadd [#allocation9], 0
          %s420 = smul.addr %s39, 4
          %s421 = scalar_lea.hbm %s2, %s420
          %s423 = sshll.u32 %s421, 4
          %s424 = int_to_ptr.hbm [resolvable:$true] %s423
          %s425 = sshll.u32 [#allocation8], 4
          %s426 = int_to_ptr.vmem [resolvable:$true] %s425
          %428 = dma.hbm_to_vmem [thread:$0]  %s424, 64, %s426, [#allocation9]
        $region20: #{tpu_custom_call.1} parent=11 // pred_fallthru
          _
        // Predicated region
        $region21: #{tpu_custom_call.1} parent=11 // pred_check
          %p429 = pneg %p138
        $region22: #{tpu_custom_call.1} parent=11 // pred_check_branch
          %431 = sbr.rel (%p429) target = $region24
        $region23: #{tpu_custom_call.1} parent=11 // pred_region
          _
        $region24: #{tpu_custom_call.1} parent=11 // pred_fallthru
          _
        // Predicated region
        $region25: #{tpu_custom_call.1} parent=11 // pred_check
          %p432 = pneg %p159
        $region26: #{tpu_custom_call.1} parent=11 // pred_check_branch
          %434 = sbr.rel (%p432) target = $region28
        $region27: #{tpu_custom_call.1} parent=11 // pred_region
          _
        $region28: #{tpu_custom_call.1} parent=11 // pred_fallthru
          _
        // Predicated region
        $region29: #{tpu_custom_call.1} parent=11 // pred_check
          %p435 = pneg %p180
        $region30: #{tpu_custom_call.1} parent=11 // pred_check_branch
          %437 = sbr.rel (%p435) target = $region32
        $region31: #{tpu_custom_call.1} parent=11 // pred_region
          _
        $region32: #{tpu_custom_call.1} parent=11 // pred_fallthru
          _
        // Predicated region
        $region33: #{tpu_custom_call.1} parent=11 // pred_check
          %p438 = pneg %p201
        $region34: #{tpu_custom_call.1} parent=11 // pred_check_branch
          %440 = sbr.rel (%p438) target = $region36
        $region35: #{tpu_custom_call.1} parent=11 // pred_region
          %442 = vsyncadd [#allocation9], 0
          %s443 = sshll.u32 %s6, 4
          %s444 = int_to_ptr.hbm [resolvable:$true] %s443
          %s445 = sshll.u32 [#allocation10], 4
          %s446 = int_to_ptr.vmem [resolvable:$true] %s445
          %451 = dma.hbm_to_vmem [thread:$0]  %s444, 512, %s446, [#allocation9], 64, 64, 4
        $region36: #{tpu_custom_call.1} parent=11 // pred_fallthru
          _
        // Predicated region
        $region37: #{tpu_custom_call.1} parent=11 // pred_check
          %p452 = pneg %p222
        $region38: #{tpu_custom_call.1} parent=11 // pred_check_branch
          %454 = sbr.rel (%p452) target = $region40
        $region39: #{tpu_custom_call.1} parent=11 // pred_region
          %456 = vsyncadd [#allocation12], 0
          %s457 = sshll.u32 %s7, 4
          %s458 = int_to_ptr.hbm [resolvable:$true] %s457
          %s459 = sshll.u32 [#allocation11], 4
          %s460 = int_to_ptr.vmem [resolvable:$true] %s459
          %465 = dma.hbm_to_vmem [thread:$0]  %s458, 512, %s460, [#allocation12], 64, 64, 4
        $region40: #{tpu_custom_call.1} parent=11 // pred_fallthru
          _
        // Predicated region
        $region41: #{tpu_custom_call.1} parent=11 // pred_check
          %p466 = pneg %p243
        $region42: #{tpu_custom_call.1} parent=11 // pred_check_branch
          %468 = sbr.rel (%p466) target = $region44
        $region43: #{tpu_custom_call.1} parent=11 // pred_region
          _
        $region44: #{tpu_custom_call.1} parent=11 // pred_fallthru
          _
        // Predicated region
        $region45: #{tpu_custom_call.1} parent=11 // pred_check
          %p469 = pneg %p264
        $region46: #{tpu_custom_call.1} parent=11 // pred_check_branch
          %471 = sbr.rel (%p469) target = $region48
        $region47: #{tpu_custom_call.1} parent=11 // pred_region
          _
        $region48: #{tpu_custom_call.1} parent=11 // pred_fallthru
          _
        // Predicated region
        $region49: #{tpu_custom_call.1} parent=11 // pred_check
          %p472 = pneg %p285
        $region50: #{tpu_custom_call.1} parent=11 // pred_check_branch
          %474 = sbr.rel (%p472) target = $region52
        $region51: #{tpu_custom_call.1} parent=11 // pred_region
          _
        $region52: #{tpu_custom_call.1} parent=11 // pred_fallthru
          _
        // Predicated region
        $region53: #{tpu_custom_call.1} parent=11 // pred_check
          %p475 = pneg %p306
        $region54: #{tpu_custom_call.1} parent=11 // pred_check_branch
          %477 = sbr.rel (%p475) target = $region56
        $region55: #{tpu_custom_call.1} parent=11 // pred_region
          _
        $region56: #{tpu_custom_call.1} parent=11 // pred_fallthru
          _
        // Predicated region
        $region57: #{tpu_custom_call.1} parent=11 // pred_check
          %p478 = pneg %p327
        $region58: #{tpu_custom_call.1} parent=11 // pred_check_branch
          %480 = sbr.rel (%p478) target = $region60
        $region59: #{tpu_custom_call.1} parent=11 // pred_region
          _
        $region60: #{tpu_custom_call.1} parent=11 // pred_fallthru
          _
        // Predicated region
        $region61: #{tpu_custom_call.1} parent=11 // pred_check
          %p481 = pneg %p348
        $region62: #{tpu_custom_call.1} parent=11 // pred_check_branch
          %483 = sbr.rel (%p481) target = $region64
        $region63: #{tpu_custom_call.1} parent=11 // pred_region
          _
        $region64: #{tpu_custom_call.1} parent=11 // pred_fallthru
          _
        // Predicated region
        $region65: #{tpu_custom_call.1} parent=11 // pred_check
          %p484 = pneg %p369
        $region66: #{tpu_custom_call.1} parent=11 // pred_check_branch
          %486 = sbr.rel (%p484) target = $region68
        $region67: #{tpu_custom_call.1} parent=11 // pred_region
          _
        $region68: #{tpu_custom_call.1} parent=11 // pred_fallthru
          _
      $region12: #{tpu_custom_call.1} parent=5 // pred_fallthru
        _
      %p487 = scmp.lt.s32.totalorder %s30, 2
      // Predicated region
      $region69: #{tpu_custom_call.1} parent=5 // pred_check
        %p488 = pneg %p487
      $region70: #{tpu_custom_call.1} parent=5 // pred_check_branch
        %490 = sbr.rel (%p488) target = $region72
      $region71: #{tpu_custom_call.1} parent=5 // pred_region
        // Predicated region
        $region73: #{tpu_custom_call.1} parent=71 // pred_check
          %p491 = pneg %p85
        $region74: #{tpu_custom_call.1} parent=71 // pred_check_branch
          %493 = sbr.rel (%p491) target = $region76
        $region75: #{tpu_custom_call.1} parent=71 // pred_region
          %s494 = sand.u32 %s75, 1
          %s495 = scalar_lea.sflag [#allocation6], %s494
          %s496 = sand.u32 %s75, 1
          %s497 = smul.addr %s496, 8
          %s498 = scalar_lea.vmem [#allocation5], %s497
          %500 = vsyncadd %s495, 0
          %s501 = sadd.s32 %s38, %s37
          %s502 = smul.addr %s501, 8
          %s503 = scalar_lea.hbm %s1, %s502
          %s505 = sshll.u32 %s503, 4
          %s506 = int_to_ptr.hbm [resolvable:$true] %s505
          %s507 = sshll.u32 %s498, 4
          %s508 = int_to_ptr.vmem [resolvable:$true] %s507
          %510 = dma.hbm_to_vmem [thread:$0]  %s506, 128, %s508, %s495
        $region76: #{tpu_custom_call.1} parent=71 // pred_fallthru
          _
      $region72: #{tpu_custom_call.1} parent=5 // pred_fallthru
        _
      %p511 = scmp.le.s32.totalorder 1, %s30
      %p512 = scmp.lt.s32.totalorder %s30, 3
      %p513 = pnand %p511, %p512
      %p514 = pneg %p513
      // Predicated region
      $region77: #{tpu_custom_call.1} parent=5 // pred_check
        _
      $region78: #{tpu_custom_call.1} parent=5 // pred_check_branch
        %516 = sbr.rel (%p513) target = $region80
      $region79: #{tpu_custom_call.1} parent=5 // pred_region
        %s517 = ssub.s32 %s30, 1
        %s518 = sand.u32 %s78, 1
        %s519 = scalar_lea.sflag [#allocation6], %s518
        %s520 = sand.u32 %s78, 1
        %s521 = smul.addr %s520, 8
        %s522 = scalar_lea.vmem [#allocation5], %s521
        // Predicated region
        $region81: #{tpu_custom_call.1} parent=79 // pred_check
          %p523 = pneg %p91
        $region82: #{tpu_custom_call.1} parent=79 // pred_check_branch
          %525 = sbr.rel (%p523) target = $region84
        $region83: #{tpu_custom_call.1} parent=79 // pred_region
          %527 = dma.done %s519, 128
        $region84: #{tpu_custom_call.1} parent=79 // pred_fallthru
          _
        // Predicated region
        $region85: #{tpu_custom_call.1} parent=79 // pred_check
          %p528 = pneg %p117
        $region86: #{tpu_custom_call.1} parent=79 // pred_check_branch
          %530 = sbr.rel (%p528) target = $region88
        $region87: #{tpu_custom_call.1} parent=79 // pred_region
          %532 = dma.done [#allocation9], 64
        $region88: #{tpu_custom_call.1} parent=79 // pred_fallthru
          _
        // Predicated region
        $region89: #{tpu_custom_call.1} parent=79 // pred_check
          %p533 = pneg %p201
        $region90: #{tpu_custom_call.1} parent=79 // pred_check_branch
          %535 = sbr.rel (%p533) target = $region92
        $region91: #{tpu_custom_call.1} parent=79 // pred_region
          %537 = dma.done [#allocation9], 512
        $region92: #{tpu_custom_call.1} parent=79 // pred_fallthru
          _
        // Predicated region
        $region93: #{tpu_custom_call.1} parent=79 // pred_check
          %p538 = pneg %p222
        $region94: #{tpu_custom_call.1} parent=79 // pred_check_branch
          %540 = sbr.rel (%p538) target = $region96
        $region95: #{tpu_custom_call.1} parent=79 // pred_region
          %542 = dma.done [#allocation12], 512
        $region96: #{tpu_custom_call.1} parent=79 // pred_fallthru
          _
        %p543 = pneg %p63
        %p544 = pneg %p60
        %s545 = sand.u32 %s78, 1
        %s546 = scalar_lea.sflag [#allocation6], %s545
        %s547 = sand.u32 %s78, 1
        %s548 = smul.addr %s547, 8
        %s549 = scalar_lea.vmem [#allocation5], %s548
        %p550 = pneg %p91
        %p551 = pneg %p88
        %p552 = pneg %p117
        %p553 = pneg %p114
        %p554 = pneg %p138
        %p555 = pneg %p135
        %p556 = pneg %p159
        %p557 = pneg %p156
        %p558 = pneg %p180
        %p559 = pneg %p177
        %p560 = pneg %p201
        %p561 = pneg %p198
        %p562 = pneg %p222
        %p563 = pneg %p219
        %p564 = pneg %p243
        %p565 = pneg %p240
        %p566 = pneg %p264
        %p567 = pneg %p261
        %p568 = pneg %p285
        %p569 = pneg %p282
        %p570 = pneg %p306
        %p571 = pneg %p303
        %p572 = pneg %p327
        %p573 = pneg %p324
        %p574 = pneg %p348
        %p575 = pneg %p345
        %p576 = pneg %p369
        %p577 = pneg %p366
        %p578 = pneg %p397
        %p579 = pneg %p394
        %s580 = sand.u32 %s384, 1
        %s581 = scalar_lea.sflag [#allocation7], %s580
        %s582 = sand.u32 %s384, 1
        %s583 = smul.addr %s582, 8
        %s584 = scalar_lea.vmem [#allocation13], %s583
        %p586 = scmp.eq.s32.totalorder %s40, 0
        // Predicated region
        $region97: #{tpu_custom_call.1} parent=79 // pred_check
          %p587 = pneg %p586
        $region98: #{tpu_custom_call.1} parent=79 // pred_check_branch
          %589 = sbr.rel (%p587) target = $region100
        $region99: #{tpu_custom_call.1} parent=79 // pred_region
          %v590 = vld [vmem:[#allocation8] sm:$0xf]
          %v591 = vld [vmem:[%s4] sm:$0xf]
          %v592 = vld [vmem:[%s4 + $0x4] sm:$0xf]
          %v593 = vld [vmem:[%s4 + $0x8] sm:$0xf]
          %v594 = vld [vmem:[%s4 + $0xc] sm:$0xf]
          %v595 = vld [vmem:[%s4 + $0x10] sm:$0xf]
          %v596 = vld [vmem:[%s4 + $0x14] sm:$0xf]
          %v597 = vld [vmem:[%s4 + $0x18] sm:$0xf]
          %v598 = vld [vmem:[%s4 + $0x1c] sm:$0xf]
          %v607 = vunpack.c.l.b16 %v591
          %v608 = vunpack.c.l.b16 %v592
          %v609 = vunpack.c.l.b16 %v593
          %v610 = vunpack.c.l.b16 %v594
          %v611 = vunpack.c.l.b16 %v595
          %v612 = vunpack.c.l.b16 %v596
          %v613 = vunpack.c.l.b16 %v597
          %v614 = vunpack.c.l.b16 %v598
          %v615 = vpack.c.b16 %v608, %v607
          %v616 = vpack.c.b16 %v610, %v609
          %v617 = vpack.c.b16 %v612, %v611
          %v618 = vpack.c.b16 %v614, %v613
          %vm623 = vcmask 523264
          %v625 = vsel %vm623, %v590, 0
          %627 = vmatpush.bf16.msra.mxu0 0
          %628 = vmatpush.bf16.msra.mxu0 0
          %629 = vmatpush.bf16.msra.mxu0 0
          %630 = vmatpush.bf16.msra.mxu0 0
          %631 = vmatpush.bf16.msra.mxu0 %v618
          %632 = vmatpush.bf16.msra.mxu0 %v617
          %633 = vmatpush.bf16.msra.mxu0 %v616
          %634 = vmatpush.bf16.msra.mxu0 %v615
          %635 = vmatmul.bf16.gmra.mxu0 %v625
          %v636 = vpop.f32.mrf.mxu0
          %v637 = vadd.f32 0.0, %v636
          %v638 = vpop.f32.mrf.mxu0
          %639 = vdwg.mxu0
          %v640 = vpack.c.bf16 %v637, %v637
          %vm641 = vcmask 519168
          %642 = vst.msk [vmem:[#allocation2] sm:$0xf] %vm641, %v640
          %v643 = vld [vmem:[%s5] sm:$0xf]
          %v644 = vld [vmem:[%s5 + $0x4] sm:$0xf]
          %v645 = vld [vmem:[%s5 + $0x8] sm:$0xf]
          %v646 = vld [vmem:[%s5 + $0xc] sm:$0xf]
          %v647 = vld [vmem:[%s5 + $0x10] sm:$0xf]
          %v648 = vld [vmem:[%s5 + $0x14] sm:$0xf]
          %v649 = vld [vmem:[%s5 + $0x18] sm:$0xf]
          %v650 = vld [vmem:[%s5 + $0x1c] sm:$0xf]
          %v659 = vunpack.c.l.b16 %v643
          %v660 = vunpack.c.l.b16 %v644
          %v661 = vunpack.c.l.b16 %v645
          %v662 = vunpack.c.l.b16 %v646
          %v663 = vunpack.c.l.b16 %v647
          %v664 = vunpack.c.l.b16 %v648
          %v665 = vunpack.c.l.b16 %v649
          %v666 = vunpack.c.l.b16 %v650
          %v667 = vpack.c.b16 %v660, %v659
          %v668 = vpack.c.b16 %v662, %v661
          %v669 = vpack.c.b16 %v664, %v663
          %v670 = vpack.c.b16 %v666, %v665
          %675 = vmatpush.bf16.msra.mxu0 0
          %676 = vmatpush.bf16.msra.mxu0 0
          %677 = vmatpush.bf16.msra.mxu0 0
          %678 = vmatpush.bf16.msra.mxu0 0
          %679 = vmatpush.bf16.msra.mxu0 %v670
          %680 = vmatpush.bf16.msra.mxu0 %v669
          %681 = vmatpush.bf16.msra.mxu0 %v668
          %682 = vmatpush.bf16.msra.mxu0 %v667
          %683 = vmatmul.bf16.gmra.mxu0 %v625
          %v684 = vpop.f32.mrf.mxu0
          %v685 = vadd.f32 0.0, %v684
          %v686 = vpop.f32.mrf.mxu0
          %687 = vdwg.mxu0
          %v688 = vpack.c.bf16 %v685, %v685
          %689 = vst.msk [vmem:[#allocation3] sm:$0xf] %vm641, %v688
        $region100: #{tpu_custom_call.1} parent=79 // pred_fallthru
          _
        %v690 = vld [vmem:[%s522] sm:$0xff]
        %v691 = vpack.c.bf16 %v690, %v690
        %v692 = vld [vmem:[%s3] sm:$0xf]
        %v693 = vld [vmem:[%s3 + $0x4] sm:$0xf]
        %v694 = vld [vmem:[%s3 + $0x8] sm:$0xf]
        %v695 = vld [vmem:[%s3 + $0xc] sm:$0xf]
        %v696 = vld [vmem:[%s3 + $0x10] sm:$0xf]
        %v697 = vld [vmem:[%s3 + $0x14] sm:$0xf]
        %v698 = vld [vmem:[%s3 + $0x18] sm:$0xf]
        %v699 = vld [vmem:[%s3 + $0x1c] sm:$0xf]
        %v708 = vunpack.c.l.b16 %v692
        %v709 = vunpack.c.l.b16 %v693
        %v710 = vunpack.c.l.b16 %v694
        %v711 = vunpack.c.l.b16 %v695
        %v712 = vunpack.c.l.b16 %v696
        %v713 = vunpack.c.l.b16 %v697
        %v714 = vunpack.c.l.b16 %v698
        %v715 = vunpack.c.l.b16 %v699
        %v716 = vpack.c.b16 %v709, %v708
        %v717 = vpack.c.b16 %v711, %v710
        %v718 = vpack.c.b16 %v713, %v712
        %v719 = vpack.c.b16 %v715, %v714
        %vm724 = vcmask 523264
        %v726 = vsel %vm724, %v691, 0
        %728 = vmatpush.bf16.msra.mxu0 0
        %729 = vmatpush.bf16.msra.mxu0 0
        %730 = vmatpush.bf16.msra.mxu0 0
        %731 = vmatpush.bf16.msra.mxu0 0
        %732 = vmatpush.bf16.msra.mxu0 %v719
        %733 = vmatpush.bf16.msra.mxu0 %v718
        %734 = vmatpush.bf16.msra.mxu0 %v717
        %735 = vmatpush.bf16.msra.mxu0 %v716
        %736 = vmatmul.bf16.gmra.mxu0 %v726
        %v737 = vpop.f32.mrf.mxu0
        %v738 = vadd.f32 0.0, %v737
        %v739 = vpop.f32.mrf.mxu0
        %740 = vdwg.mxu0
        %v741 = vpack.c.bf16 %v738, %v738
        %v742 = vld [vmem:[#allocation2] sm:$0xf]
        %v743 = vld [vmem:[#allocation3] sm:$0xf]
        %s744 = sld [smem:[#allocation4]]
        %vm745 = vcmask 64512
        %v747 = vsel %vm745, %v741, 0
        %v750 = vsel %vm745, %v742, 0
        %752 = vmatpush.bf16.xpose.msra.mxu0 0
        %753 = vmatpush.bf16.xpose.msra.mxu0 0
        %754 = vmatpush.bf16.xpose.msra.mxu0 0
        %755 = vmatpush.bf16.xpose.msra.mxu0 0
        %756 = vmatpush.bf16.xpose.msra.mxu0 0
        %757 = vmatpush.bf16.xpose.msra.mxu0 0
        %758 = vmatpush.bf16.xpose.msra.mxu0 0
        %759 = vmatpush.bf16.xpose.msra.mxu0 %v750
        %760 = vmatmul.bf16.gmra.mxu0 %v747
        %v761 = vpop.f32.mrf.mxu0
        %v762 = vadd.f32 0.0, %v761
        %v763 = vpop.f32.mrf.mxu0
        %764 = vdwg.mxu0
        %v766 = vunpack.c.l.b16 %v741
        %v767 = vpack.c.b16 %v766, %v766
        %768 = vrot.lane.b32.xlu0 %v767, 120
        %v769 = vpop.permute.xlu0 %768
        %v771 = vunpack.c.l.b16 %v742
        %v772 = vpack.c.b16 %v771, %v771
        %773 = vrot.lane.b32.xlu0 %v772, 120
        %v774 = vpop.permute.xlu0 %773
        %v776 = vsel %vm745, %v769, 0
        %v779 = vsel %vm745, %v774, 0
        %781 = vmatpush.bf16.xpose.msra.mxu0 0
        %782 = vmatpush.bf16.xpose.msra.mxu0 0
        %783 = vmatpush.bf16.xpose.msra.mxu0 0
        %784 = vmatpush.bf16.xpose.msra.mxu0 0
        %785 = vmatpush.bf16.xpose.msra.mxu0 0
        %786 = vmatpush.bf16.xpose.msra.mxu0 0
        %787 = vmatpush.bf16.xpose.msra.mxu0 0
        %788 = vmatpush.bf16.xpose.msra.mxu0 %v779
        %789 = vmatmul.bf16.gmra.mxu0 %v776
        %v790 = vpop.f32.mrf.mxu0
        %v791 = vadd.f32 0.0, %v790
        %v792 = vpop.f32.mrf.mxu0
        %793 = vdwg.mxu0
        %v794 = vsel %vm745, %v762, -inf
        %795 = vmax.xlane.f32.xlu0 %v794
        %v796 = vpop.xlane.xlu0 %795
        %v797 = vsub.f32 %v762, %v796
        %v798 = vmul.f32 %v797, 1.442695
        %v799 = vpow.pop %v798
        %v800 = vsel %vm745, %v799, 0.0
        %801 = vadd.xlane.f32.xlu0 %v800
        %v802 = vpop.xlane.xlu0 %801
        %v803 = vrcp.pop %v802
        %v804 = vmul.f32 %v799, %v803
        %v805 = vsel %vm745, %v791, -inf
        %806 = vmax.xlane.f32.xlu0 %v805
        %v807 = vpop.xlane.xlu0 %806
        %v808 = vsub.f32 %v791, %v807
        %v809 = vmul.f32 %v808, 1.442695
        %v810 = vpow.pop %v809
        %v811 = vsel %vm745, %v810, 0.0
        %812 = vadd.xlane.f32.xlu0 %v811
        %v813 = vpop.xlane.xlu0 %812
        %v814 = vrcp.pop %v813
        %v815 = vmul.f32 %v810, %v814
        %v816 = vstv %s744
        %v817 = vmul.f32 %v816, %v815
        %v818 = vsub.f32 %v804, %v817
        %v819 = vpack.c.bf16 %v818, %v818
        %v821 = vsel %vm745, %v819, 0
        %vm823 = vcmask 1043456
        %v825 = vsel %vm823, %v743, 0
        %827 = vmatpush.bf16.msra.mxu0 0
        %828 = vmatpush.bf16.msra.mxu0 0
        %829 = vmatpush.bf16.msra.mxu0 0
        %830 = vmatpush.bf16.msra.mxu0 0
        %831 = vmatpush.bf16.msra.mxu0 0
        %832 = vmatpush.bf16.msra.mxu0 0
        %833 = vmatpush.bf16.msra.mxu0 0
        %834 = vmatpush.bf16.msra.mxu0 %v825
        %835 = vmatmul.bf16.gmra.mxu0 %v821
        %v836 = vpop.f32.mrf.mxu0
        %v837 = vadd.f32 0.0, %v836
        %v838 = vpop.f32.mrf.mxu0
        %839 = vdwg.mxu0
        %v840 = vmul.f32 %v837, %v837
        %vm841 = vcmask 130048
        %v842 = vsel %vm841, %v840, 0.0
        %843 = vadd.xlane.f32.xlu0 %v842
        %v844 = vpop.xlane.xlu0 %843
        %v845 = vrcp.pop 16.0
        %v846 = vmul.f32 16.0, %v845
        %v847 = vsub.f32 1.0, %v846
        %v848 = vmul.f32 %v845, %v847
        %v849 = vadd.f32 %v845, %v848
        %vm850 = vweird.f32 %v845
        %v851 = vsel %vm850, %v845, %v849
        %v852 = vmul.f32 %v844, %v851
        %v853 = vadd.f32 %v852, 1e-05
        %v854 = vrsqrt.pop %v853
        %v855 = vmul.f32 %v854, %v853
        %v856 = vmul.f32 %v855, %v854
        %v857 = vmul.f32 0.5, %v856
        %v858 = vsub.f32 1.5, %v857
        %v859 = vmul.f32 %v854, %v858
        %vm860 = vweird.f32 %v853
        %vm861 = vweird.f32 %v854
        %vm862 = vmor %vm860, %vm861
        %v863 = vsel %vm862, %v854, %v859
        %v864 = vmul.f32 %v837, %v863
        %v865 = vpack.c.bf16 %v864, %v864
        %v866 = vld [vmem:[#allocation10] sm:$0xf]
        %v867 = vld [vmem:[#allocation10 + $0x4] sm:$0xf]
        %868 = vrot.lane.b32.xlu0 %v767, 112
        %v869 = vpop.permute.xlu0 %868
        %870 = vrot.lane.b32.xlu0 %v772, 112
        %v871 = vpop.permute.xlu0 %870
        %v873 = vsel %vm745, %v869, 0
        %v876 = vsel %vm745, %v871, 0
        %878 = vmatpush.bf16.xpose.msra.mxu0 0
        %879 = vmatpush.bf16.xpose.msra.mxu0 0
        %880 = vmatpush.bf16.xpose.msra.mxu0 0
        %881 = vmatpush.bf16.xpose.msra.mxu0 0
        %882 = vmatpush.bf16.xpose.msra.mxu0 0
        %883 = vmatpush.bf16.xpose.msra.mxu0 0
        %884 = vmatpush.bf16.xpose.msra.mxu0 0
        %885 = vmatpush.bf16.xpose.msra.mxu0 %v876
        %886 = vmatmul.bf16.gmra.mxu0 %v873
        %v887 = vpop.f32.mrf.mxu0
        %v888 = vadd.f32 0.0, %v887
        %v889 = vpop.f32.mrf.mxu0
        %890 = vdwg.mxu0
        %891 = vrot.lane.b32.xlu0 %v767, 104
        %v892 = vpop.permute.xlu0 %891
        %893 = vrot.lane.b32.xlu0 %v772, 104
        %v894 = vpop.permute.xlu0 %893
        %v896 = vsel %vm745, %v892, 0
        %v899 = vsel %vm745, %v894, 0
        %901 = vmatpush.bf16.xpose.msra.mxu0 0
        %902 = vmatpush.bf16.xpose.msra.mxu0 0
        %903 = vmatpush.bf16.xpose.msra.mxu0 0
        %904 = vmatpush.bf16.xpose.msra.mxu0 0
        %905 = vmatpush.bf16.xpose.msra.mxu0 0
        %906 = vmatpush.bf16.xpose.msra.mxu0 0
        %907 = vmatpush.bf16.xpose.msra.mxu0 0
        %908 = vmatpush.bf16.xpose.msra.mxu0 %v899
        %909 = vmatmul.bf16.gmra.mxu0 %v896
        %v910 = vpop.f32.mrf.mxu0
        %v911 = vadd.f32 0.0, %v910
        %v912 = vpop.f32.mrf.mxu0
        %913 = vdwg.mxu0
        %v914 = vsel %vm745, %v888, -inf
        %915 = vmax.xlane.f32.xlu0 %v914
        %v916 = vpop.xlane.xlu0 %915
        %v917 = vsub.f32 %v888, %v916
        %v918 = vmul.f32 %v917, 1.442695
        %v919 = vpow.pop %v918
        %v920 = vsel %vm745, %v919, 0.0
        %921 = vadd.xlane.f32.xlu0 %v920
        %v922 = vpop.xlane.xlu0 %921
        %v923 = vrcp.pop %v922
        %v924 = vmul.f32 %v919, %v923
        %v925 = vsel %vm745, %v911, -inf
        %926 = vmax.xlane.f32.xlu0 %v925
        %v927 = vpop.xlane.xlu0 %926
        %v928 = vsub.f32 %v911, %v927
        %v929 = vmul.f32 %v928, 1.442695
        %v930 = vpow.pop %v929
        %v931 = vsel %vm745, %v930, 0.0
        %932 = vadd.xlane.f32.xlu0 %v931
        %v933 = vpop.xlane.xlu0 %932
        %v934 = vrcp.pop %v933
        %v935 = vmul.f32 %v930, %v934
        %v936 = vmul.f32 %v816, %v935
        %v937 = vsub.f32 %v924, %v936
        %v938 = vpack.c.bf16 %v937, %v937
        %v940 = vunpack.c.l.b16 %v743
        %v941 = vpack.c.b16 %v940, %v940
        %942 = vrot.lane.b32.xlu0 %v941, 112
        %v943 = vpop.permute.xlu0 %942
        %v945 = vsel %vm745, %v938, 0
        %v948 = vsel %vm823, %v943, 0
        %950 = vmatpush.bf16.msra.mxu0 0
        %951 = vmatpush.bf16.msra.mxu0 0
        %952 = vmatpush.bf16.msra.mxu0 0
        %953 = vmatpush.bf16.msra.mxu0 0
        %954 = vmatpush.bf16.msra.mxu0 0
        %955 = vmatpush.bf16.msra.mxu0 0
        %956 = vmatpush.bf16.msra.mxu0 0
        %957 = vmatpush.bf16.msra.mxu0 %v948
        %958 = vmatmul.bf16.gmra.mxu0 %v945
        %v959 = vpop.f32.mrf.mxu0
        %v960 = vadd.f32 0.0, %v959
        %v961 = vpop.f32.mrf.mxu0
        %962 = vdwg.mxu0
        %v963 = vmul.f32 %v960, %v960
        %v964 = vsel %vm841, %v963, 0.0
        %965 = vadd.xlane.f32.xlu0 %v964
        %v966 = vpop.xlane.xlu0 %965
        %v967 = vmul.f32 %v966, %v851
        %v968 = vadd.f32 %v967, 1e-05
        %v969 = vrsqrt.pop %v968
        %v970 = vmul.f32 %v969, %v968
        %v971 = vmul.f32 %v970, %v969
        %v972 = vmul.f32 0.5, %v971
        %v973 = vsub.f32 1.5, %v972
        %v974 = vmul.f32 %v969, %v973
        %vm975 = vweird.f32 %v968
        %vm976 = vweird.f32 %v969
        %vm977 = vmor %vm975, %vm976
        %v978 = vsel %vm977, %v969, %v974
        %v979 = vmul.f32 %v960, %v978
        %v980 = vpack.c.bf16 %v979, %v979
        %v981 = vld [vmem:[#allocation10 + $0x8] sm:$0xf]
        %v982 = vld [vmem:[#allocation10 + $0xc] sm:$0xf]
        %v985 = vunpack.c.l.b16 %v981
        %v986 = vunpack.c.l.b16 %v982
        %v987 = vpack.c.b16 %v986, %v985
        %v990 = vsel %vm841, %v980, 0
        %992 = vmatpush.bf16.msra.mxu0 0
        %993 = vmatpush.bf16.msra.mxu0 0
        %994 = vmatpush.bf16.msra.mxu0 0
        %995 = vmatpush.bf16.msra.mxu0 0
        %996 = vmatpush.bf16.msra.mxu0 0
        %997 = vmatpush.bf16.msra.mxu0 0
        %998 = vmatpush.bf16.msra.mxu0 0
        %999 = vmatpush.bf16.msra.mxu0 %v987
        %1000 = vmatmul.bf16.gmra.mxu0 %v990
        %v1001 = vpop.f32.mrf.mxu0
        %v1002 = vadd.f32 0.0, %v1001
        %v1003 = vpop.f32.mrf.mxu0
        %1004 = vdwg.mxu0
        %v1007 = vunpack.c.l.b16 %v866
        %v1008 = vunpack.c.l.b16 %v867
        %v1009 = vpack.c.b16 %v1008, %v1007
        %v1012 = vsel %vm841, %v865, 0
        %1014 = vmatpush.bf16.msra.mxu0 0
        %1015 = vmatpush.bf16.msra.mxu0 0
        %1016 = vmatpush.bf16.msra.mxu0 0
        %1017 = vmatpush.bf16.msra.mxu0 0
        %1018 = vmatpush.bf16.msra.mxu0 0
        %1019 = vmatpush.bf16.msra.mxu0 0
        %1020 = vmatpush.bf16.msra.mxu0 0
        %1021 = vmatpush.bf16.msra.mxu0 %v1009
        %1022 = vmatmul.bf16.gmra.mxu0 %v1012
        %v1023 = vpop.f32.mrf.mxu0
        %v1024 = vadd.f32 %v1002, %v1023
        %v1025 = vpop.f32.mrf.mxu0
        %1026 = vdwg.mxu0
        %1027 = vrot.lane.b32.xlu0 %v767, 96
        %v1028 = vpop.permute.xlu0 %1027
        %1029 = vrot.lane.b32.xlu0 %v772, 96
        %v1030 = vpop.permute.xlu0 %1029
        %v1032 = vsel %vm745, %v1028, 0
        %v1035 = vsel %vm745, %v1030, 0
        %1037 = vmatpush.bf16.xpose.msra.mxu0 0
        %1038 = vmatpush.bf16.xpose.msra.mxu0 0
        %1039 = vmatpush.bf16.xpose.msra.mxu0 0
        %1040 = vmatpush.bf16.xpose.msra.mxu0 0
        %1041 = vmatpush.bf16.xpose.msra.mxu0 0
        %1042 = vmatpush.bf16.xpose.msra.mxu0 0
        %1043 = vmatpush.bf16.xpose.msra.mxu0 0
        %1044 = vmatpush.bf16.xpose.msra.mxu0 %v1035
        %1045 = vmatmul.bf16.gmra.mxu0 %v1032
        %v1046 = vpop.f32.mrf.mxu0
        %v1047 = vadd.f32 0.0, %v1046
        %v1048 = vpop.f32.mrf.mxu0
        %1049 = vdwg.mxu0
        %1050 = vrot.lane.b32.xlu0 %v767, 88
        %v1051 = vpop.permute.xlu0 %1050
        %1052 = vrot.lane.b32.xlu0 %v772, 88
        %v1053 = vpop.permute.xlu0 %1052
        %v1055 = vsel %vm745, %v1051, 0
        %v1058 = vsel %vm745, %v1053, 0
        %1060 = vmatpush.bf16.xpose.msra.mxu0 0
        %1061 = vmatpush.bf16.xpose.msra.mxu0 0
        %1062 = vmatpush.bf16.xpose.msra.mxu0 0
        %1063 = vmatpush.bf16.xpose.msra.mxu0 0
        %1064 = vmatpush.bf16.xpose.msra.mxu0 0
        %1065 = vmatpush.bf16.xpose.msra.mxu0 0
        %1066 = vmatpush.bf16.xpose.msra.mxu0 0
        %1067 = vmatpush.bf16.xpose.msra.mxu0 %v1058
        %1068 = vmatmul.bf16.gmra.mxu0 %v1055
        %v1069 = vpop.f32.mrf.mxu0
        %v1070 = vadd.f32 0.0, %v1069
        %v1071 = vpop.f32.mrf.mxu0
        %1072 = vdwg.mxu0
        %v1073 = vsel %vm745, %v1047, -inf
        %1074 = vmax.xlane.f32.xlu0 %v1073
        %v1075 = vpop.xlane.xlu0 %1074
        %v1076 = vsub.f32 %v1047, %v1075
        %v1077 = vmul.f32 %v1076, 1.442695
        %v1078 = vpow.pop %v1077
        %v1079 = vsel %vm745, %v1078, 0.0
        %1080 = vadd.xlane.f32.xlu0 %v1079
        %v1081 = vpop.xlane.xlu0 %1080
        %v1082 = vrcp.pop %v1081
        %v1083 = vmul.f32 %v1078, %v1082
        %v1084 = vsel %vm745, %v1070, -inf
        %1085 = vmax.xlane.f32.xlu0 %v1084
        %v1086 = vpop.xlane.xlu0 %1085
        %v1087 = vsub.f32 %v1070, %v1086
        %v1088 = vmul.f32 %v1087, 1.442695
        %v1089 = vpow.pop %v1088
        %v1090 = vsel %vm745, %v1089, 0.0
        %1091 = vadd.xlane.f32.xlu0 %v1090
        %v1092 = vpop.xlane.xlu0 %1091
        %v1093 = vrcp.pop %v1092
        %v1094 = vmul.f32 %v1089, %v1093
        %v1095 = vmul.f32 %v816, %v1094
        %v1096 = vsub.f32 %v1083, %v1095
        %v1097 = vpack.c.bf16 %v1096, %v1096
        %1098 = vrot.lane.b32.xlu0 %v941, 96
        %v1099 = vpop.permute.xlu0 %1098
        %v1101 = vsel %vm745, %v1097, 0
        %v1104 = vsel %vm823, %v1099, 0
        %1106 = vmatpush.bf16.msra.mxu0 0
        %1107 = vmatpush.bf16.msra.mxu0 0
        %1108 = vmatpush.bf16.msra.mxu0 0
        %1109 = vmatpush.bf16.msra.mxu0 0
        %1110 = vmatpush.bf16.msra.mxu0 0
        %1111 = vmatpush.bf16.msra.mxu0 0
        %1112 = vmatpush.bf16.msra.mxu0 0
        %1113 = vmatpush.bf16.msra.mxu0 %v1104
        %1114 = vmatmul.bf16.gmra.mxu0 %v1101
        %v1115 = vpop.f32.mrf.mxu0
        %v1116 = vadd.f32 0.0, %v1115
        %v1117 = vpop.f32.mrf.mxu0
        %1118 = vdwg.mxu0
        %v1119 = vmul.f32 %v1116, %v1116
        %v1120 = vsel %vm841, %v1119, 0.0
        %1121 = vadd.xlane.f32.xlu0 %v1120
        %v1122 = vpop.xlane.xlu0 %1121
        %v1123 = vmul.f32 %v1122, %v851
        %v1124 = vadd.f32 %v1123, 1e-05
        %v1125 = vrsqrt.pop %v1124
        %v1126 = vmul.f32 %v1125, %v1124
        %v1127 = vmul.f32 %v1126, %v1125
        %v1128 = vmul.f32 0.5, %v1127
        %v1129 = vsub.f32 1.5, %v1128
        %v1130 = vmul.f32 %v1125, %v1129
        %vm1131 = vweird.f32 %v1124
        %vm1132 = vweird.f32 %v1125
        %vm1133 = vmor %vm1131, %vm1132
        %v1134 = vsel %vm1133, %v1125, %v1130
        %v1135 = vmul.f32 %v1116, %v1134
        %v1136 = vpack.c.bf16 %v1135, %v1135
        %v1137 = vld [vmem:[#allocation10 + $0x10] sm:$0xf]
        %v1138 = vld [vmem:[#allocation10 + $0x14] sm:$0xf]
        %v1141 = vunpack.c.l.b16 %v1137
        %v1142 = vunpack.c.l.b16 %v1138
        %v1143 = vpack.c.b16 %v1142, %v1141
        %v1146 = vsel %vm841, %v1136, 0
        %1148 = vmatpush.bf16.msra.mxu0 0
        %1149 = vmatpush.bf16.msra.mxu0 0
        %1150 = vmatpush.bf16.msra.mxu0 0
        %1151 = vmatpush.bf16.msra.mxu0 0
        %1152 = vmatpush.bf16.msra.mxu0 0
        %1153 = vmatpush.bf16.msra.mxu0 0
        %1154 = vmatpush.bf16.msra.mxu0 0
        %1155 = vmatpush.bf16.msra.mxu0 %v1143
        %1156 = vmatmul.bf16.gmra.mxu0 %v1146
        %v1157 = vpop.f32.mrf.mxu0
        %v1158 = vadd.f32 0.0, %v1157
        %v1159 = vpop.f32.mrf.mxu0
        %1160 = vdwg.mxu0
        %v1161 = vadd.f32 %v1024, %v1158
        %1162 = vrot.lane.b32.xlu0 %v767, 80
        %v1163 = vpop.permute.xlu0 %1162
        %1164 = vrot.lane.b32.xlu0 %v772, 80
        %v1165 = vpop.permute.xlu0 %1164
        %v1167 = vsel %vm745, %v1163, 0
        %v1170 = vsel %vm745, %v1165, 0
        %1172 = vmatpush.bf16.xpose.msra.mxu0 0
        %1173 = vmatpush.bf16.xpose.msra.mxu0 0
        %1174 = vmatpush.bf16.xpose.msra.mxu0 0
        %1175 = vmatpush.bf16.xpose.msra.mxu0 0
        %1176 = vmatpush.bf16.xpose.msra.mxu0 0
        %1177 = vmatpush.bf16.xpose.msra.mxu0 0
        %1178 = vmatpush.bf16.xpose.msra.mxu0 0
        %1179 = vmatpush.bf16.xpose.msra.mxu0 %v1170
        %1180 = vmatmul.bf16.gmra.mxu0 %v1167
        %v1181 = vpop.f32.mrf.mxu0
        %v1182 = vadd.f32 0.0, %v1181
        %v1183 = vpop.f32.mrf.mxu0
        %1184 = vdwg.mxu0
        %1185 = vrot.lane.b32.xlu0 %v767, 72
        %v1186 = vpop.permute.xlu0 %1185
        %1187 = vrot.lane.b32.xlu0 %v772, 72
        %v1188 = vpop.permute.xlu0 %1187
        %v1190 = vsel %vm745, %v1186, 0
        %v1193 = vsel %vm745, %v1188, 0
        %1195 = vmatpush.bf16.xpose.msra.mxu0 0
        %1196 = vmatpush.bf16.xpose.msra.mxu0 0
        %1197 = vmatpush.bf16.xpose.msra.mxu0 0
        %1198 = vmatpush.bf16.xpose.msra.mxu0 0
        %1199 = vmatpush.bf16.xpose.msra.mxu0 0
        %1200 = vmatpush.bf16.xpose.msra.mxu0 0
        %1201 = vmatpush.bf16.xpose.msra.mxu0 0
        %1202 = vmatpush.bf16.xpose.msra.mxu0 %v1193
        %1203 = vmatmul.bf16.gmra.mxu0 %v1190
        %v1204 = vpop.f32.mrf.mxu0
        %v1205 = vadd.f32 0.0, %v1204
        %v1206 = vpop.f32.mrf.mxu0
        %1207 = vdwg.mxu0
        %v1208 = vsel %vm745, %v1182, -inf
        %1209 = vmax.xlane.f32.xlu0 %v1208
        %v1210 = vpop.xlane.xlu0 %1209
        %v1211 = vsub.f32 %v1182, %v1210
        %v1212 = vmul.f32 %v1211, 1.442695
        %v1213 = vpow.pop %v1212
        %v1214 = vsel %vm745, %v1213, 0.0
        %1215 = vadd.xlane.f32.xlu0 %v1214
        %v1216 = vpop.xlane.xlu0 %1215
        %v1217 = vrcp.pop %v1216
        %v1218 = vmul.f32 %v1213, %v1217
        %v1219 = vsel %vm745, %v1205, -inf
        %1220 = vmax.xlane.f32.xlu0 %v1219
        %v1221 = vpop.xlane.xlu0 %1220
        %v1222 = vsub.f32 %v1205, %v1221
        %v1223 = vmul.f32 %v1222, 1.442695
        %v1224 = vpow.pop %v1223
        %v1225 = vsel %vm745, %v1224, 0.0
        %1226 = vadd.xlane.f32.xlu0 %v1225
        %v1227 = vpop.xlane.xlu0 %1226
        %v1228 = vrcp.pop %v1227
        %v1229 = vmul.f32 %v1224, %v1228
        %v1230 = vmul.f32 %v816, %v1229
        %v1231 = vsub.f32 %v1218, %v1230
        %v1232 = vpack.c.bf16 %v1231, %v1231
        %1233 = vrot.lane.b32.xlu0 %v941, 80
        %v1234 = vpop.permute.xlu0 %1233
        %v1236 = vsel %vm745, %v1232, 0
        %v1239 = vsel %vm823, %v1234, 0
        %1241 = vmatpush.bf16.msra.mxu0 0
        %1242 = vmatpush.bf16.msra.mxu0 0
        %1243 = vmatpush.bf16.msra.mxu0 0
        %1244 = vmatpush.bf16.msra.mxu0 0
        %1245 = vmatpush.bf16.msra.mxu0 0
        %1246 = vmatpush.bf16.msra.mxu0 0
        %1247 = vmatpush.bf16.msra.mxu0 0
        %1248 = vmatpush.bf16.msra.mxu0 %v1239
        %1249 = vmatmul.bf16.gmra.mxu0 %v1236
        %v1250 = vpop.f32.mrf.mxu0
        %v1251 = vadd.f32 0.0, %v1250
        %v1252 = vpop.f32.mrf.mxu0
        %1253 = vdwg.mxu0
        %v1254 = vmul.f32 %v1251, %v1251
        %v1255 = vsel %vm841, %v1254, 0.0
        %1256 = vadd.xlane.f32.xlu0 %v1255
        %v1257 = vpop.xlane.xlu0 %1256
        %v1258 = vmul.f32 %v1257, %v851
        %v1259 = vadd.f32 %v1258, 1e-05
        %v1260 = vrsqrt.pop %v1259
        %v1261 = vmul.f32 %v1260, %v1259
        %v1262 = vmul.f32 %v1261, %v1260
        %v1263 = vmul.f32 0.5, %v1262
        %v1264 = vsub.f32 1.5, %v1263
        %v1265 = vmul.f32 %v1260, %v1264
        %vm1266 = vweird.f32 %v1259
        %vm1267 = vweird.f32 %v1260
        %vm1268 = vmor %vm1266, %vm1267
        %v1269 = vsel %vm1268, %v1260, %v1265
        %v1270 = vmul.f32 %v1251, %v1269
        %v1271 = vpack.c.bf16 %v1270, %v1270
        %v1272 = vld [vmem:[#allocation10 + $0x18] sm:$0xf]
        %v1273 = vld [vmem:[#allocation10 + $0x1c] sm:$0xf]
        %v1276 = vunpack.c.l.b16 %v1272
        %v1277 = vunpack.c.l.b16 %v1273
        %v1278 = vpack.c.b16 %v1277, %v1276
        %v1281 = vsel %vm841, %v1271, 0
        %1283 = vmatpush.bf16.msra.mxu0 0
        %1284 = vmatpush.bf16.msra.mxu0 0
        %1285 = vmatpush.bf16.msra.mxu0 0
        %1286 = vmatpush.bf16.msra.mxu0 0
        %1287 = vmatpush.bf16.msra.mxu0 0
        %1288 = vmatpush.bf16.msra.mxu0 0
        %1289 = vmatpush.bf16.msra.mxu0 0
        %1290 = vmatpush.bf16.msra.mxu0 %v1278
        %1291 = vmatmul.bf16.gmra.mxu0 %v1281
        %v1292 = vpop.f32.mrf.mxu0
        %v1293 = vadd.f32 0.0, %v1292
        %v1294 = vpop.f32.mrf.mxu0
        %1295 = vdwg.mxu0
        %v1296 = vadd.f32 %v1161, %v1293
        %v1297 = vadd.f32 %v690, %v1296
        %v1298 = vsel %vm724, %v1297, 0.0
        %1299 = vadd.xlane.f32.xlu0 %v1298
        %v1300 = vpop.xlane.xlu0 %1299
        %v1301 = vrcp.pop 64.0
        %v1302 = vmul.f32 64.0, %v1301
        %v1303 = vsub.f32 1.0, %v1302
        %v1304 = vmul.f32 %v1301, %v1303
        %v1305 = vadd.f32 %v1301, %v1304
        %vm1306 = vweird.f32 %v1301
        %v1307 = vsel %vm1306, %v1301, %v1305
        %v1308 = vmul.f32 %v1300, %v1307
        %v1309 = vsub.f32 %v1297, %v1308
        %v1310 = vmul.f32 %v1309, %v1309
        %v1311 = vsel %vm724, %v1310, 0.0
        %1312 = vadd.xlane.f32.xlu0 %v1311
        %v1313 = vpop.xlane.xlu0 %1312
        %v1314 = vmul.f32 %v1313, %v1307
        %v1315 = vadd.f32 %v1314, 1e-05
        %v1316 = vrsqrt.pop %v1315
        %v1317 = vmul.f32 %v1316, %v1315
        %v1318 = vmul.f32 %v1317, %v1316
        %v1319 = vmul.f32 0.5, %v1318
        %v1320 = vsub.f32 1.5, %v1319
        %v1321 = vmul.f32 %v1316, %v1320
        %vm1322 = vweird.f32 %v1315
        %vm1323 = vweird.f32 %v1316
        %vm1324 = vmor %vm1322, %vm1323
        %v1325 = vsel %vm1324, %v1316, %v1321
        %v1326 = vmul.f32 %v1309, %v1325
        %v1327 = vld [vmem:[%s11] sm:$0x1]
        %v1329 = vperm.slane %v1327, 0
        %v1331 = vmul.f32 %v1326, %v1329
        %v1332 = vld [vmem:[%s12] sm:$0x1]
        %v1334 = vperm.slane %v1332, 0
        %v1336 = vadd.f32 %v1331, %v1334
        %v1337 = vpack.c.bf16 %v1336, %v1336
        %v1338 = vld [vmem:[#allocation11] sm:$0xf]
        %v1339 = vld [vmem:[#allocation11 + $0x4] sm:$0xf]
        %v1340 = vld [vmem:[#allocation11 + $0x8] sm:$0xf]
        %v1341 = vld [vmem:[#allocation11 + $0xc] sm:$0xf]
        %v1342 = vld [vmem:[#allocation11 + $0x10] sm:$0xf]
        %v1343 = vld [vmem:[#allocation11 + $0x14] sm:$0xf]
        %v1344 = vld [vmem:[#allocation11 + $0x18] sm:$0xf]
        %v1345 = vld [vmem:[#allocation11 + $0x1c] sm:$0xf]
        %v1346 = vld [vmem:[%s8] sm:$0x1]
        %v1348 = vperm.slane %v1346, 0
        %v1358 = vunpack.c.l.b16 %v1338
        %v1359 = vunpack.c.l.b16 %v1339
        %v1360 = vunpack.c.l.b16 %v1340
        %v1361 = vunpack.c.l.b16 %v1341
        %v1362 = vunpack.c.l.b16 %v1342
        %v1363 = vunpack.c.l.b16 %v1343
        %v1364 = vunpack.c.l.b16 %v1344
        %v1365 = vunpack.c.l.b16 %v1345
        %v1366 = vpack.c.b16 %v1359, %v1358
        %v1367 = vpack.c.b16 %v1361, %v1360
        %v1368 = vpack.c.b16 %v1363, %v1362
        %v1369 = vpack.c.b16 %v1365, %v1364
        %v1375 = vsel %vm724, %v1337, 0
        %1377 = vmatpush.bf16.msra.mxu0 0
        %1378 = vmatpush.bf16.msra.mxu0 0
        %1379 = vmatpush.bf16.msra.mxu0 0
        %1380 = vmatpush.bf16.msra.mxu0 0
        %1381 = vmatpush.bf16.msra.mxu0 %v1369
        %1382 = vmatpush.bf16.msra.mxu0 %v1368
        %1383 = vmatpush.bf16.msra.mxu0 %v1367
        %1384 = vmatpush.bf16.msra.mxu0 %v1366
        %1385 = vmatmul.bf16.gmra.mxu0 %v1375
        %v1386 = vpop.f32.mrf.mxu0
        %v1387 = vadd.f32 %v1348, %v1386
        %v1388 = vpop.f32.mrf.mxu0
        %1389 = vdwg.mxu0
        %v1390 = vmax.f32 %v1387, 0.0
        %v1391 = vpack.c.bf16 %v1390, %v1390
        %v1392 = vld [vmem:[%s9] sm:$0xf]
        %v1393 = vld [vmem:[%s9 + $0x4] sm:$0xf]
        %v1394 = vld [vmem:[%s9 + $0x8] sm:$0xf]
        %v1395 = vld [vmem:[%s9 + $0xc] sm:$0xf]
        %v1396 = vld [vmem:[%s9 + $0x10] sm:$0xf]
        %v1397 = vld [vmem:[%s9 + $0x14] sm:$0xf]
        %v1398 = vld [vmem:[%s9 + $0x18] sm:$0xf]
        %v1399 = vld [vmem:[%s9 + $0x1c] sm:$0xf]
        %v1400 = vld [vmem:[%s9 + $0x20] sm:$0xf]
        %v1401 = vld [vmem:[%s9 + $0x24] sm:$0xf]
        %v1402 = vld [vmem:[%s9 + $0x28] sm:$0xf]
        %v1403 = vld [vmem:[%s9 + $0x2c] sm:$0xf]
        %v1404 = vld [vmem:[%s9 + $0x30] sm:$0xf]
        %v1405 = vld [vmem:[%s9 + $0x34] sm:$0xf]
        %v1406 = vld [vmem:[%s9 + $0x38] sm:$0xf]
        %v1407 = vld [vmem:[%s9 + $0x3c] sm:$0xf]
        %v1408 = vld [vmem:[%s10] sm:$0x1]
        %v1410 = vperm.slane %v1408, 0
        %v1428 = vunpack.c.l.b16 %v1392
        %v1429 = vunpack.c.l.b16 %v1393
        %v1430 = vunpack.c.l.b16 %v1394
        %v1431 = vunpack.c.l.b16 %v1395
        %v1432 = vunpack.c.l.b16 %v1396
        %v1433 = vunpack.c.l.b16 %v1397
        %v1434 = vunpack.c.l.b16 %v1398
        %v1435 = vunpack.c.l.b16 %v1399
        %v1436 = vunpack.c.l.b16 %v1400
        %v1437 = vunpack.c.l.b16 %v1401
        %v1438 = vunpack.c.l.b16 %v1402
        %v1439 = vunpack.c.l.b16 %v1403
        %v1440 = vunpack.c.l.b16 %v1404
        %v1441 = vunpack.c.l.b16 %v1405
        %v1442 = vunpack.c.l.b16 %v1406
        %v1443 = vunpack.c.l.b16 %v1407
        %v1444 = vpack.c.b16 %v1429, %v1428
        %v1445 = vpack.c.b16 %v1431, %v1430
        %v1446 = vpack.c.b16 %v1433, %v1432
        %v1447 = vpack.c.b16 %v1435, %v1434
        %v1448 = vpack.c.b16 %v1437, %v1436
        %v1449 = vpack.c.b16 %v1439, %v1438
        %v1450 = vpack.c.b16 %v1441, %v1440
        %v1451 = vpack.c.b16 %v1443, %v1442
        %1460 = vmatpush.bf16.msra.mxu0 %v1451
        %1461 = vmatpush.bf16.msra.mxu0 %v1450
        %1462 = vmatpush.bf16.msra.mxu0 %v1449
        %1463 = vmatpush.bf16.msra.mxu0 %v1448
        %1464 = vmatpush.bf16.msra.mxu0 %v1447
        %1465 = vmatpush.bf16.msra.mxu0 %v1446
        %1466 = vmatpush.bf16.msra.mxu0 %v1445
        %1467 = vmatpush.bf16.msra.mxu0 %v1444
        %1468 = vmatmul.bf16.gmra.mxu0 %v1391
        %v1469 = vpop.f32.mrf.mxu0
        %v1470 = vadd.f32 %v1410, %v1469
        %v1471 = vpop.f32.mrf.mxu0
        %1472 = vdwg.mxu0
        %v1473 = vadd.f32 %v1336, %v1470
        %v1474 = vsel %vm724, %v1473, 0.0
        %1475 = vadd.xlane.f32.xlu0 %v1474
        %v1476 = vpop.xlane.xlu0 %1475
        %v1477 = vmul.f32 %v1476, %v1307
        %v1478 = vsub.f32 %v1473, %v1477
        %v1479 = vmul.f32 %v1478, %v1478
        %v1480 = vsel %vm724, %v1479, 0.0
        %1481 = vadd.xlane.f32.xlu0 %v1480
        %v1482 = vpop.xlane.xlu0 %1481
        %v1483 = vmul.f32 %v1482, %v1307
        %v1484 = vadd.f32 %v1483, 1e-05
        %v1485 = vrsqrt.pop %v1484
        %v1486 = vmul.f32 %v1485, %v1484
        %v1487 = vmul.f32 %v1486, %v1485
        %v1488 = vmul.f32 0.5, %v1487
        %v1489 = vsub.f32 1.5, %v1488
        %v1490 = vmul.f32 %v1485, %v1489
        %vm1491 = vweird.f32 %v1484
        %vm1492 = vweird.f32 %v1485
        %vm1493 = vmor %vm1491, %vm1492
        %v1494 = vsel %vm1493, %v1485, %v1490
        %v1495 = vmul.f32 %v1478, %v1494
        %v1496 = vld [vmem:[%s13] sm:$0x1]
        %v1498 = vperm.slane %v1496, 0
        %v1500 = vmul.f32 %v1495, %v1498
        %v1501 = vld [vmem:[%s14] sm:$0x1]
        %v1503 = vperm.slane %v1501, 0
        %v1505 = vadd.f32 %v1500, %v1503
        %1506 = vst.msk [vmem:[%s584] sm:$0xff] %vm724, %v1505
        %s1507 = sand.u32 %s384, 1
        %s1508 = scalar_lea.sflag [#allocation7], %s1507
        %s1509 = sand.u32 %s384, 1
        %s1510 = smul.addr %s1509, 8
        %s1511 = scalar_lea.vmem [#allocation13], %s1510
        // Predicated region
        $region101: #{tpu_custom_call.1} parent=79 // pred_check
          %p1512 = pneg %p394
        $region102: #{tpu_custom_call.1} parent=79 // pred_check_branch
          %1514 = sbr.rel (%p1512) target = $region104
        $region103: #{tpu_custom_call.1} parent=79 // pred_region
          %1516 = vsyncadd %s1508, 0
          %s1517 = sadd.s32 %s40, %s39
          %s1518 = smul.addr %s1517, 8
          %s1519 = scalar_lea.hbm %s15, %s1518
          %s1521 = sshll.u32 %s1511, 4
          %s1522 = int_to_ptr.vmem [resolvable:$true] %s1521
          %s1523 = sshll.u32 %s1519, 4
          %s1524 = int_to_ptr.hbm [resolvable:$true] %s1523
          %1526 = dma.vmem_to_hbm [thread:$0]  %s1522, 128, %s1524, %s1508
        $region104: #{tpu_custom_call.1} parent=79 // pred_fallthru
          _
      $region80: #{tpu_custom_call.1} parent=5 // pred_fallthru
        _
      %p1527 = scmp.le.s32.totalorder 2, %s30
      // Predicated region
      $region105: #{tpu_custom_call.1} parent=5 // pred_check
        %p1528 = pneg %p1527
      $region106: #{tpu_custom_call.1} parent=5 // pred_check_branch
        %1530 = sbr.rel (%p1528) target = $region108
      $region107: #{tpu_custom_call.1} parent=5 // pred_region
        %s1531 = ssub.s32 %s30, 2
        // Predicated region
        $region109: #{tpu_custom_call.1} parent=107 // pred_check
          %p1532 = pneg %p400
        $region110: #{tpu_custom_call.1} parent=107 // pred_check_branch
          %1534 = sbr.rel (%p1532) target = $region112
        $region111: #{tpu_custom_call.1} parent=107 // pred_region
          %s1535 = sand.u32 %s385, 1
          %s1536 = scalar_lea.sflag [#allocation7], %s1535
          %s1537 = sand.u32 %s385, 1
          %s1538 = smul.addr %s1537, 8
          %s1539 = scalar_lea.vmem [#allocation13], %s1538
          %1541 = dma.done %s1536, 128
        $region112: #{tpu_custom_call.1} parent=107 // pred_fallthru
          _
      $region108: #{tpu_custom_call.1} parent=5 // pred_fallthru
        _
    $region6: #{tpu_custom_call.1} parent=1 // loop_footer
      %s34 = sadd.s32 1, %s30
    $region7: #{tpu_custom_call.1} parent=1 // loop_footer_branch
      %29 = sbr.rel target = $region3
    $region8: #{tpu_custom_call.1} parent=1 // loop_exit
      _
    %1542 = vsyncpa [#allocation6], 1
    %s1543 = scalar_lea.sflag [#allocation6], 1
    %1544 = vsyncpa %s1543, 1
    %1545 = vsyncpa [#allocation9], 1
    %1546 = vsyncpa [#allocation12], 1
    %1547 = vsyncpa [#allocation7], 1
    %s1548 = scalar_lea.sflag [#allocation7], 1
    %1549 = vsyncpa %s1548, 1

// kernel: tpu_custom_call.1
$region0: #{tpu_custom_call.1}
  #allocation0 [shape = 'u32[]', space=smem, size = 0x4, offset = 0x4, fixed_abs, tag = 'smem constant byte address 0x4 - core index']
  #allocation1 [shape = 'u32[72,128]{1,0:T(1,128)}', space=vmem, size = 0x9000, scoped, tag = 'internal scratch']
  #allocation2 [shape = 'bf16[8,64]{1,0:T(8,128)(2,1)}', space=vmem, size = 0x800, scoped, tag = 'scratch operand']
  #allocation3 [shape = 'bf16[8,64]{1,0:T(8,128)(2,1)}', space=vmem, size = 0x800, scoped, tag = 'scratch operand']
  #allocation4 [shape = 'f32[1,1]{1,0:T(1,128)S(6)}', space=smem, size = 0x200, scoped, tag = 'scoped memory for tpu_custom_call.1']
  %s0 = inlined_call_operand.<no memory space> [shape: f32[1,1], index: 0, kind: input, shape index: {}]
  %s1 = inlined_call_operand.hbm [shape: f32[2,8,64], index: 1, kind: input, shape index: {}]
  %s2 = inlined_call_operand.hbm [shape: bf16[2,8,64], index: 2, kind: input, shape index: {}]
  %s3 = inlined_call_operand.vmem [shape: bf16[64,64], index: 3, kind: input, shape index: {}]
  %s4 = inlined_call_operand.vmem [shape: bf16[64,64], index: 4, kind: input, shape index: {}]
  %s5 = inlined_call_operand.vmem [shape: bf16[64,64], index: 5, kind: input, shape index: {}]
  %s6 = inlined_call_operand.hbm [shape: bf16[64,64], index: 6, kind: input, shape index: {}]
  %s7 = inlined_call_operand.hbm [shape: bf16[64,128], index: 7, kind: input, shape index: {}]
  %s8 = inlined_call_operand.vmem [shape: f32[1,128], index: 8, kind: input, shape index: {}]
  %s9 = inlined_call_operand.vmem [shape: bf16[128,64], index: 9, kind: input, shape index: {}]
  %s10 = inlined_call_operand.vmem [shape: f32[1,64], index: 10, kind: input, shape index: {}]
  %s11 = inlined_call_operand.vmem [shape: f32[1,64], index: 11, kind: input, shape index: {}]
  %s12 = inlined_call_operand.vmem [shape: f32[1,64], index: 12, kind: input, shape index: {}]
  %s13 = inlined_call_operand.vmem [shape: f32[1,64], index: 13, kind: input, shape index: {}]
  %s14 = inlined_call_operand.vmem [shape: f32[1,64], index: 14, kind: input, shape index: {}]
  %s15 = inlined_call_operand.hbm [shape: f32[2,8,64], index: 15, kind: output, shape index: {}]
  %s16 = sld [smem:[#allocation0]]
  $region113: #{tpu_custom_call.1} parent=0
    _
  %s18 = ssub.s32 1, %s16
  %s19 = scalar_select 0, %s18, %s16
  %20 = sst [smem:[#allocation4]] %s0
  $region1: #{tpu_custom_call.1} parent=0
    #allocation5 [shape = 'u8[8192]{0}', space=vmem, size = 0x2000, scoped, tag = 'input window, operand 1']
    #allocation6 [shape = 's32[2]{0}', space=sflag, size = 0x8, scoped, tag = 'scoped memory for tpu_custom_call.1']
    #allocation7 [shape = 's32[2]{0}', space=sflag, size = 0x8, scoped, tag = 'scoped memory for tpu_custom_call.1']
    #allocation8 [shape = 'u8[4096]{0}', space=vmem, size = 0x1000, scoped, tag = 'input window, operand 2']
    #allocation9 [shape = 's32[2]{0}', space=sflag, size = 0x8, scoped, tag = 'scoped memory for tpu_custom_call.1']
    #allocation10 [shape = 'u8[16384]{0}', space=vmem, size = 0x4000, scoped, tag = 'input window, operand 6, single buffered']
    #allocation11 [shape = 'u8[16384]{0}', space=vmem, size = 0x4000, scoped, tag = 'input window, operand 7, single buffered']
    #allocation12 [shape = 's32[1]{0}', space=sflag, size = 0x4, scoped, tag = 'scoped memory for tpu_custom_call.1']
    #allocation13 [shape = 'u8[8192]{0}', space=vmem, size = 0x2000, scoped, tag = 'output window, operand 0']
    %21 = vsyncpa [#allocation6], 0
    %s22 = scalar_lea.sflag [#allocation6], 1
    %23 = vsyncpa %s22, 0
    %24 = vsyncpa [#allocation9], 0
    %s25 = scalar_lea.sflag [#allocation9], 1
    %26 = vsyncpa %s25, 0
    %27 = vsyncpa [#allocation12], 0
    %28 = vsyncpa [#allocation7], 0
    %s29 = scalar_lea.sflag [#allocation7], 1
    %30 = vsyncpa %s29, 0
    loop: start=0, step=1, limit=4
    $region2: #{tpu_custom_call.1} parent=1 // loop_pre_header
      _
    $region3: #{tpu_custom_call.1} parent=1 // loop_header
      %s32 = sphi 0, %s36
      %p33 = scmp.ge.s32.totalorder %s32, 4
      %s39 = sphi 0, %s51
      %s40 = sphi 0, %s47
      %s41 = sphi 0, %s39
      %s42 = sphi 0, %s40
      %s43 = sphi 0, %s41
      %s44 = sphi 0, %s42
      %s52 = sphi 0, %s52
      %s54 = sphi 0, %s52
      %s55 = sphi 0, %s54
      %s69 = sphi 0, %s55
      %s77 = sphi 0, %s79
      %s80 = sphi 0, %s77
      %s81 = sphi 0, %s80
      %s97 = sphi 0, %s81
      %s103 = sphi 0, %s105
      %s106 = sphi 0, %s103
      %s107 = sphi 0, %s106
      %s123 = sphi 0, %s107
      %s127 = sphi 0, %s127
      %s129 = sphi 0, %s127
      %s130 = sphi 0, %s129
      %s144 = sphi 0, %s130
      %s148 = sphi 0, %s148
      %s150 = sphi 0, %s148
      %s151 = sphi 0, %s150
      %s165 = sphi 0, %s151
      %s169 = sphi 0, %s169
      %s171 = sphi 0, %s169
      %s172 = sphi 0, %s171
      %s186 = sphi 0, %s172
      %s190 = sphi 0, %s190
      %s192 = sphi 0, %s190
      %s193 = sphi 0, %s192
      %s207 = sphi 0, %s193
      %s211 = sphi 0, %s211
      %s213 = sphi 0, %s211
      %s214 = sphi 0, %s213
      %s228 = sphi 0, %s214
      %s232 = sphi 0, %s232
      %s234 = sphi 0, %s232
      %s235 = sphi 0, %s234
      %s249 = sphi 0, %s235
      %s253 = sphi 0, %s253
      %s255 = sphi 0, %s253
      %s256 = sphi 0, %s255
      %s270 = sphi 0, %s256
      %s274 = sphi 0, %s274
      %s276 = sphi 0, %s274
      %s277 = sphi 0, %s276
      %s291 = sphi 0, %s277
      %s295 = sphi 0, %s295
      %s297 = sphi 0, %s295
      %s298 = sphi 0, %s297
      %s312 = sphi 0, %s298
      %s316 = sphi 0, %s316
      %s318 = sphi 0, %s316
      %s319 = sphi 0, %s318
      %s333 = sphi 0, %s319
      %s337 = sphi 0, %s337
      %s339 = sphi 0, %s337
      %s340 = sphi 0, %s339
      %s354 = sphi 0, %s340
      %s358 = sphi 0, %s358
      %s360 = sphi 0, %s358
      %s361 = sphi 0, %s360
      %s375 = sphi 0, %s361
      %s383 = sphi 0, %s385
      %s386 = sphi 0, %s383
      %s387 = sphi 0, %s386
      %s403 = sphi 0, %s387
    $region4: #{tpu_custom_call.1} parent=1 // loop_header_branch
      %35 = sbr.rel (%p33) target = $region8
    $region5: #{tpu_custom_call.1} parent=1 // loop_body
      %s37 = ssub.s32 %s32, 1
      %s38 = ssub.s32 %s32, 2
      %s45 = sadd.s32 1, %s40
      %p46 = scmp.ge.s32.totalorder %s45, 1
      %s47 = scalar_select %p46, 0, %s45
      %s48 = sadd.s32 1, %s39
      %s49 = scalar_select %p46, %s48, %s39
      %p50 = scmp.ge.s32.totalorder %s49, 2
      %s51 = scalar_select %p50, 0, %s49
      %s53 = sadd.s32 %s52, 1
      %p56 = scmp.eq.s32.totalorder %s32, 1
      %p57 = scmp.ne.s32.totalorder %s52, %s54
      %p58 = scmp.eq.s32.totalorder %s32, 0
      %p59 = por %p57, %p58
      %p60 = scmp.ne.s32.totalorder %s52, %s54
      %p61 = scmp.eq.s32.totalorder %s37, 1
      %p62 = por %p60, %p61
      %p63 = scmp.ne.s32.totalorder %s54, %s55
      %p64 = scmp.eq.s32.totalorder %s37, 0
      %p65 = por %p63, %p64
      %p66 = scmp.ne.s32.totalorder %s54, %s55
      %p67 = scmp.eq.s32.totalorder %s38, 1
      %p68 = por %p66, %p67
      %p70 = scmp.ne.s32.totalorder %s55, %s69
      %p71 = scmp.eq.s32.totalorder %s38, 0
      %p72 = por %p70, %p71
      %s73 = ssub.s32 %s39, %s51
      %s74 = ssub.s32 %s40, %s47
      %s75 = sor.u32 %s73, %s74
      %p76 = scmp.eq.s32.totalorder %s75, 0
      %s78 = sadd.s32 %s77, 1
      %s79 = scalar_select %p76, %s77, %s78
      %p82 = pneg %p76
      %p83 = scmp.eq.s32.totalorder %s32, 1
      %p84 = por %p82, %p83
      %p85 = scmp.ne.s32.totalorder %s77, %s80
      %p86 = scmp.eq.s32.totalorder %s32, 0
      %p87 = por %p85, %p86
      %p88 = scmp.ne.s32.totalorder %s77, %s80
      %p89 = scmp.eq.s32.totalorder %s37, 1
      %p90 = por %p88, %p89
      %p91 = scmp.ne.s32.totalorder %s80, %s81
      %p92 = scmp.eq.s32.totalorder %s37, 0
      %p93 = por %p91, %p92
      %p94 = scmp.ne.s32.totalorder %s80, %s81
      %p95 = scmp.eq.s32.totalorder %s38, 1
      %p96 = por %p94, %p95
      %p98 = scmp.ne.s32.totalorder %s81, %s97
      %p99 = scmp.eq.s32.totalorder %s38, 0
      %p100 = por %p98, %p99
      %s101 = ssub.s32 %s39, %s51
      %p102 = scmp.eq.s32.totalorder %s101, 0
      %s104 = sadd.s32 %s103, 1
      %s105 = scalar_select %p102, %s103, %s104
      %p108 = pneg %p102
      %p109 = scmp.eq.s32.totalorder %s32, 1
      %p110 = por %p108, %p109
      %p111 = scmp.ne.s32.totalorder %s103, %s106
      %p112 = scmp.eq.s32.totalorder %s32, 0
      %p113 = por %p111, %p112
      %p114 = scmp.ne.s32.totalorder %s103, %s106
      %p115 = scmp.eq.s32.totalorder %s37, 1
      %p116 = por %p114, %p115
      %p117 = scmp.ne.s32.totalorder %s106, %s107
      %p118 = scmp.eq.s32.totalorder %s37, 0
      %p119 = por %p117, %p118
      %p120 = scmp.ne.s32.totalorder %s106, %s107
      %p121 = scmp.eq.s32.totalorder %s38, 1
      %p122 = por %p120, %p121
      %p124 = scmp.ne.s32.totalorder %s107, %s123
      %p125 = scmp.eq.s32.totalorder %s38, 0
      %p126 = por %p124, %p125
      %s128 = sadd.s32 %s127, 1
      %p131 = scmp.eq.s32.totalorder %s32, 1
      %p132 = scmp.ne.s32.totalorder %s127, %s129
      %p133 = scmp.eq.s32.totalorder %s32, 0
      %p134 = por %p132, %p133
      %p135 = scmp.ne.s32.totalorder %s127, %s129
      %p136 = scmp.eq.s32.totalorder %s37, 1
      %p137 = por %p135, %p136
      %p138 = scmp.ne.s32.totalorder %s129, %s130
      %p139 = scmp.eq.s32.totalorder %s37, 0
      %p140 = por %p138, %p139
      %p141 = scmp.ne.s32.totalorder %s129, %s130
      %p142 = scmp.eq.s32.totalorder %s38, 1
      %p143 = por %p141, %p142
      %p145 = scmp.ne.s32.totalorder %s130, %s144
      %p146 = scmp.eq.s32.totalorder %s38, 0
      %p147 = por %p145, %p146
      %s149 = sadd.s32 %s148, 1
      %p152 = scmp.eq.s32.totalorder %s32, 1
      %p153 = scmp.ne.s32.totalorder %s148, %s150
      %p154 = scmp.eq.s32.totalorder %s32, 0
      %p155 = por %p153, %p154
      %p156 = scmp.ne.s32.totalorder %s148, %s150
      %p157 = scmp.eq.s32.totalorder %s37, 1
      %p158 = por %p156, %p157
      %p159 = scmp.ne.s32.totalorder %s150, %s151
      %p160 = scmp.eq.s32.totalorder %s37, 0
      %p161 = por %p159, %p160
      %p162 = scmp.ne.s32.totalorder %s150, %s151
      %p163 = scmp.eq.s32.totalorder %s38, 1
      %p164 = por %p162, %p163
      %p166 = scmp.ne.s32.totalorder %s151, %s165
      %p167 = scmp.eq.s32.totalorder %s38, 0
      %p168 = por %p166, %p167
      %s170 = sadd.s32 %s169, 1
      %p173 = scmp.eq.s32.totalorder %s32, 1
      %p174 = scmp.ne.s32.totalorder %s169, %s171
      %p175 = scmp.eq.s32.totalorder %s32, 0
      %p176 = por %p174, %p175
      %p177 = scmp.ne.s32.totalorder %s169, %s171
      %p178 = scmp.eq.s32.totalorder %s37, 1
      %p179 = por %p177, %p178
      %p180 = scmp.ne.s32.totalorder %s171, %s172
      %p181 = scmp.eq.s32.totalorder %s37, 0
      %p182 = por %p180, %p181
      %p183 = scmp.ne.s32.totalorder %s171, %s172
      %p184 = scmp.eq.s32.totalorder %s38, 1
      %p185 = por %p183, %p184
      %p187 = scmp.ne.s32.totalorder %s172, %s186
      %p188 = scmp.eq.s32.totalorder %s38, 0
      %p189 = por %p187, %p188
      %s191 = sadd.s32 %s190, 1
      %p194 = scmp.eq.s32.totalorder %s32, 1
      %p195 = scmp.ne.s32.totalorder %s190, %s192
      %p196 = scmp.eq.s32.totalorder %s32, 0
      %p197 = por %p195, %p196
      %p198 = scmp.ne.s32.totalorder %s190, %s192
      %p199 = scmp.eq.s32.totalorder %s37, 1
      %p200 = por %p198, %p199
      %p201 = scmp.ne.s32.totalorder %s192, %s193
      %p202 = scmp.eq.s32.totalorder %s37, 0
      %p203 = por %p201, %p202
      %p204 = scmp.ne.s32.totalorder %s192, %s193
      %p205 = scmp.eq.s32.totalorder %s38, 1
      %p206 = por %p204, %p205
      %p208 = scmp.ne.s32.totalorder %s193, %s207
      %p209 = scmp.eq.s32.totalorder %s38, 0
      %p210 = por %p208, %p209
      %s212 = sadd.s32 %s211, 1
      %p215 = scmp.eq.s32.totalorder %s32, 1
      %p216 = scmp.ne.s32.totalorder %s211, %s213
      %p217 = scmp.eq.s32.totalorder %s32, 0
      %p218 = por %p216, %p217
      %p219 = scmp.ne.s32.totalorder %s211, %s213
      %p220 = scmp.eq.s32.totalorder %s37, 1
      %p221 = por %p219, %p220
      %p222 = scmp.ne.s32.totalorder %s213, %s214
      %p223 = scmp.eq.s32.totalorder %s37, 0
      %p224 = por %p222, %p223
      %p225 = scmp.ne.s32.totalorder %s213, %s214
      %p226 = scmp.eq.s32.totalorder %s38, 1
      %p227 = por %p225, %p226
      %p229 = scmp.ne.s32.totalorder %s214, %s228
      %p230 = scmp.eq.s32.totalorder %s38, 0
      %p231 = por %p229, %p230
      %s233 = sadd.s32 %s232, 1
      %p236 = scmp.eq.s32.totalorder %s32, 1
      %p237 = scmp.ne.s32.totalorder %s232, %s234
      %p238 = scmp.eq.s32.totalorder %s32, 0
      %p239 = por %p237, %p238
      %p240 = scmp.ne.s32.totalorder %s232, %s234
      %p241 = scmp.eq.s32.totalorder %s37, 1
      %p242 = por %p240, %p241
      %p243 = scmp.ne.s32.totalorder %s234, %s235
      %p244 = scmp.eq.s32.totalorder %s37, 0
      %p245 = por %p243, %p244
      %p246 = scmp.ne.s32.totalorder %s234, %s235
      %p247 = scmp.eq.s32.totalorder %s38, 1
      %p248 = por %p246, %p247
      %p250 = scmp.ne.s32.totalorder %s235, %s249
      %p251 = scmp.eq.s32.totalorder %s38, 0
      %p252 = por %p250, %p251
      %s254 = sadd.s32 %s253, 1
      %p257 = scmp.eq.s32.totalorder %s32, 1
      %p258 = scmp.ne.s32.totalorder %s253, %s255
      %p259 = scmp.eq.s32.totalorder %s32, 0
      %p260 = por %p258, %p259
      %p261 = scmp.ne.s32.totalorder %s253, %s255
      %p262 = scmp.eq.s32.totalorder %s37, 1
      %p263 = por %p261, %p262
      %p264 = scmp.ne.s32.totalorder %s255, %s256
      %p265 = scmp.eq.s32.totalorder %s37, 0
      %p266 = por %p264, %p265
      %p267 = scmp.ne.s32.totalorder %s255, %s256
      %p268 = scmp.eq.s32.totalorder %s38, 1
      %p269 = por %p267, %p268
      %p271 = scmp.ne.s32.totalorder %s256, %s270
      %p272 = scmp.eq.s32.totalorder %s38, 0
      %p273 = por %p271, %p272
      %s275 = sadd.s32 %s274, 1
      %p278 = scmp.eq.s32.totalorder %s32, 1
      %p279 = scmp.ne.s32.totalorder %s274, %s276
      %p280 = scmp.eq.s32.totalorder %s32, 0
      %p281 = por %p279, %p280
      %p282 = scmp.ne.s32.totalorder %s274, %s276
      %p283 = scmp.eq.s32.totalorder %s37, 1
      %p284 = por %p282, %p283
      %p285 = scmp.ne.s32.totalorder %s276, %s277
      %p286 = scmp.eq.s32.totalorder %s37, 0
      %p287 = por %p285, %p286
      %p288 = scmp.ne.s32.totalorder %s276, %s277
      %p289 = scmp.eq.s32.totalorder %s38, 1
      %p290 = por %p288, %p289
      %p292 = scmp.ne.s32.totalorder %s277, %s291
      %p293 = scmp.eq.s32.totalorder %s38, 0
      %p294 = por %p292, %p293
      %s296 = sadd.s32 %s295, 1
      %p299 = scmp.eq.s32.totalorder %s32, 1
      %p300 = scmp.ne.s32.totalorder %s295, %s297
      %p301 = scmp.eq.s32.totalorder %s32, 0
      %p302 = por %p300, %p301
      %p303 = scmp.ne.s32.totalorder %s295, %s297
      %p304 = scmp.eq.s32.totalorder %s37, 1
      %p305 = por %p303, %p304
      %p306 = scmp.ne.s32.totalorder %s297, %s298
      %p307 = scmp.eq.s32.totalorder %s37, 0
      %p308 = por %p306, %p307
      %p309 = scmp.ne.s32.totalorder %s297, %s298
      %p310 = scmp.eq.s32.totalorder %s38, 1
      %p311 = por %p309, %p310
      %p313 = scmp.ne.s32.totalorder %s298, %s312
      %p314 = scmp.eq.s32.totalorder %s38, 0
      %p315 = por %p313, %p314
      %s317 = sadd.s32 %s316, 1
      %p320 = scmp.eq.s32.totalorder %s32, 1
      %p321 = scmp.ne.s32.totalorder %s316, %s318
      %p322 = scmp.eq.s32.totalorder %s32, 0
      %p323 = por %p321, %p322
      %p324 = scmp.ne.s32.totalorder %s316, %s318
      %p325 = scmp.eq.s32.totalorder %s37, 1
      %p326 = por %p324, %p325
      %p327 = scmp.ne.s32.totalorder %s318, %s319
      %p328 = scmp.eq.s32.totalorder %s37, 0
      %p329 = por %p327, %p328
      %p330 = scmp.ne.s32.totalorder %s318, %s319
      %p331 = scmp.eq.s32.totalorder %s38, 1
      %p332 = por %p330, %p331
      %p334 = scmp.ne.s32.totalorder %s319, %s333
      %p335 = scmp.eq.s32.totalorder %s38, 0
      %p336 = por %p334, %p335
      %s338 = sadd.s32 %s337, 1
      %p341 = scmp.eq.s32.totalorder %s32, 1
      %p342 = scmp.ne.s32.totalorder %s337, %s339
      %p343 = scmp.eq.s32.totalorder %s32, 0
      %p344 = por %p342, %p343
      %p345 = scmp.ne.s32.totalorder %s337, %s339
      %p346 = scmp.eq.s32.totalorder %s37, 1
      %p347 = por %p345, %p346
      %p348 = scmp.ne.s32.totalorder %s339, %s340
      %p349 = scmp.eq.s32.totalorder %s37, 0
      %p350 = por %p348, %p349
      %p351 = scmp.ne.s32.totalorder %s339, %s340
      %p352 = scmp.eq.s32.totalorder %s38, 1
      %p353 = por %p351, %p352
      %p355 = scmp.ne.s32.totalorder %s340, %s354
      %p356 = scmp.eq.s32.totalorder %s38, 0
      %p357 = por %p355, %p356
      %s359 = sadd.s32 %s358, 1
      %p362 = scmp.eq.s32.totalorder %s32, 1
      %p363 = scmp.ne.s32.totalorder %s358, %s360
      %p364 = scmp.eq.s32.totalorder %s32, 0
      %p365 = por %p363, %p364
      %p366 = scmp.ne.s32.totalorder %s358, %s360
      %p367 = scmp.eq.s32.totalorder %s37, 1
      %p368 = por %p366, %p367
      %p369 = scmp.ne.s32.totalorder %s360, %s361
      %p370 = scmp.eq.s32.totalorder %s37, 0
      %p371 = por %p369, %p370
      %p372 = scmp.ne.s32.totalorder %s360, %s361
      %p373 = scmp.eq.s32.totalorder %s38, 1
      %p374 = por %p372, %p373
      %p376 = scmp.ne.s32.totalorder %s361, %s375
      %p377 = scmp.eq.s32.totalorder %s38, 0
      %p378 = por %p376, %p377
      %s379 = ssub.s32 %s39, %s51
      %s380 = ssub.s32 %s40, %s47
      %s381 = sor.u32 %s379, %s380
      %p382 = scmp.eq.s32.totalorder %s381, 0
      %s384 = sadd.s32 %s383, 1
      %s385 = scalar_select %p382, %s383, %s384
      %p388 = pneg %p382
      %p389 = scmp.eq.s32.totalorder %s32, 1
      %p390 = por %p388, %p389
      %p391 = scmp.ne.s32.totalorder %s383, %s386
      %p392 = scmp.eq.s32.totalorder %s32, 0
      %p393 = por %p391, %p392
      %p394 = scmp.ne.s32.totalorder %s383, %s386
      %p395 = scmp.eq.s32.totalorder %s37, 1
      %p396 = por %p394, %p395
      %p397 = scmp.ne.s32.totalorder %s386, %s387
      %p398 = scmp.eq.s32.totalorder %s37, 0
      %p399 = por %p397, %p398
      %p400 = scmp.ne.s32.totalorder %s386, %s387
      %p401 = scmp.eq.s32.totalorder %s38, 1
      %p402 = por %p400, %p401
      %p404 = scmp.ne.s32.totalorder %s387, %s403
      %p405 = scmp.eq.s32.totalorder %s38, 0
      %p406 = por %p404, %p405
      %p407 = scmp.le.s32.totalorder 1, %s32
      %p408 = scmp.lt.s32.totalorder %s32, 3
      %p409 = pnand %p407, %p408
      %p410 = pneg %p409
      // Predicated region
      $region9: #{tpu_custom_call.1} parent=5 // pred_check
        _
      $region10: #{tpu_custom_call.1} parent=5 // pred_check_branch
        %412 = sbr.rel (%p409) target = $region12
      $region11: #{tpu_custom_call.1} parent=5 // pred_region
        %s413 = ssub.s32 %s32, 1
        // Predicated region
        $region13: #{tpu_custom_call.1} parent=11 // pred_check
          %p414 = pneg %p65
        $region14: #{tpu_custom_call.1} parent=11 // pred_check_branch
          %416 = sbr.rel (%p414) target = $region16
        $region15: #{tpu_custom_call.1} parent=11 // pred_region
          _
        $region16: #{tpu_custom_call.1} parent=11 // pred_fallthru
          _
        // Predicated region
        $region17: #{tpu_custom_call.1} parent=11 // pred_check
          %p417 = pneg %p140
        $region18: #{tpu_custom_call.1} parent=11 // pred_check_branch
          %419 = sbr.rel (%p417) target = $region20
        $region19: #{tpu_custom_call.1} parent=11 // pred_region
          _
        $region20: #{tpu_custom_call.1} parent=11 // pred_fallthru
          _
        // Predicated region
        $region21: #{tpu_custom_call.1} parent=11 // pred_check
          %p420 = pneg %p161
        $region22: #{tpu_custom_call.1} parent=11 // pred_check_branch
          %422 = sbr.rel (%p420) target = $region24
        $region23: #{tpu_custom_call.1} parent=11 // pred_region
          _
        $region24: #{tpu_custom_call.1} parent=11 // pred_fallthru
          _
        // Predicated region
        $region25: #{tpu_custom_call.1} parent=11 // pred_check
          %p423 = pneg %p182
        $region26: #{tpu_custom_call.1} parent=11 // pred_check_branch
          %425 = sbr.rel (%p423) target = $region28
        $region27: #{tpu_custom_call.1} parent=11 // pred_region
          _
        $region28: #{tpu_custom_call.1} parent=11 // pred_fallthru
          _
        // Predicated region
        $region29: #{tpu_custom_call.1} parent=11 // pred_check
          %p426 = pneg %p203
        $region30: #{tpu_custom_call.1} parent=11 // pred_check_branch
          %428 = sbr.rel (%p426) target = $region32
        $region31: #{tpu_custom_call.1} parent=11 // pred_region
          %430 = vsyncadd [#allocation9], 0
          %s431 = sshll.u32 %s6, 4
          %s432 = int_to_ptr.hbm [resolvable:$true] %s431
          %s433 = sshll.u32 [#allocation10], 4
          %s434 = int_to_ptr.vmem [resolvable:$true] %s433
          %439 = dma.hbm_to_vmem [thread:$0]  %s432, 512, %s434, [#allocation9], 64, 64, 4
        $region32: #{tpu_custom_call.1} parent=11 // pred_fallthru
          _
        // Predicated region
        $region33: #{tpu_custom_call.1} parent=11 // pred_check
          %p440 = pneg %p224
        $region34: #{tpu_custom_call.1} parent=11 // pred_check_branch
          %442 = sbr.rel (%p440) target = $region36
        $region35: #{tpu_custom_call.1} parent=11 // pred_region
          %444 = vsyncadd [#allocation12], 0
          %s445 = sshll.u32 %s7, 4
          %s446 = int_to_ptr.hbm [resolvable:$true] %s445
          %s447 = sshll.u32 [#allocation11], 4
          %s448 = int_to_ptr.vmem [resolvable:$true] %s447
          %453 = dma.hbm_to_vmem [thread:$0]  %s446, 512, %s448, [#allocation12], 64, 64, 4
        $region36: #{tpu_custom_call.1} parent=11 // pred_fallthru
          _
        // Predicated region
        $region37: #{tpu_custom_call.1} parent=11 // pred_check
          %p454 = pneg %p245
        $region38: #{tpu_custom_call.1} parent=11 // pred_check_branch
          %456 = sbr.rel (%p454) target = $region40
        $region39: #{tpu_custom_call.1} parent=11 // pred_region
          _
        $region40: #{tpu_custom_call.1} parent=11 // pred_fallthru
          _
        // Predicated region
        $region41: #{tpu_custom_call.1} parent=11 // pred_check
          %p457 = pneg %p266
        $region42: #{tpu_custom_call.1} parent=11 // pred_check_branch
          %459 = sbr.rel (%p457) target = $region44
        $region43: #{tpu_custom_call.1} parent=11 // pred_region
          _
        $region44: #{tpu_custom_call.1} parent=11 // pred_fallthru
          _
        // Predicated region
        $region45: #{tpu_custom_call.1} parent=11 // pred_check
          %p460 = pneg %p287
        $region46: #{tpu_custom_call.1} parent=11 // pred_check_branch
          %462 = sbr.rel (%p460) target = $region48
        $region47: #{tpu_custom_call.1} parent=11 // pred_region
          _
        $region48: #{tpu_custom_call.1} parent=11 // pred_fallthru
          _
        // Predicated region
        $region49: #{tpu_custom_call.1} parent=11 // pred_check
          %p463 = pneg %p308
        $region50: #{tpu_custom_call.1} parent=11 // pred_check_branch
          %465 = sbr.rel (%p463) target = $region52
        $region51: #{tpu_custom_call.1} parent=11 // pred_region
          _
        $region52: #{tpu_custom_call.1} parent=11 // pred_fallthru
          _
        // Predicated region
        $region53: #{tpu_custom_call.1} parent=11 // pred_check
          %p466 = pneg %p329
        $region54: #{tpu_custom_call.1} parent=11 // pred_check_branch
          %468 = sbr.rel (%p466) target = $region56
        $region55: #{tpu_custom_call.1} parent=11 // pred_region
          _
        $region56: #{tpu_custom_call.1} parent=11 // pred_fallthru
          _
        // Predicated region
        $region57: #{tpu_custom_call.1} parent=11 // pred_check
          %p469 = pneg %p350
        $region58: #{tpu_custom_call.1} parent=11 // pred_check_branch
          %471 = sbr.rel (%p469) target = $region60
        $region59: #{tpu_custom_call.1} parent=11 // pred_region
          _
        $region60: #{tpu_custom_call.1} parent=11 // pred_fallthru
          _
        // Predicated region
        $region61: #{tpu_custom_call.1} parent=11 // pred_check
          %p472 = pneg %p371
        $region62: #{tpu_custom_call.1} parent=11 // pred_check_branch
          %474 = sbr.rel (%p472) target = $region64
        $region63: #{tpu_custom_call.1} parent=11 // pred_region
          _
        $region64: #{tpu_custom_call.1} parent=11 // pred_fallthru
          _
      $region12: #{tpu_custom_call.1} parent=5 // pred_fallthru
        _
      %p475 = scmp.lt.s32.totalorder %s32, 2
      // Predicated region
      $region65: #{tpu_custom_call.1} parent=5 // pred_check
        %p476 = pneg %p475
      $region66: #{tpu_custom_call.1} parent=5 // pred_check_branch
        %478 = sbr.rel (%p476) target = $region68
      $region67: #{tpu_custom_call.1} parent=5 // pred_region
        // Predicated region
        $region69: #{tpu_custom_call.1} parent=67 // pred_check
          %p479 = pneg %p87
        $region70: #{tpu_custom_call.1} parent=67 // pred_check_branch
          %481 = sbr.rel (%p479) target = $region72
        $region71: #{tpu_custom_call.1} parent=67 // pred_region
          %s482 = sand.u32 %s77, 1
          %s483 = scalar_lea.sflag [#allocation6], %s482
          %s484 = sand.u32 %s77, 1
          %s485 = smul.addr %s484, 8
          %s486 = scalar_lea.vmem [#allocation5], %s485
          %488 = vsyncadd %s483, 0
          %s489 = sadd.s32 %s40, %s39
          %s490 = smul.addr %s489, 8
          %s491 = scalar_lea.hbm %s1, %s490
          %s493 = sshll.u32 %s491, 4
          %s494 = int_to_ptr.hbm [resolvable:$true] %s493
          %s495 = sshll.u32 %s486, 4
          %s496 = int_to_ptr.vmem [resolvable:$true] %s495
          %498 = dma.hbm_to_vmem [thread:$0]  %s494, 128, %s496, %s483
        $region72: #{tpu_custom_call.1} parent=67 // pred_fallthru
          _
        // Predicated region
        $region73: #{tpu_custom_call.1} parent=67 // pred_check
          %p499 = pneg %p113
        $region74: #{tpu_custom_call.1} parent=67 // pred_check_branch
          %501 = sbr.rel (%p499) target = $region76
        $region75: #{tpu_custom_call.1} parent=67 // pred_region
          %s502 = sand.u32 %s32, 1
          %s503 = scalar_lea.sflag [#allocation9], %s502
          %s504 = sand.u32 %s103, 1
          %s505 = smul.addr %s504, 4
          %s506 = scalar_lea.vmem [#allocation8], %s505
          %508 = vsyncadd %s503, 0
          %s509 = smul.addr %s39, 4
          %s510 = scalar_lea.hbm %s2, %s509
          %s512 = sshll.u32 %s510, 4
          %s513 = int_to_ptr.hbm [resolvable:$true] %s512
          %s514 = sshll.u32 %s506, 4
          %s515 = int_to_ptr.vmem [resolvable:$true] %s514
          %517 = dma.hbm_to_vmem [thread:$0]  %s513, 64, %s515, %s503
        $region76: #{tpu_custom_call.1} parent=67 // pred_fallthru
          _
      $region68: #{tpu_custom_call.1} parent=5 // pred_fallthru
        _
      %p518 = scmp.le.s32.totalorder 1, %s32
      %p519 = scmp.lt.s32.totalorder %s32, 3
      %p520 = pnand %p518, %p519
      %p521 = pneg %p520
      // Predicated region
      $region77: #{tpu_custom_call.1} parent=5 // pred_check
        _
      $region78: #{tpu_custom_call.1} parent=5 // pred_check_branch
        %523 = sbr.rel (%p520) target = $region80
      $region79: #{tpu_custom_call.1} parent=5 // pred_region
        %s524 = ssub.s32 %s32, 1
        %s525 = sand.u32 %s80, 1
        %s526 = scalar_lea.sflag [#allocation6], %s525
        %s527 = sand.u32 %s80, 1
        %s528 = smul.addr %s527, 8
        %s529 = scalar_lea.vmem [#allocation5], %s528
        // Predicated region
        $region81: #{tpu_custom_call.1} parent=79 // pred_check
          %p530 = pneg %p93
        $region82: #{tpu_custom_call.1} parent=79 // pred_check_branch
          %532 = sbr.rel (%p530) target = $region84
        $region83: #{tpu_custom_call.1} parent=79 // pred_region
          %534 = dma.done %s526, 128
        $region84: #{tpu_custom_call.1} parent=79 // pred_fallthru
          _
        %s535 = sand.u32 %s37, 1
        %s536 = scalar_lea.sflag [#allocation9], %s535
        %s537 = sand.u32 %s106, 1
        %s538 = smul.addr %s537, 4
        %s539 = scalar_lea.vmem [#allocation8], %s538
        // Predicated region
        $region85: #{tpu_custom_call.1} parent=79 // pred_check
          %p540 = pneg %p119
        $region86: #{tpu_custom_call.1} parent=79 // pred_check_branch
          %542 = sbr.rel (%p540) target = $region88
        $region87: #{tpu_custom_call.1} parent=79 // pred_region
          %544 = dma.done %s536, 64
        $region88: #{tpu_custom_call.1} parent=79 // pred_fallthru
          _
        // Predicated region
        $region89: #{tpu_custom_call.1} parent=79 // pred_check
          %p545 = pneg %p203
        $region90: #{tpu_custom_call.1} parent=79 // pred_check_branch
          %547 = sbr.rel (%p545) target = $region92
        $region91: #{tpu_custom_call.1} parent=79 // pred_region
          %549 = dma.done [#allocation9], 512
        $region92: #{tpu_custom_call.1} parent=79 // pred_fallthru
          _
        // Predicated region
        $region93: #{tpu_custom_call.1} parent=79 // pred_check
          %p550 = pneg %p224
        $region94: #{tpu_custom_call.1} parent=79 // pred_check_branch
          %552 = sbr.rel (%p550) target = $region96
        $region95: #{tpu_custom_call.1} parent=79 // pred_region
          %554 = dma.done [#allocation12], 512
        $region96: #{tpu_custom_call.1} parent=79 // pred_fallthru
          _
        %p555 = pneg %p65
        %p556 = pneg %p62
        %s557 = sand.u32 %s80, 1
        %s558 = scalar_lea.sflag [#allocation6], %s557
        %s559 = sand.u32 %s80, 1
        %s560 = smul.addr %s559, 8
        %s561 = scalar_lea.vmem [#allocation5], %s560
        %p562 = pneg %p93
        %p563 = pneg %p90
        %s564 = sand.u32 %s37, 1
        %s565 = scalar_lea.sflag [#allocation9], %s564
        %s566 = sand.u32 %s106, 1
        %s567 = smul.addr %s566, 4
        %s568 = scalar_lea.vmem [#allocation8], %s567
        %p569 = pneg %p119
        %p570 = pneg %p116
        %p571 = pneg %p140
        %p572 = pneg %p137
        %p573 = pneg %p161
        %p574 = pneg %p158
        %p575 = pneg %p182
        %p576 = pneg %p179
        %p577 = pneg %p203
        %p578 = pneg %p200
        %p579 = pneg %p224
        %p580 = pneg %p221
        %p581 = pneg %p245
        %p582 = pneg %p242
        %p583 = pneg %p266
        %p584 = pneg %p263
        %p585 = pneg %p287
        %p586 = pneg %p284
        %p587 = pneg %p308
        %p588 = pneg %p305
        %p589 = pneg %p329
        %p590 = pneg %p326
        %p591 = pneg %p350
        %p592 = pneg %p347
        %p593 = pneg %p371
        %p594 = pneg %p368
        %p595 = pneg %p399
        %p596 = pneg %p396
        %s597 = sand.u32 %s386, 1
        %s598 = scalar_lea.sflag [#allocation7], %s597
        %s599 = sand.u32 %s386, 1
        %s600 = smul.addr %s599, 8
        %s601 = scalar_lea.vmem [#allocation13], %s600
        %p603 = scmp.eq.s32.totalorder %s42, 0
        // Predicated region
        $region97: #{tpu_custom_call.1} parent=79 // pred_check
          %p604 = pneg %p603
        $region98: #{tpu_custom_call.1} parent=79 // pred_check_branch
          %606 = sbr.rel (%p604) target = $region100
        $region99: #{tpu_custom_call.1} parent=79 // pred_region
          %v607 = vld [vmem:[%s539] sm:$0xf]
          %v608 = vld [vmem:[%s4] sm:$0xf]
          %v609 = vld [vmem:[%s4 + $0x4] sm:$0xf]
          %v610 = vld [vmem:[%s4 + $0x8] sm:$0xf]
          %v611 = vld [vmem:[%s4 + $0xc] sm:$0xf]
          %v612 = vld [vmem:[%s4 + $0x10] sm:$0xf]
          %v613 = vld [vmem:[%s4 + $0x14] sm:$0xf]
          %v614 = vld [vmem:[%s4 + $0x18] sm:$0xf]
          %v615 = vld [vmem:[%s4 + $0x1c] sm:$0xf]
          %v624 = vunpack.c.l.b16 %v608
          %v625 = vunpack.c.l.b16 %v609
          %v626 = vunpack.c.l.b16 %v610
          %v627 = vunpack.c.l.b16 %v611
          %v628 = vunpack.c.l.b16 %v612
          %v629 = vunpack.c.l.b16 %v613
          %v630 = vunpack.c.l.b16 %v614
          %v631 = vunpack.c.l.b16 %v615
          %v632 = vpack.c.b16 %v625, %v624
          %v633 = vpack.c.b16 %v627, %v626
          %v634 = vpack.c.b16 %v629, %v628
          %v635 = vpack.c.b16 %v631, %v630
          %vm640 = vcmask 523264
          %v642 = vsel %vm640, %v607, 0
          %644 = vmatpush.bf16.msra.mxu0 0
          %645 = vmatpush.bf16.msra.mxu0 0
          %646 = vmatpush.bf16.msra.mxu0 0
          %647 = vmatpush.bf16.msra.mxu0 0
          %648 = vmatpush.bf16.msra.mxu0 %v635
          %649 = vmatpush.bf16.msra.mxu0 %v634
          %650 = vmatpush.bf16.msra.mxu0 %v633
          %651 = vmatpush.bf16.msra.mxu0 %v632
          %652 = vmatmul.bf16.gmra.mxu0 %v642
          %v653 = vpop.f32.mrf.mxu0
          %v654 = vadd.f32 0.0, %v653
          %v655 = vpop.f32.mrf.mxu0
          %656 = vdwg.mxu0
          %v657 = vpack.c.bf16 %v654, %v654
          %vm658 = vcmask 519168
          %659 = vst.msk [vmem:[#allocation2] sm:$0xf] %vm658, %v657
          %v660 = vld [vmem:[%s5] sm:$0xf]
          %v661 = vld [vmem:[%s5 + $0x4] sm:$0xf]
          %v662 = vld [vmem:[%s5 + $0x8] sm:$0xf]
          %v663 = vld [vmem:[%s5 + $0xc] sm:$0xf]
          %v664 = vld [vmem:[%s5 + $0x10] sm:$0xf]
          %v665 = vld [vmem:[%s5 + $0x14] sm:$0xf]
          %v666 = vld [vmem:[%s5 + $0x18] sm:$0xf]
          %v667 = vld [vmem:[%s5 + $0x1c] sm:$0xf]
          %v676 = vunpack.c.l.b16 %v660
          %v677 = vunpack.c.l.b16 %v661
          %v678 = vunpack.c.l.b16 %v662
          %v679 = vunpack.c.l.b16 %v663
          %v680 = vunpack.c.l.b16 %v664
          %v681 = vunpack.c.l.b16 %v665
          %v682 = vunpack.c.l.b16 %v666
          %v683 = vunpack.c.l.b16 %v667
          %v684 = vpack.c.b16 %v677, %v676
          %v685 = vpack.c.b16 %v679, %v678
          %v686 = vpack.c.b16 %v681, %v680
          %v687 = vpack.c.b16 %v683, %v682
          %692 = vmatpush.bf16.msra.mxu0 0
          %693 = vmatpush.bf16.msra.mxu0 0
          %694 = vmatpush.bf16.msra.mxu0 0
          %695 = vmatpush.bf16.msra.mxu0 0
          %696 = vmatpush.bf16.msra.mxu0 %v687
          %697 = vmatpush.bf16.msra.mxu0 %v686
          %698 = vmatpush.bf16.msra.mxu0 %v685
          %699 = vmatpush.bf16.msra.mxu0 %v684
          %700 = vmatmul.bf16.gmra.mxu0 %v642
          %v701 = vpop.f32.mrf.mxu0
          %v702 = vadd.f32 0.0, %v701
          %v703 = vpop.f32.mrf.mxu0
          %704 = vdwg.mxu0
          %v705 = vpack.c.bf16 %v702, %v702
          %706 = vst.msk [vmem:[#allocation3] sm:$0xf] %vm658, %v705
        $region100: #{tpu_custom_call.1} parent=79 // pred_fallthru
          _
        %v707 = vld [vmem:[%s529] sm:$0xff]
        %v708 = vpack.c.bf16 %v707, %v707
        %v709 = vld [vmem:[%s3] sm:$0xf]
        %v710 = vld [vmem:[%s3 + $0x4] sm:$0xf]
        %v711 = vld [vmem:[%s3 + $0x8] sm:$0xf]
        %v712 = vld [vmem:[%s3 + $0xc] sm:$0xf]
        %v713 = vld [vmem:[%s3 + $0x10] sm:$0xf]
        %v714 = vld [vmem:[%s3 + $0x14] sm:$0xf]
        %v715 = vld [vmem:[%s3 + $0x18] sm:$0xf]
        %v716 = vld [vmem:[%s3 + $0x1c] sm:$0xf]
        %v725 = vunpack.c.l.b16 %v709
        %v726 = vunpack.c.l.b16 %v710
        %v727 = vunpack.c.l.b16 %v711
        %v728 = vunpack.c.l.b16 %v712
        %v729 = vunpack.c.l.b16 %v713
        %v730 = vunpack.c.l.b16 %v714
        %v731 = vunpack.c.l.b16 %v715
        %v732 = vunpack.c.l.b16 %v716
        %v733 = vpack.c.b16 %v726, %v725
        %v734 = vpack.c.b16 %v728, %v727
        %v735 = vpack.c.b16 %v730, %v729
        %v736 = vpack.c.b16 %v732, %v731
        %vm741 = vcmask 523264
        %v743 = vsel %vm741, %v708, 0
        %745 = vmatpush.bf16.msra.mxu0 0
        %746 = vmatpush.bf16.msra.mxu0 0
        %747 = vmatpush.bf16.msra.mxu0 0
        %748 = vmatpush.bf16.msra.mxu0 0
        %749 = vmatpush.bf16.msra.mxu0 %v736
        %750 = vmatpush.bf16.msra.mxu0 %v735
        %751 = vmatpush.bf16.msra.mxu0 %v734
        %752 = vmatpush.bf16.msra.mxu0 %v733
        %753 = vmatmul.bf16.gmra.mxu0 %v743
        %v754 = vpop.f32.mrf.mxu0
        %v755 = vadd.f32 0.0, %v754
        %v756 = vpop.f32.mrf.mxu0
        %757 = vdwg.mxu0
        %v758 = vpack.c.bf16 %v755, %v755
        %v759 = vld [vmem:[#allocation2] sm:$0xf]
        %v760 = vld [vmem:[#allocation3] sm:$0xf]
        %s761 = sld [smem:[#allocation4]]
        %vm762 = vcmask 64512
        %v764 = vsel %vm762, %v758, 0
        %v767 = vsel %vm762, %v759, 0
        %769 = vmatpush.bf16.xpose.msra.mxu0 0
        %770 = vmatpush.bf16.xpose.msra.mxu0 0
        %771 = vmatpush.bf16.xpose.msra.mxu0 0
        %772 = vmatpush.bf16.xpose.msra.mxu0 0
        %773 = vmatpush.bf16.xpose.msra.mxu0 0
        %774 = vmatpush.bf16.xpose.msra.mxu0 0
        %775 = vmatpush.bf16.xpose.msra.mxu0 0
        %776 = vmatpush.bf16.xpose.msra.mxu0 %v767
        %777 = vmatmul.bf16.gmra.mxu0 %v764
        %v778 = vpop.f32.mrf.mxu0
        %v779 = vadd.f32 0.0, %v778
        %v780 = vpop.f32.mrf.mxu0
        %781 = vdwg.mxu0
        %v783 = vunpack.c.l.b16 %v758
        %v784 = vpack.c.b16 %v783, %v783
        %785 = vrot.lane.b32.xlu0 %v784, 120
        %v786 = vpop.permute.xlu0 %785
        %v788 = vunpack.c.l.b16 %v759
        %v789 = vpack.c.b16 %v788, %v788
        %790 = vrot.lane.b32.xlu0 %v789, 120
        %v791 = vpop.permute.xlu0 %790
        %v793 = vsel %vm762, %v786, 0
        %v796 = vsel %vm762, %v791, 0
        %798 = vmatpush.bf16.xpose.msra.mxu0 0
        %799 = vmatpush.bf16.xpose.msra.mxu0 0
        %800 = vmatpush.bf16.xpose.msra.mxu0 0
        %801 = vmatpush.bf16.xpose.msra.mxu0 0
        %802 = vmatpush.bf16.xpose.msra.mxu0 0
        %803 = vmatpush.bf16.xpose.msra.mxu0 0
        %804 = vmatpush.bf16.xpose.msra.mxu0 0
        %805 = vmatpush.bf16.xpose.msra.mxu0 %v796
        %806 = vmatmul.bf16.gmra.mxu0 %v793
        %v807 = vpop.f32.mrf.mxu0
        %v808 = vadd.f32 0.0, %v807
        %v809 = vpop.f32.mrf.mxu0
        %810 = vdwg.mxu0
        %v811 = vsel %vm762, %v779, -inf
        %812 = vmax.xlane.f32.xlu0 %v811
        %v813 = vpop.xlane.xlu0 %812
        %v814 = vsub.f32 %v779, %v813
        %v815 = vmul.f32 %v814, 1.442695
        %v816 = vpow.pop %v815
        %v817 = vsel %vm762, %v816, 0.0
        %818 = vadd.xlane.f32.xlu0 %v817
        %v819 = vpop.xlane.xlu0 %818
        %v820 = vrcp.pop %v819
        %v821 = vmul.f32 %v816, %v820
        %v822 = vsel %vm762, %v808, -inf
        %823 = vmax.xlane.f32.xlu0 %v822
        %v824 = vpop.xlane.xlu0 %823
        %v825 = vsub.f32 %v808, %v824
        %v826 = vmul.f32 %v825, 1.442695
        %v827 = vpow.pop %v826
        %v828 = vsel %vm762, %v827, 0.0
        %829 = vadd.xlane.f32.xlu0 %v828
        %v830 = vpop.xlane.xlu0 %829
        %v831 = vrcp.pop %v830
        %v832 = vmul.f32 %v827, %v831
        %v833 = vstv %s761
        %v834 = vmul.f32 %v833, %v832
        %v835 = vsub.f32 %v821, %v834
        %v836 = vpack.c.bf16 %v835, %v835
        %v838 = vsel %vm762, %v836, 0
        %vm840 = vcmask 1043456
        %v842 = vsel %vm840, %v760, 0
        %844 = vmatpush.bf16.msra.mxu0 0
        %845 = vmatpush.bf16.msra.mxu0 0
        %846 = vmatpush.bf16.msra.mxu0 0
        %847 = vmatpush.bf16.msra.mxu0 0
        %848 = vmatpush.bf16.msra.mxu0 0
        %849 = vmatpush.bf16.msra.mxu0 0
        %850 = vmatpush.bf16.msra.mxu0 0
        %851 = vmatpush.bf16.msra.mxu0 %v842
        %852 = vmatmul.bf16.gmra.mxu0 %v838
        %v853 = vpop.f32.mrf.mxu0
        %v854 = vadd.f32 0.0, %v853
        %v855 = vpop.f32.mrf.mxu0
        %856 = vdwg.mxu0
        %v857 = vmul.f32 %v854, %v854
        %vm858 = vcmask 130048
        %v859 = vsel %vm858, %v857, 0.0
        %860 = vadd.xlane.f32.xlu0 %v859
        %v861 = vpop.xlane.xlu0 %860
        %v862 = vrcp.pop 16.0
        %v863 = vmul.f32 16.0, %v862
        %v864 = vsub.f32 1.0, %v863
        %v865 = vmul.f32 %v862, %v864
        %v866 = vadd.f32 %v862, %v865
        %vm867 = vweird.f32 %v862
        %v868 = vsel %vm867, %v862, %v866
        %v869 = vmul.f32 %v861, %v868
        %v870 = vadd.f32 %v869, 1e-05
        %v871 = vrsqrt.pop %v870
        %v872 = vmul.f32 %v871, %v870
        %v873 = vmul.f32 %v872, %v871
        %v874 = vmul.f32 0.5, %v873
        %v875 = vsub.f32 1.5, %v874
        %v876 = vmul.f32 %v871, %v875
        %vm877 = vweird.f32 %v870
        %vm878 = vweird.f32 %v871
        %vm879 = vmor %vm877, %vm878
        %v880 = vsel %vm879, %v871, %v876
        %v881 = vmul.f32 %v854, %v880
        %v882 = vpack.c.bf16 %v881, %v881
        %v883 = vld [vmem:[#allocation10] sm:$0xf]
        %v884 = vld [vmem:[#allocation10 + $0x4] sm:$0xf]
        %885 = vrot.lane.b32.xlu0 %v784, 112
        %v886 = vpop.permute.xlu0 %885
        %887 = vrot.lane.b32.xlu0 %v789, 112
        %v888 = vpop.permute.xlu0 %887
        %v890 = vsel %vm762, %v886, 0
        %v893 = vsel %vm762, %v888, 0
        %895 = vmatpush.bf16.xpose.msra.mxu0 0
        %896 = vmatpush.bf16.xpose.msra.mxu0 0
        %897 = vmatpush.bf16.xpose.msra.mxu0 0
        %898 = vmatpush.bf16.xpose.msra.mxu0 0
        %899 = vmatpush.bf16.xpose.msra.mxu0 0
        %900 = vmatpush.bf16.xpose.msra.mxu0 0
        %901 = vmatpush.bf16.xpose.msra.mxu0 0
        %902 = vmatpush.bf16.xpose.msra.mxu0 %v893
        %903 = vmatmul.bf16.gmra.mxu0 %v890
        %v904 = vpop.f32.mrf.mxu0
        %v905 = vadd.f32 0.0, %v904
        %v906 = vpop.f32.mrf.mxu0
        %907 = vdwg.mxu0
        %908 = vrot.lane.b32.xlu0 %v784, 104
        %v909 = vpop.permute.xlu0 %908
        %910 = vrot.lane.b32.xlu0 %v789, 104
        %v911 = vpop.permute.xlu0 %910
        %v913 = vsel %vm762, %v909, 0
        %v916 = vsel %vm762, %v911, 0
        %918 = vmatpush.bf16.xpose.msra.mxu0 0
        %919 = vmatpush.bf16.xpose.msra.mxu0 0
        %920 = vmatpush.bf16.xpose.msra.mxu0 0
        %921 = vmatpush.bf16.xpose.msra.mxu0 0
        %922 = vmatpush.bf16.xpose.msra.mxu0 0
        %923 = vmatpush.bf16.xpose.msra.mxu0 0
        %924 = vmatpush.bf16.xpose.msra.mxu0 0
        %925 = vmatpush.bf16.xpose.msra.mxu0 %v916
        %926 = vmatmul.bf16.gmra.mxu0 %v913
        %v927 = vpop.f32.mrf.mxu0
        %v928 = vadd.f32 0.0, %v927
        %v929 = vpop.f32.mrf.mxu0
        %930 = vdwg.mxu0
        %v931 = vsel %vm762, %v905, -inf
        %932 = vmax.xlane.f32.xlu0 %v931
        %v933 = vpop.xlane.xlu0 %932
        %v934 = vsub.f32 %v905, %v933
        %v935 = vmul.f32 %v934, 1.442695
        %v936 = vpow.pop %v935
        %v937 = vsel %vm762, %v936, 0.0
        %938 = vadd.xlane.f32.xlu0 %v937
        %v939 = vpop.xlane.xlu0 %938
        %v940 = vrcp.pop %v939
        %v941 = vmul.f32 %v936, %v940
        %v942 = vsel %vm762, %v928, -inf
        %943 = vmax.xlane.f32.xlu0 %v942
        %v944 = vpop.xlane.xlu0 %943
        %v945 = vsub.f32 %v928, %v944
        %v946 = vmul.f32 %v945, 1.442695
        %v947 = vpow.pop %v946
        %v948 = vsel %vm762, %v947, 0.0
        %949 = vadd.xlane.f32.xlu0 %v948
        %v950 = vpop.xlane.xlu0 %949
        %v951 = vrcp.pop %v950
        %v952 = vmul.f32 %v947, %v951
        %v953 = vmul.f32 %v833, %v952
        %v954 = vsub.f32 %v941, %v953
        %v955 = vpack.c.bf16 %v954, %v954
        %v957 = vunpack.c.l.b16 %v760
        %v958 = vpack.c.b16 %v957, %v957
        %959 = vrot.lane.b32.xlu0 %v958, 112
        %v960 = vpop.permute.xlu0 %959
        %v962 = vsel %vm762, %v955, 0
        %v965 = vsel %vm840, %v960, 0
        %967 = vmatpush.bf16.msra.mxu0 0
        %968 = vmatpush.bf16.msra.mxu0 0
        %969 = vmatpush.bf16.msra.mxu0 0
        %970 = vmatpush.bf16.msra.mxu0 0
        %971 = vmatpush.bf16.msra.mxu0 0
        %972 = vmatpush.bf16.msra.mxu0 0
        %973 = vmatpush.bf16.msra.mxu0 0
        %974 = vmatpush.bf16.msra.mxu0 %v965
        %975 = vmatmul.bf16.gmra.mxu0 %v962
        %v976 = vpop.f32.mrf.mxu0
        %v977 = vadd.f32 0.0, %v976
        %v978 = vpop.f32.mrf.mxu0
        %979 = vdwg.mxu0
        %v980 = vmul.f32 %v977, %v977
        %v981 = vsel %vm858, %v980, 0.0
        %982 = vadd.xlane.f32.xlu0 %v981
        %v983 = vpop.xlane.xlu0 %982
        %v984 = vmul.f32 %v983, %v868
        %v985 = vadd.f32 %v984, 1e-05
        %v986 = vrsqrt.pop %v985
        %v987 = vmul.f32 %v986, %v985
        %v988 = vmul.f32 %v987, %v986
        %v989 = vmul.f32 0.5, %v988
        %v990 = vsub.f32 1.5, %v989
        %v991 = vmul.f32 %v986, %v990
        %vm992 = vweird.f32 %v985
        %vm993 = vweird.f32 %v986
        %vm994 = vmor %vm992, %vm993
        %v995 = vsel %vm994, %v986, %v991
        %v996 = vmul.f32 %v977, %v995
        %v997 = vpack.c.bf16 %v996, %v996
        %v998 = vld [vmem:[#allocation10 + $0x8] sm:$0xf]
        %v999 = vld [vmem:[#allocation10 + $0xc] sm:$0xf]
        %v1002 = vunpack.c.l.b16 %v998
        %v1003 = vunpack.c.l.b16 %v999
        %v1004 = vpack.c.b16 %v1003, %v1002
        %v1007 = vsel %vm858, %v997, 0
        %1009 = vmatpush.bf16.msra.mxu0 0
        %1010 = vmatpush.bf16.msra.mxu0 0
        %1011 = vmatpush.bf16.msra.mxu0 0
        %1012 = vmatpush.bf16.msra.mxu0 0
        %1013 = vmatpush.bf16.msra.mxu0 0
        %1014 = vmatpush.bf16.msra.mxu0 0
        %1015 = vmatpush.bf16.msra.mxu0 0
        %1016 = vmatpush.bf16.msra.mxu0 %v1004
        %1017 = vmatmul.bf16.gmra.mxu0 %v1007
        %v1018 = vpop.f32.mrf.mxu0
        %v1019 = vadd.f32 0.0, %v1018
        %v1020 = vpop.f32.mrf.mxu0
        %1021 = vdwg.mxu0
        %v1024 = vunpack.c.l.b16 %v883
        %v1025 = vunpack.c.l.b16 %v884
        %v1026 = vpack.c.b16 %v1025, %v1024
        %v1029 = vsel %vm858, %v882, 0
        %1031 = vmatpush.bf16.msra.mxu0 0
        %1032 = vmatpush.bf16.msra.mxu0 0
        %1033 = vmatpush.bf16.msra.mxu0 0
        %1034 = vmatpush.bf16.msra.mxu0 0
        %1035 = vmatpush.bf16.msra.mxu0 0
        %1036 = vmatpush.bf16.msra.mxu0 0
        %1037 = vmatpush.bf16.msra.mxu0 0
        %1038 = vmatpush.bf16.msra.mxu0 %v1026
        %1039 = vmatmul.bf16.gmra.mxu0 %v1029
        %v1040 = vpop.f32.mrf.mxu0
        %v1041 = vadd.f32 %v1019, %v1040
        %v1042 = vpop.f32.mrf.mxu0
        %1043 = vdwg.mxu0
        %1044 = vrot.lane.b32.xlu0 %v784, 96
        %v1045 = vpop.permute.xlu0 %1044
        %1046 = vrot.lane.b32.xlu0 %v789, 96
        %v1047 = vpop.permute.xlu0 %1046
        %v1049 = vsel %vm762, %v1045, 0
        %v1052 = vsel %vm762, %v1047, 0
        %1054 = vmatpush.bf16.xpose.msra.mxu0 0
        %1055 = vmatpush.bf16.xpose.msra.mxu0 0
        %1056 = vmatpush.bf16.xpose.msra.mxu0 0
        %1057 = vmatpush.bf16.xpose.msra.mxu0 0
        %1058 = vmatpush.bf16.xpose.msra.mxu0 0
        %1059 = vmatpush.bf16.xpose.msra.mxu0 0
        %1060 = vmatpush.bf16.xpose.msra.mxu0 0
        %1061 = vmatpush.bf16.xpose.msra.mxu0 %v1052
        %1062 = vmatmul.bf16.gmra.mxu0 %v1049
        %v1063 = vpop.f32.mrf.mxu0
        %v1064 = vadd.f32 0.0, %v1063
        %v1065 = vpop.f32.mrf.mxu0
        %1066 = vdwg.mxu0
        %1067 = vrot.lane.b32.xlu0 %v784, 88
        %v1068 = vpop.permute.xlu0 %1067
        %1069 = vrot.lane.b32.xlu0 %v789, 88
        %v1070 = vpop.permute.xlu0 %1069
        %v1072 = vsel %vm762, %v1068, 0
        %v1075 = vsel %vm762, %v1070, 0
        %1077 = vmatpush.bf16.xpose.msra.mxu0 0
        %1078 = vmatpush.bf16.xpose.msra.mxu0 0
        %1079 = vmatpush.bf16.xpose.msra.mxu0 0
        %1080 = vmatpush.bf16.xpose.msra.mxu0 0
        %1081 = vmatpush.bf16.xpose.msra.mxu0 0
        %1082 = vmatpush.bf16.xpose.msra.mxu0 0
        %1083 = vmatpush.bf16.xpose.msra.mxu0 0
        %1084 = vmatpush.bf16.xpose.msra.mxu0 %v1075
        %1085 = vmatmul.bf16.gmra.mxu0 %v1072
        %v1086 = vpop.f32.mrf.mxu0
        %v1087 = vadd.f32 0.0, %v1086
        %v1088 = vpop.f32.mrf.mxu0
        %1089 = vdwg.mxu0
        %v1090 = vsel %vm762, %v1064, -inf
        %1091 = vmax.xlane.f32.xlu0 %v1090
        %v1092 = vpop.xlane.xlu0 %1091
        %v1093 = vsub.f32 %v1064, %v1092
        %v1094 = vmul.f32 %v1093, 1.442695
        %v1095 = vpow.pop %v1094
        %v1096 = vsel %vm762, %v1095, 0.0
        %1097 = vadd.xlane.f32.xlu0 %v1096
        %v1098 = vpop.xlane.xlu0 %1097
        %v1099 = vrcp.pop %v1098
        %v1100 = vmul.f32 %v1095, %v1099
        %v1101 = vsel %vm762, %v1087, -inf
        %1102 = vmax.xlane.f32.xlu0 %v1101
        %v1103 = vpop.xlane.xlu0 %1102
        %v1104 = vsub.f32 %v1087, %v1103
        %v1105 = vmul.f32 %v1104, 1.442695
        %v1106 = vpow.pop %v1105
        %v1107 = vsel %vm762, %v1106, 0.0
        %1108 = vadd.xlane.f32.xlu0 %v1107
        %v1109 = vpop.xlane.xlu0 %1108
        %v1110 = vrcp.pop %v1109
        %v1111 = vmul.f32 %v1106, %v1110
        %v1112 = vmul.f32 %v833, %v1111
        %v1113 = vsub.f32 %v1100, %v1112
        %v1114 = vpack.c.bf16 %v1113, %v1113
        %1115 = vrot.lane.b32.xlu0 %v958, 96
        %v1116 = vpop.permute.xlu0 %1115
        %v1118 = vsel %vm762, %v1114, 0
        %v1121 = vsel %vm840, %v1116, 0
        %1123 = vmatpush.bf16.msra.mxu0 0
        %1124 = vmatpush.bf16.msra.mxu0 0
        %1125 = vmatpush.bf16.msra.mxu0 0
        %1126 = vmatpush.bf16.msra.mxu0 0
        %1127 = vmatpush.bf16.msra.mxu0 0
        %1128 = vmatpush.bf16.msra.mxu0 0
        %1129 = vmatpush.bf16.msra.mxu0 0
        %1130 = vmatpush.bf16.msra.mxu0 %v1121
        %1131 = vmatmul.bf16.gmra.mxu0 %v1118
        %v1132 = vpop.f32.mrf.mxu0
        %v1133 = vadd.f32 0.0, %v1132
        %v1134 = vpop.f32.mrf.mxu0
        %1135 = vdwg.mxu0
        %v1136 = vmul.f32 %v1133, %v1133
        %v1137 = vsel %vm858, %v1136, 0.0
        %1138 = vadd.xlane.f32.xlu0 %v1137
        %v1139 = vpop.xlane.xlu0 %1138
        %v1140 = vmul.f32 %v1139, %v868
        %v1141 = vadd.f32 %v1140, 1e-05
        %v1142 = vrsqrt.pop %v1141
        %v1143 = vmul.f32 %v1142, %v1141
        %v1144 = vmul.f32 %v1143, %v1142
        %v1145 = vmul.f32 0.5, %v1144
        %v1146 = vsub.f32 1.5, %v1145
        %v1147 = vmul.f32 %v1142, %v1146
        %vm1148 = vweird.f32 %v1141
        %vm1149 = vweird.f32 %v1142
        %vm1150 = vmor %vm1148, %vm1149
        %v1151 = vsel %vm1150, %v1142, %v1147
        %v1152 = vmul.f32 %v1133, %v1151
        %v1153 = vpack.c.bf16 %v1152, %v1152
        %v1154 = vld [vmem:[#allocation10 + $0x10] sm:$0xf]
        %v1155 = vld [vmem:[#allocation10 + $0x14] sm:$0xf]
        %v1158 = vunpack.c.l.b16 %v1154
        %v1159 = vunpack.c.l.b16 %v1155
        %v1160 = vpack.c.b16 %v1159, %v1158
        %v1163 = vsel %vm858, %v1153, 0
        %1165 = vmatpush.bf16.msra.mxu0 0
        %1166 = vmatpush.bf16.msra.mxu0 0
        %1167 = vmatpush.bf16.msra.mxu0 0
        %1168 = vmatpush.bf16.msra.mxu0 0
        %1169 = vmatpush.bf16.msra.mxu0 0
        %1170 = vmatpush.bf16.msra.mxu0 0
        %1171 = vmatpush.bf16.msra.mxu0 0
        %1172 = vmatpush.bf16.msra.mxu0 %v1160
        %1173 = vmatmul.bf16.gmra.mxu0 %v1163
        %v1174 = vpop.f32.mrf.mxu0
        %v1175 = vadd.f32 0.0, %v1174
        %v1176 = vpop.f32.mrf.mxu0
        %1177 = vdwg.mxu0
        %v1178 = vadd.f32 %v1041, %v1175
        %1179 = vrot.lane.b32.xlu0 %v784, 80
        %v1180 = vpop.permute.xlu0 %1179
        %1181 = vrot.lane.b32.xlu0 %v789, 80
        %v1182 = vpop.permute.xlu0 %1181
        %v1184 = vsel %vm762, %v1180, 0
        %v1187 = vsel %vm762, %v1182, 0
        %1189 = vmatpush.bf16.xpose.msra.mxu0 0
        %1190 = vmatpush.bf16.xpose.msra.mxu0 0
        %1191 = vmatpush.bf16.xpose.msra.mxu0 0
        %1192 = vmatpush.bf16.xpose.msra.mxu0 0
        %1193 = vmatpush.bf16.xpose.msra.mxu0 0
        %1194 = vmatpush.bf16.xpose.msra.mxu0 0
        %1195 = vmatpush.bf16.xpose.msra.mxu0 0
        %1196 = vmatpush.bf16.xpose.msra.mxu0 %v1187
        %1197 = vmatmul.bf16.gmra.mxu0 %v1184
        %v1198 = vpop.f32.mrf.mxu0
        %v1199 = vadd.f32 0.0, %v1198
        %v1200 = vpop.f32.mrf.mxu0
        %1201 = vdwg.mxu0
        %1202 = vrot.lane.b32.xlu0 %v784, 72
        %v1203 = vpop.permute.xlu0 %1202
        %1204 = vrot.lane.b32.xlu0 %v789, 72
        %v1205 = vpop.permute.xlu0 %1204
        %v1207 = vsel %vm762, %v1203, 0
        %v1210 = vsel %vm762, %v1205, 0
        %1212 = vmatpush.bf16.xpose.msra.mxu0 0
        %1213 = vmatpush.bf16.xpose.msra.mxu0 0
        %1214 = vmatpush.bf16.xpose.msra.mxu0 0
        %1215 = vmatpush.bf16.xpose.msra.mxu0 0
        %1216 = vmatpush.bf16.xpose.msra.mxu0 0
        %1217 = vmatpush.bf16.xpose.msra.mxu0 0
        %1218 = vmatpush.bf16.xpose.msra.mxu0 0
        %1219 = vmatpush.bf16.xpose.msra.mxu0 %v1210
        %1220 = vmatmul.bf16.gmra.mxu0 %v1207
        %v1221 = vpop.f32.mrf.mxu0
        %v1222 = vadd.f32 0.0, %v1221
        %v1223 = vpop.f32.mrf.mxu0
        %1224 = vdwg.mxu0
        %v1225 = vsel %vm762, %v1199, -inf
        %1226 = vmax.xlane.f32.xlu0 %v1225
        %v1227 = vpop.xlane.xlu0 %1226
        %v1228 = vsub.f32 %v1199, %v1227
        %v1229 = vmul.f32 %v1228, 1.442695
        %v1230 = vpow.pop %v1229
        %v1231 = vsel %vm762, %v1230, 0.0
        %1232 = vadd.xlane.f32.xlu0 %v1231
        %v1233 = vpop.xlane.xlu0 %1232
        %v1234 = vrcp.pop %v1233
        %v1235 = vmul.f32 %v1230, %v1234
        %v1236 = vsel %vm762, %v1222, -inf
        %1237 = vmax.xlane.f32.xlu0 %v1236
        %v1238 = vpop.xlane.xlu0 %1237
        %v1239 = vsub.f32 %v1222, %v1238
        %v1240 = vmul.f32 %v1239, 1.442695
        %v1241 = vpow.pop %v1240
        %v1242 = vsel %vm762, %v1241, 0.0
        %1243 = vadd.xlane.f32.xlu0 %v1242
        %v1244 = vpop.xlane.xlu0 %1243
        %v1245 = vrcp.pop %v1244
        %v1246 = vmul.f32 %v1241, %v1245
        %v1247 = vmul.f32 %v833, %v1246
        %v1248 = vsub.f32 %v1235, %v1247
        %v1249 = vpack.c.bf16 %v1248, %v1248
        %1250 = vrot.lane.b32.xlu0 %v958, 80
        %v1251 = vpop.permute.xlu0 %1250
        %v1253 = vsel %vm762, %v1249, 0
        %v1256 = vsel %vm840, %v1251, 0
        %1258 = vmatpush.bf16.msra.mxu0 0
        %1259 = vmatpush.bf16.msra.mxu0 0
        %1260 = vmatpush.bf16.msra.mxu0 0
        %1261 = vmatpush.bf16.msra.mxu0 0
        %1262 = vmatpush.bf16.msra.mxu0 0
        %1263 = vmatpush.bf16.msra.mxu0 0
        %1264 = vmatpush.bf16.msra.mxu0 0
        %1265 = vmatpush.bf16.msra.mxu0 %v1256
        %1266 = vmatmul.bf16.gmra.mxu0 %v1253
        %v1267 = vpop.f32.mrf.mxu0
        %v1268 = vadd.f32 0.0, %v1267
        %v1269 = vpop.f32.mrf.mxu0
        %1270 = vdwg.mxu0
        %v1271 = vmul.f32 %v1268, %v1268
        %v1272 = vsel %vm858, %v1271, 0.0
        %1273 = vadd.xlane.f32.xlu0 %v1272
        %v1274 = vpop.xlane.xlu0 %1273
        %v1275 = vmul.f32 %v1274, %v868
        %v1276 = vadd.f32 %v1275, 1e-05
        %v1277 = vrsqrt.pop %v1276
        %v1278 = vmul.f32 %v1277, %v1276
        %v1279 = vmul.f32 %v1278, %v1277
        %v1280 = vmul.f32 0.5, %v1279
        %v1281 = vsub.f32 1.5, %v1280
        %v1282 = vmul.f32 %v1277, %v1281
        %vm1283 = vweird.f32 %v1276
        %vm1284 = vweird.f32 %v1277
        %vm1285 = vmor %vm1283, %vm1284
        %v1286 = vsel %vm1285, %v1277, %v1282
        %v1287 = vmul.f32 %v1268, %v1286
        %v1288 = vpack.c.bf16 %v1287, %v1287
        %v1289 = vld [vmem:[#allocation10 + $0x18] sm:$0xf]
        %v1290 = vld [vmem:[#allocation10 + $0x1c] sm:$0xf]
        %v1293 = vunpack.c.l.b16 %v1289
        %v1294 = vunpack.c.l.b16 %v1290
        %v1295 = vpack.c.b16 %v1294, %v1293
        %v1298 = vsel %vm858, %v1288, 0
        %1300 = vmatpush.bf16.msra.mxu0 0
        %1301 = vmatpush.bf16.msra.mxu0 0
        %1302 = vmatpush.bf16.msra.mxu0 0
        %1303 = vmatpush.bf16.msra.mxu0 0
        %1304 = vmatpush.bf16.msra.mxu0 0
        %1305 = vmatpush.bf16.msra.mxu0 0
        %1306 = vmatpush.bf16.msra.mxu0 0
        %1307 = vmatpush.bf16.msra.mxu0 %v1295
        %1308 = vmatmul.bf16.gmra.mxu0 %v1298
        %v1309 = vpop.f32.mrf.mxu0
        %v1310 = vadd.f32 0.0, %v1309
        %v1311 = vpop.f32.mrf.mxu0
        %1312 = vdwg.mxu0
        %v1313 = vadd.f32 %v1178, %v1310
        %v1314 = vadd.f32 %v707, %v1313
        %v1315 = vsel %vm741, %v1314, 0.0
        %1316 = vadd.xlane.f32.xlu0 %v1315
        %v1317 = vpop.xlane.xlu0 %1316
        %v1318 = vrcp.pop 64.0
        %v1319 = vmul.f32 64.0, %v1318
        %v1320 = vsub.f32 1.0, %v1319
        %v1321 = vmul.f32 %v1318, %v1320
        %v1322 = vadd.f32 %v1318, %v1321
        %vm1323 = vweird.f32 %v1318
        %v1324 = vsel %vm1323, %v1318, %v1322
        %v1325 = vmul.f32 %v1317, %v1324
        %v1326 = vsub.f32 %v1314, %v1325
        %v1327 = vmul.f32 %v1326, %v1326
        %v1328 = vsel %vm741, %v1327, 0.0
        %1329 = vadd.xlane.f32.xlu0 %v1328
        %v1330 = vpop.xlane.xlu0 %1329
        %v1331 = vmul.f32 %v1330, %v1324
        %v1332 = vadd.f32 %v1331, 1e-05
        %v1333 = vrsqrt.pop %v1332
        %v1334 = vmul.f32 %v1333, %v1332
        %v1335 = vmul.f32 %v1334, %v1333
        %v1336 = vmul.f32 0.5, %v1335
        %v1337 = vsub.f32 1.5, %v1336
        %v1338 = vmul.f32 %v1333, %v1337
        %vm1339 = vweird.f32 %v1332
        %vm1340 = vweird.f32 %v1333
        %vm1341 = vmor %vm1339, %vm1340
        %v1342 = vsel %vm1341, %v1333, %v1338
        %v1343 = vmul.f32 %v1326, %v1342
        %v1344 = vld [vmem:[%s11] sm:$0x1]
        %v1346 = vperm.slane %v1344, 0
        %v1348 = vmul.f32 %v1343, %v1346
        %v1349 = vld [vmem:[%s12] sm:$0x1]
        %v1351 = vperm.slane %v1349, 0
        %v1353 = vadd.f32 %v1348, %v1351
        %v1354 = vpack.c.bf16 %v1353, %v1353
        %v1355 = vld [vmem:[#allocation11] sm:$0xf]
        %v1356 = vld [vmem:[#allocation11 + $0x4] sm:$0xf]
        %v1357 = vld [vmem:[#allocation11 + $0x8] sm:$0xf]
        %v1358 = vld [vmem:[#allocation11 + $0xc] sm:$0xf]
        %v1359 = vld [vmem:[#allocation11 + $0x10] sm:$0xf]
        %v1360 = vld [vmem:[#allocation11 + $0x14] sm:$0xf]
        %v1361 = vld [vmem:[#allocation11 + $0x18] sm:$0xf]
        %v1362 = vld [vmem:[#allocation11 + $0x1c] sm:$0xf]
        %v1363 = vld [vmem:[%s8] sm:$0x1]
        %v1365 = vperm.slane %v1363, 0
        %v1375 = vunpack.c.l.b16 %v1355
        %v1376 = vunpack.c.l.b16 %v1356
        %v1377 = vunpack.c.l.b16 %v1357
        %v1378 = vunpack.c.l.b16 %v1358
        %v1379 = vunpack.c.l.b16 %v1359
        %v1380 = vunpack.c.l.b16 %v1360
        %v1381 = vunpack.c.l.b16 %v1361
        %v1382 = vunpack.c.l.b16 %v1362
        %v1383 = vpack.c.b16 %v1376, %v1375
        %v1384 = vpack.c.b16 %v1378, %v1377
        %v1385 = vpack.c.b16 %v1380, %v1379
        %v1386 = vpack.c.b16 %v1382, %v1381
        %v1392 = vsel %vm741, %v1354, 0
        %1394 = vmatpush.bf16.msra.mxu0 0
        %1395 = vmatpush.bf16.msra.mxu0 0
        %1396 = vmatpush.bf16.msra.mxu0 0
        %1397 = vmatpush.bf16.msra.mxu0 0
        %1398 = vmatpush.bf16.msra.mxu0 %v1386
        %1399 = vmatpush.bf16.msra.mxu0 %v1385
        %1400 = vmatpush.bf16.msra.mxu0 %v1384
        %1401 = vmatpush.bf16.msra.mxu0 %v1383
        %1402 = vmatmul.bf16.gmra.mxu0 %v1392
        %v1403 = vpop.f32.mrf.mxu0
        %v1404 = vadd.f32 %v1365, %v1403
        %v1405 = vpop.f32.mrf.mxu0
        %1406 = vdwg.mxu0
        %v1407 = vmax.f32 %v1404, 0.0
        %v1408 = vpack.c.bf16 %v1407, %v1407
        %v1409 = vld [vmem:[%s9] sm:$0xf]
        %v1410 = vld [vmem:[%s9 + $0x4] sm:$0xf]
        %v1411 = vld [vmem:[%s9 + $0x8] sm:$0xf]
        %v1412 = vld [vmem:[%s9 + $0xc] sm:$0xf]
        %v1413 = vld [vmem:[%s9 + $0x10] sm:$0xf]
        %v1414 = vld [vmem:[%s9 + $0x14] sm:$0xf]
        %v1415 = vld [vmem:[%s9 + $0x18] sm:$0xf]
        %v1416 = vld [vmem:[%s9 + $0x1c] sm:$0xf]
        %v1417 = vld [vmem:[%s9 + $0x20] sm:$0xf]
        %v1418 = vld [vmem:[%s9 + $0x24] sm:$0xf]
        %v1419 = vld [vmem:[%s9 + $0x28] sm:$0xf]
        %v1420 = vld [vmem:[%s9 + $0x2c] sm:$0xf]
        %v1421 = vld [vmem:[%s9 + $0x30] sm:$0xf]
        %v1422 = vld [vmem:[%s9 + $0x34] sm:$0xf]
        %v1423 = vld [vmem:[%s9 + $0x38] sm:$0xf]
        %v1424 = vld [vmem:[%s9 + $0x3c] sm:$0xf]
        %v1425 = vld [vmem:[%s10] sm:$0x1]
        %v1427 = vperm.slane %v1425, 0
        %v1445 = vunpack.c.l.b16 %v1409
        %v1446 = vunpack.c.l.b16 %v1410
        %v1447 = vunpack.c.l.b16 %v1411
        %v1448 = vunpack.c.l.b16 %v1412
        %v1449 = vunpack.c.l.b16 %v1413
        %v1450 = vunpack.c.l.b16 %v1414
        %v1451 = vunpack.c.l.b16 %v1415
        %v1452 = vunpack.c.l.b16 %v1416
        %v1453 = vunpack.c.l.b16 %v1417
        %v1454 = vunpack.c.l.b16 %v1418
        %v1455 = vunpack.c.l.b16 %v1419
        %v1456 = vunpack.c.l.b16 %v1420
        %v1457 = vunpack.c.l.b16 %v1421
        %v1458 = vunpack.c.l.b16 %v1422
        %v1459 = vunpack.c.l.b16 %v1423
        %v1460 = vunpack.c.l.b16 %v1424
        %v1461 = vpack.c.b16 %v1446, %v1445
        %v1462 = vpack.c.b16 %v1448, %v1447
        %v1463 = vpack.c.b16 %v1450, %v1449
        %v1464 = vpack.c.b16 %v1452, %v1451
        %v1465 = vpack.c.b16 %v1454, %v1453
        %v1466 = vpack.c.b16 %v1456, %v1455
        %v1467 = vpack.c.b16 %v1458, %v1457
        %v1468 = vpack.c.b16 %v1460, %v1459
        %1477 = vmatpush.bf16.msra.mxu0 %v1468
        %1478 = vmatpush.bf16.msra.mxu0 %v1467
        %1479 = vmatpush.bf16.msra.mxu0 %v1466
        %1480 = vmatpush.bf16.msra.mxu0 %v1465
        %1481 = vmatpush.bf16.msra.mxu0 %v1464
        %1482 = vmatpush.bf16.msra.mxu0 %v1463
        %1483 = vmatpush.bf16.msra.mxu0 %v1462
        %1484 = vmatpush.bf16.msra.mxu0 %v1461
        %1485 = vmatmul.bf16.gmra.mxu0 %v1408
        %v1486 = vpop.f32.mrf.mxu0
        %v1487 = vadd.f32 %v1427, %v1486
        %v1488 = vpop.f32.mrf.mxu0
        %1489 = vdwg.mxu0
        %v1490 = vadd.f32 %v1353, %v1487
        %v1491 = vsel %vm741, %v1490, 0.0
        %1492 = vadd.xlane.f32.xlu0 %v1491
        %v1493 = vpop.xlane.xlu0 %1492
        %v1494 = vmul.f32 %v1493, %v1324
        %v1495 = vsub.f32 %v1490, %v1494
        %v1496 = vmul.f32 %v1495, %v1495
        %v1497 = vsel %vm741, %v1496, 0.0
        %1498 = vadd.xlane.f32.xlu0 %v1497
        %v1499 = vpop.xlane.xlu0 %1498
        %v1500 = vmul.f32 %v1499, %v1324
        %v1501 = vadd.f32 %v1500, 1e-05
        %v1502 = vrsqrt.pop %v1501
        %v1503 = vmul.f32 %v1502, %v1501
        %v1504 = vmul.f32 %v1503, %v1502
        %v1505 = vmul.f32 0.5, %v1504
        %v1506 = vsub.f32 1.5, %v1505
        %v1507 = vmul.f32 %v1502, %v1506
        %vm1508 = vweird.f32 %v1501
        %vm1509 = vweird.f32 %v1502
        %vm1510 = vmor %vm1508, %vm1509
        %v1511 = vsel %vm1510, %v1502, %v1507
        %v1512 = vmul.f32 %v1495, %v1511
        %v1513 = vld [vmem:[%s13] sm:$0x1]
        %v1515 = vperm.slane %v1513, 0
        %v1517 = vmul.f32 %v1512, %v1515
        %v1518 = vld [vmem:[%s14] sm:$0x1]
        %v1520 = vperm.slane %v1518, 0
        %v1522 = vadd.f32 %v1517, %v1520
        %1523 = vst.msk [vmem:[%s601] sm:$0xff] %vm741, %v1522
        %s1524 = sand.u32 %s386, 1
        %s1525 = scalar_lea.sflag [#allocation7], %s1524
        %s1526 = sand.u32 %s386, 1
        %s1527 = smul.addr %s1526, 8
        %s1528 = scalar_lea.vmem [#allocation13], %s1527
        // Predicated region
        $region101: #{tpu_custom_call.1} parent=79 // pred_check
          %p1529 = pneg %p396
        $region102: #{tpu_custom_call.1} parent=79 // pred_check_branch
          %1531 = sbr.rel (%p1529) target = $region104
        $region103: #{tpu_custom_call.1} parent=79 // pred_region
          %1533 = vsyncadd %s1525, 0
          %s1534 = sadd.s32 %s42, %s41
          %s1535 = smul.addr %s1534, 8
          %s1536 = scalar_lea.hbm %s15, %s1535
          %s1538 = sshll.u32 %s1528, 4
          %s1539 = int_to_ptr.vmem [resolvable:$true] %s1538
          %s1540 = sshll.u32 %s1536, 4
          %s1541 = int_to_ptr.hbm [resolvable:$true] %s1540
          %1543 = dma.vmem_to_hbm [thread:$0]  %s1539, 128, %s1541, %s1525
        $region104: #{tpu_custom_call.1} parent=79 // pred_fallthru
          _
      $region80: #{tpu_custom_call.1} parent=5 // pred_fallthru
        _
      %p1544 = scmp.le.s32.totalorder 2, %s32
      // Predicated region
      $region105: #{tpu_custom_call.1} parent=5 // pred_check
        %p1545 = pneg %p1544
      $region106: #{tpu_custom_call.1} parent=5 // pred_check_branch
        %1547 = sbr.rel (%p1545) target = $region108
      $region107: #{tpu_custom_call.1} parent=5 // pred_region
        %s1548 = ssub.s32 %s32, 2
        // Predicated region
        $region109: #{tpu_custom_call.1} parent=107 // pred_check
          %p1549 = pneg %p402
        $region110: #{tpu_custom_call.1} parent=107 // pred_check_branch
          %1551 = sbr.rel (%p1549) target = $region112
        $region111: #{tpu_custom_call.1} parent=107 // pred_region
          %s1552 = sand.u32 %s387, 1
          %s1553 = scalar_lea.sflag [#allocation7], %s1552
          %s1554 = sand.u32 %s387, 1
          %s1555 = smul.addr %s1554, 8
          %s1556 = scalar_lea.vmem [#allocation13], %s1555
          %1558 = dma.done %s1553, 128
        $region112: #{tpu_custom_call.1} parent=107 // pred_fallthru
          _
      $region108: #{tpu_custom_call.1} parent=5 // pred_fallthru
        _
    $region6: #{tpu_custom_call.1} parent=1 // loop_footer
      %s36 = sadd.s32 1, %s32
    $region7: #{tpu_custom_call.1} parent=1 // loop_footer_branch
      %31 = sbr.rel target = $region3
    $region8: #{tpu_custom_call.1} parent=1 // loop_exit
      _
    %1559 = vsyncpa [#allocation6], 1
    %s1560 = scalar_lea.sflag [#allocation6], 1
    %1561 = vsyncpa %s1560, 1
    %1562 = vsyncpa [#allocation9], 1
    %s1563 = scalar_lea.sflag [#allocation9], 1
    %1564 = vsyncpa %s1563, 1
    %1565 = vsyncpa [#allocation12], 1
    %1566 = vsyncpa [#allocation7], 1
    %s1567 = scalar_lea.sflag [#allocation7], 1
    %1568 = vsyncpa %s1567, 1

</llo_original>
